<compile_context>
chip_gen: v7x
topology: tpu7x:2x2x1
jax: 0.10.0
libtpu: 0.0.40
codegen_flags: <defaults>
</compile_context>

<pallas_src>
import jax
import jax.numpy as jnp
from jax.experimental import pallas as pl
from jax.experimental.pallas import tpu as pltpu

# Small, consistent shapes for the synthetic run.
IMAGE_SIZE = 16           # (PyTorch default is 100; kept small per instructions)
NUM_CLASSES = 5
IN_CH = 3
INPUT_SIZE = IN_CH * IMAGE_SIZE * IMAGE_SIZE   # 768  (multiple of 128)
HIDDEN1 = 512
HIDDEN2 = 128
OUT_PAD = 128             # logits padded 5 -> 128 for unmasked lane-dense stores
TILE_B = 256              # batch tile: multiple of 256 (v6e/v7x MXU), also 128-aligned (v5e)
BATCH = 2


def _mlp_kernel(x_ref, w1_ref, b1_ref, w2_ref, b2_ref, w3_ref, b3_ref, o_ref):
    # Layer 1: Linear + ReLU  (bf16 operands, f32 MXU accumulation)
    h1 = jnp.dot(x_ref[...], w1_ref[...], preferred_element_type=jnp.float32)
    h1 = jnp.maximum(h1 + b1_ref[...], 0.0)
    # Dropout(0.3) -> identity (eval mode)

    # Layer 2: Linear + ReLU
    h2 = jnp.dot(h1.astype(jnp.bfloat16), w2_ref[...],
                 preferred_element_type=jnp.float32)
    h2 = jnp.maximum(h2 + b2_ref[...], 0.0)
    # Dropout(0.3) -> identity (eval mode)

    # Layer 3: Linear (logits, padded to 128 lanes)
    logits = jnp.dot(h2.astype(jnp.bfloat16), w3_ref[...],
                     preferred_element_type=jnp.float32)
    o_ref[...] = (logits + b3_ref[...]).astype(o_ref.dtype)


def simple_mlp_forward(x_nchw, params):
    """x_nchw: (N, C, H, W) float32. Returns (N, NUM_CLASSES) float32."""
    n = x_nchw.shape[0]
    x_flat = x_nchw.reshape(n, -1)  # torch.nn.Flatten semantics (row-major)

    w1, b1, w2, b2, w3, b3 = params

    # Pad batch up to a multiple of TILE_B (>= one full MXU-aligned tile).
    n_pad = ((n + TILE_B - 1) // TILE_B) * TILE_B
    x_p = jnp.zeros((n_pad, INPUT_SIZE), jnp.bfloat16).at[:n].set(
        x_flat.astype(jnp.bfloat16))

    # bf16 weights for the MXU; biases stay f32 (added to the f32 accumulator).
    w1b = w1.astype(jnp.bfloat16)
    w2b = w2.astype(jnp.bfloat16)
    # Lane-dense final layer: zero-pad 5 -> 128 output features.
    w3b = jnp.zeros((HIDDEN2, OUT_PAD), jnp.bfloat16).at[:, :NUM_CLASSES].set(
        w3.astype(jnp.bfloat16))
    b3p = jnp.zeros((1, OUT_PAD), jnp.float32).at[:, :NUM_CLASSES].set(b3)

    grid = (n_pad // TILE_B,)
    const = lambda i: (0, 0)   # weights/biases resident across all batch tiles

    out_padded = pl.pallas_call(
        _mlp_kernel,
        out_shape=jax.ShapeDtypeStruct((n_pad, OUT_PAD), jnp.float32),
        grid_spec=pltpu.PrefetchScalarGridSpec(
            num_scalar_prefetch=0,
            grid=grid,
            in_specs=[
                pl.BlockSpec((TILE_B, INPUT_SIZE), lambda i: (i, 0)),  # x tile
                pl.BlockSpec((INPUT_SIZE, HIDDEN1), const),            # w1
                pl.BlockSpec((1, HIDDEN1), const),                     # b1
                pl.BlockSpec((HIDDEN1, HIDDEN2), const),               # w2
                pl.BlockSpec((1, HIDDEN2), const),                     # b2
                pl.BlockSpec((HIDDEN2, OUT_PAD), const),               # w3 (padded)
                pl.BlockSpec((1, OUT_PAD), const),                     # b3 (padded)
            ],
            out_specs=pl.BlockSpec((TILE_B, OUT_PAD), lambda i: (i, 0)),
        ),
        compiler_params=pltpu.CompilerParams(
            dimension_semantics=("parallel",),      # megacore sharding on v7x
            vmem_limit_bytes=32 * 1024 * 1024,      # safe on v7x's 64 MiB VMEM
        ),
    )(x_p, w1b, b1, w2b, b2, w3b, b3p)

    return out_padded[:n, :NUM_CLASSES]


def init_params(key):
    """Deterministic init mimicking torch.nn.Linear (uniform +/- 1/sqrt(fan_in))."""
    ks = jax.random.split(key, 6)

    def linear(kw, kb, fan_in, fan_out):
        bound = 1.0 / jnp.sqrt(jnp.float32(fan_in))
        w = jax.random.uniform(kw, (fan_in, fan_out), jnp.float32, -bound, bound)
        b = jax.random.uniform(kb, (1, fan_out), jnp.float32, -bound, bound)
        return w, b

    w1, b1 = linear(ks[0], ks[1], INPUT_SIZE, HIDDEN1)
    w2, b2 = linear(ks[2], ks[3], HIDDEN1, HIDDEN2)
    w3, b3 = linear(ks[4], ks[5], HIDDEN2, NUM_CLASSES)
    return (w1, b1, w2, b2, w3, b3)


if __name__ == "__main__":
    key = jax.random.PRNGKey(0)
    k_x, k_p = jax.random.split(key)

    x = jax.random.normal(k_x, (BATCH, IN_CH, IMAGE_SIZE, IMAGE_SIZE), jnp.float32)
    params = init_params(k_p)

    out = simple_mlp_forward(x, params)
    jax.block_until_ready(out)

    assert out.shape == (BATCH, NUM_CLASSES), out.shape
    assert out.dtype == jnp.float32, out.dtype

    # Cross-check against a plain-JAX reference using the same bf16-operand /
    # f32-accumulate recipe (so tolerances stay tight).
    w1, b1, w2, b2, w3, b3 = params
    xf = x.reshape(BATCH, -1).astype(jnp.bfloat16)
    ref = jnp.maximum(
        jnp.dot(xf, w1.astype(jnp.bfloat16),
                preferred_element_type=jnp.float32) + b1, 0.0)
    ref = jnp.maximum(
        jnp.dot(ref.astype(jnp.bfloat16), w2.astype(jnp.bfloat16),
                preferred_element_type=jnp.float32) + b2, 0.0)
    ref = jnp.dot(ref.astype(jnp.bfloat16), w3.astype(jnp.bfloat16),
                  preferred_element_type=jnp.float32) + b3
    assert jnp.allclose(out, ref, atol=1e-2, rtol=1e-2), (out, ref)

    print("KERNEL_OK")
</pallas_src>

<mosaic_0001>
module attributes {stable_mosaic.version = 11 : i64} {
  func.func @_mlp_kernel(%arg0: i32, %arg1: memref<256x768xbf16, #tpu.memory_space<vmem>>, %arg2: memref<768x512xbf16, #tpu.memory_space<vmem>>, %arg3: memref<1x512xf32, #tpu.memory_space<vmem>>, %arg4: memref<512x128xbf16, #tpu.memory_space<vmem>>, %arg5: memref<1x128xf32, #tpu.memory_space<vmem>>, %arg6: memref<128x128xbf16, #tpu.memory_space<vmem>>, %arg7: memref<1x128xf32, #tpu.memory_space<vmem>>, %arg8: memref<256x128xf32, #tpu.memory_space<vmem>>) attributes {dimension_semantics = [#tpu.dimension_semantics<parallel>], iteration_bounds = array<i64: 1>, scalar_prefetch = 0 : i64, scratch_operands = 0 : i64, tpu.core_type = #tpu.core_type<tc>, window_params = [{transform_indices = @transform_0, window_bounds = array<i64: 256, 768>}, {pipeline_mode = #tpu.pipeline_mode<synchronous>, transform_indices = @transform_1, window_bounds = array<i64: 768, 512>}, {pipeline_mode = #tpu.pipeline_mode<synchronous>, transform_indices = @transform_2, window_bounds = array<i64: 1, 512>}, {pipeline_mode = #tpu.pipeline_mode<synchronous>, transform_indices = @transform_3, window_bounds = array<i64: 512, 128>}, {pipeline_mode = #tpu.pipeline_mode<synchronous>, transform_indices = @transform_4, window_bounds = array<i64: 1, 128>}, {pipeline_mode = #tpu.pipeline_mode<synchronous>, transform_indices = @transform_5, window_bounds = array<i64: 128, 128>}, {pipeline_mode = #tpu.pipeline_mode<synchronous>, transform_indices = @transform_6, window_bounds = array<i64: 1, 128>}, {transform_indices = @transform_7, window_bounds = array<i64: 256, 128>}]} {
    %c0 = arith.constant 0 : index
    %c0_0 = arith.constant 0 : index
    %0 = vector.load %arg1[%c0, %c0_0] : memref<256x768xbf16, #tpu.memory_space<vmem>>, vector<256x768xbf16>
    %c0_1 = arith.constant 0 : index
    %c0_2 = arith.constant 0 : index
    %1 = vector.load %arg2[%c0_1, %c0_2] : memref<768x512xbf16, #tpu.memory_space<vmem>>, vector<768x512xbf16>
    %cst = arith.constant dense<0.000000e+00> : vector<256x512xf32>
    %2 = tpu.matmul %0, %1, %cst {dimension_numbers = #tpu.dot_dimension_numbers<[1], [0], [0], [1], [0, 0, 1, 1], [], []>} : vector<256x768xbf16>, vector<768x512xbf16>, vector<256x512xf32> -> vector<256x512xf32>
    %c0_3 = arith.constant 0 : index
    %c0_4 = arith.constant 0 : index
    %3 = vector.load %arg3[%c0_3, %c0_4] : memref<1x512xf32, #tpu.memory_space<vmem>>, vector<1x512xf32>
    %4 = vector.broadcast %3 : vector<1x512xf32> to vector<256x512xf32>
    %5 = arith.addf %2, %4 : vector<256x512xf32>
    %cst_5 = arith.constant 0.000000e+00 : f32
    %6 = vector.broadcast %cst_5 : f32 to vector<256x512xf32>
    %7 = arith.maximumf %5, %6 : vector<256x512xf32>
    %8 = arith.truncf %7 : vector<256x512xf32> to vector<256x512xbf16>
    %c0_6 = arith.constant 0 : index
    %c0_7 = arith.constant 0 : index
    %9 = vector.load %arg4[%c0_6, %c0_7] : memref<512x128xbf16, #tpu.memory_space<vmem>>, vector<512x128xbf16>
    %cst_8 = arith.constant dense<0.000000e+00> : vector<256x128xf32>
    %10 = tpu.matmul %8, %9, %cst_8 {dimension_numbers = #tpu.dot_dimension_numbers<[1], [0], [0], [1], [0, 0, 1, 1], [], []>} : vector<256x512xbf16>, vector<512x128xbf16>, vector<256x128xf32> -> vector<256x128xf32>
    %c0_9 = arith.constant 0 : index
    %c0_10 = arith.constant 0 : index
    %11 = vector.load %arg5[%c0_9, %c0_10] : memref<1x128xf32, #tpu.memory_space<vmem>>, vector<1x128xf32>
    %12 = vector.broadcast %11 : vector<1x128xf32> to vector<256x128xf32>
    %13 = arith.addf %10, %12 : vector<256x128xf32>
    %cst_11 = arith.constant 0.000000e+00 : f32
    %14 = vector.broadcast %cst_11 : f32 to vector<256x128xf32>
    %15 = arith.maximumf %13, %14 : vector<256x128xf32>
    %16 = arith.truncf %15 : vector<256x128xf32> to vector<256x128xbf16>
    %c0_12 = arith.constant 0 : index
    %c0_13 = arith.constant 0 : index
    %17 = vector.load %arg6[%c0_12, %c0_13] : memref<128x128xbf16, #tpu.memory_space<vmem>>, vector<128x128xbf16>
    %cst_14 = arith.constant dense<0.000000e+00> : vector<256x128xf32>
    %18 = tpu.matmul %16, %17, %cst_14 {dimension_numbers = #tpu.dot_dimension_numbers<[1], [0], [0], [1], [0, 0, 1, 1], [], []>} : vector<256x128xbf16>, vector<128x128xbf16>, vector<256x128xf32> -> vector<256x128xf32>
    %c0_15 = arith.constant 0 : index
    %c0_16 = arith.constant 0 : index
    %19 = vector.load %arg7[%c0_15, %c0_16] : memref<1x128xf32, #tpu.memory_space<vmem>>, vector<1x128xf32>
    %20 = vector.broadcast %19 : vector<1x128xf32> to vector<256x128xf32>
    %21 = arith.addf %18, %20 : vector<256x128xf32>
    %c0_17 = arith.constant 0 : index
    %c0_18 = arith.constant 0 : index
    %22 = vector.load %arg8[%c0_17, %c0_18] : memref<256x128xf32, #tpu.memory_space<vmem>>, vector<256x128xf32>
    tpu.vector_store %arg8[%c0_17, %c0_18], %21 {strides = array<i32>} : memref<256x128xf32, #tpu.memory_space<vmem>>, vector<256x128xf32>,
    return
  }
  func.func @transform_0(%arg0: i32) -> (i32, i32) {
    %c0_i32 = arith.constant 0 : i32
    %c0_i32_0 = arith.constant 0 : i32
    return %arg0, %c0_i32 : i32, i32
  }
  func.func @transform_1(%arg0: i32) -> (i32, i32) {
    %c0_i32 = arith.constant 0 : i32
    %c0_i32_0 = arith.constant 0 : i32
    %c0_i32_1 = arith.constant 0 : i32
    return %c0_i32, %c0_i32_0 : i32, i32
  }
  func.func @transform_2(%arg0: i32) -> (i32, i32) {
    %c0_i32 = arith.constant 0 : i32
    %c0_i32_0 = arith.constant 0 : i32
    %c0_i32_1 = arith.constant 0 : i32
    return %c0_i32, %c0_i32_0 : i32, i32
  }
  func.func @transform_3(%arg0: i32) -> (i32, i32) {
    %c0_i32 = arith.constant 0 : i32
    %c0_i32_0 = arith.constant 0 : i32
    %c0_i32_1 = arith.constant 0 : i32
    return %c0_i32, %c0_i32_0 : i32, i32
  }
  func.func @transform_4(%arg0: i32) -> (i32, i32) {
    %c0_i32 = arith.constant 0 : i32
    %c0_i32_0 = arith.constant 0 : i32
    %c0_i32_1 = arith.constant 0 : i32
    return %c0_i32, %c0_i32_0 : i32, i32
  }
  func.func @transform_5(%arg0: i32) -> (i32, i32) {
    %c0_i32 = arith.constant 0 : i32
    %c0_i32_0 = arith.constant 0 : i32
    %c0_i32_1 = arith.constant 0 : i32
    return %c0_i32, %c0_i32_0 : i32, i32
  }
  func.func @transform_6(%arg0: i32) -> (i32, i32) {
    %c0_i32 = arith.constant 0 : i32
    %c0_i32_0 = arith.constant 0 : i32
    %c0_i32_1 = arith.constant 0 : i32
    return %c0_i32, %c0_i32_0 : i32, i32
  }
  func.func @transform_7(%arg0: i32) -> (i32, i32) {
    %c0_i32 = arith.constant 0 : i32
    %c0_i32_0 = arith.constant 0 : i32
    return %arg0, %c0_i32 : i32, i32
  }
}

</mosaic_0001>

<llo_original>
// kernel: tpu_custom_call.1
$region0: #{tpu_custom_call.1}
  #allocation0 [shape = 'u32[]', space=smem, size = 0x4, offset = 0x4, fixed_abs, tag = 'smem constant byte address 0x4 - core index']
  #allocation1 [shape = 'u32[144,128]{1,0:T(1,128)}', space=vmem, size = 0x12000, scoped, tag = 'internal scratch']
  %s0 = inlined_call_operand.hbm [shape: bf16[256,768], index: 0, kind: input, shape index: {}]
  %s1 = inlined_call_operand.hbm [shape: bf16[768,512], index: 1, kind: input, shape index: {}]
  %s2 = inlined_call_operand.vmem [shape: f32[1,512], index: 2, kind: input, shape index: {}]
  %s3 = inlined_call_operand.hbm [shape: bf16[512,128], index: 3, kind: input, shape index: {}]
  %s4 = inlined_call_operand.vmem [shape: f32[1,128], index: 4, kind: input, shape index: {}]
  %s5 = inlined_call_operand.hbm [shape: bf16[128,128], index: 5, kind: input, shape index: {}]
  %s6 = inlined_call_operand.vmem [shape: f32[1,128], index: 6, kind: input, shape index: {}]
  %s7 = inlined_call_operand.hbm [shape: f32[256,128], index: 7, kind: output, shape index: {}]
  %s8 = sld [smem:[#allocation0]]
  $region54: #{tpu_custom_call.1} parent=0
    _
  %s10 = ssub.s32 1, %s8
  %s11 = scalar_select 0, %s10, %s8
  $region1: #{tpu_custom_call.1} parent=0
    #allocation2 [shape = 'u8[393216]{0}', space=vmem, size = 0x60000, scoped, tag = 'input window, operand 0, single buffered']
    #allocation3 [shape = 's32[1]{0}', space=sflag, size = 0x4, scoped, tag = 'scoped memory for tpu_custom_call.1']
    #allocation4 [shape = 's32[1]{0}', space=sflag, size = 0x4, scoped, tag = 'scoped memory for tpu_custom_call.1']
    #allocation5 [shape = 'u8[786432]{0}', space=vmem, size = 0xc0000, scoped, tag = 'input window, operand 1, single buffered']
    #allocation6 [shape = 's32[1]{0}', space=sflag, size = 0x4, scoped, tag = 'scoped memory for tpu_custom_call.1']
    #allocation7 [shape = 'u8[131072]{0}', space=vmem, size = 0x20000, scoped, tag = 'input window, operand 3, single buffered']
    #allocation8 [shape = 'u8[32768]{0}', space=vmem, size = 0x8000, scoped, tag = 'input window, operand 5, single buffered']
    #allocation9 [shape = 's32[1]{0}', space=sflag, size = 0x4, scoped, tag = 'scoped memory for tpu_custom_call.1']
    #allocation10 [shape = 'u8[131072]{0}', space=vmem, size = 0x20000, scoped, tag = 'output window, operand 0, single buffered']
    %12 = vsyncpa [#allocation3], 0
    %13 = vsyncpa [#allocation6], 0
    %14 = vsyncpa [#allocation9], 0
    %15 = vsyncpa [#allocation4], 0
    // Predicated region
    $region2: #{tpu_custom_call.1} parent=1 // pred_check
      _
    $region3: #{tpu_custom_call.1} parent=1 // pred_check_branch
      %17 = sbr.rel (0) target = $region5
    $region4: #{tpu_custom_call.1} parent=1 // pred_region
      %s19 = ssub.s32 12288, 12288
      %20 = vsyncadd [#allocation3], %s19
      %s21 = sshll.u32 [#allocation2], 4
      %s22 = int_to_ptr.vmem [resolvable:$true] %s21
      %27 = dma.hbm_to_vmem [thread:$0]  %s0, 12288, %s22, [#allocation3], 384, 384, 24
    $region5: #{tpu_custom_call.1} parent=1 // pred_fallthru
      _
    // Predicated region
    $region6: #{tpu_custom_call.1} parent=1 // pred_check
      _
    $region7: #{tpu_custom_call.1} parent=1 // pred_check_branch
      %29 = sbr.rel (0) target = $region9
    $region8: #{tpu_custom_call.1} parent=1 // pred_region
      %s31 = ssub.s32 24576, 24576
      %32 = vsyncadd [#allocation6], %s31
      %s33 = sshll.u32 [#allocation5], 4
      %s34 = int_to_ptr.vmem [resolvable:$true] %s33
      %39 = dma.hbm_to_vmem [thread:$0]  %s1, 24576, %s34, [#allocation6], 256, 256, 16
    $region9: #{tpu_custom_call.1} parent=1 // pred_fallthru
      _
    // Predicated region
    $region10: #{tpu_custom_call.1} parent=1 // pred_check
      _
    $region11: #{tpu_custom_call.1} parent=1 // pred_check_branch
      %41 = sbr.rel (0) target = $region13
    $region12: #{tpu_custom_call.1} parent=1 // pred_region
      _
    $region13: #{tpu_custom_call.1} parent=1 // pred_fallthru
      _
    // Predicated region
    $region14: #{tpu_custom_call.1} parent=1 // pred_check
      _
    $region15: #{tpu_custom_call.1} parent=1 // pred_check_branch
      %43 = sbr.rel (0) target = $region17
    $region16: #{tpu_custom_call.1} parent=1 // pred_region
      %s45 = ssub.s32 4096, 4096
      %46 = vsyncadd [#allocation6], %s45
      %s47 = sshll.u32 [#allocation7], 4
      %s48 = int_to_ptr.vmem [resolvable:$true] %s47
      %53 = dma.hbm_to_vmem [thread:$0]  %s3, 4096, %s48, [#allocation6], 64, 64, 4
    $region17: #{tpu_custom_call.1} parent=1 // pred_fallthru
      _
    // Predicated region
    $region18: #{tpu_custom_call.1} parent=1 // pred_check
      _
    $region19: #{tpu_custom_call.1} parent=1 // pred_check_branch
      %55 = sbr.rel (0) target = $region21
    $region20: #{tpu_custom_call.1} parent=1 // pred_region
      _
    $region21: #{tpu_custom_call.1} parent=1 // pred_fallthru
      _
    // Predicated region
    $region22: #{tpu_custom_call.1} parent=1 // pred_check
      _
    $region23: #{tpu_custom_call.1} parent=1 // pred_check_branch
      %57 = sbr.rel (0) target = $region25
    $region24: #{tpu_custom_call.1} parent=1 // pred_region
      %s59 = ssub.s32 1024, 1024
      %60 = vsyncadd [#allocation9], %s59
      %s61 = sshll.u32 [#allocation8], 4
      %s62 = int_to_ptr.vmem [resolvable:$true] %s61
      %67 = dma.hbm_to_vmem [thread:$0]  %s5, 1024, %s62, [#allocation9], 64, 64, 4
    $region25: #{tpu_custom_call.1} parent=1 // pred_fallthru
      _
    // Predicated region
    $region26: #{tpu_custom_call.1} parent=1 // pred_check
      _
    $region27: #{tpu_custom_call.1} parent=1 // pred_check_branch
      %69 = sbr.rel (0) target = $region29
    $region28: #{tpu_custom_call.1} parent=1 // pred_region
      _
    $region29: #{tpu_custom_call.1} parent=1 // pred_fallthru
      _
    // Predicated region
    $region30: #{tpu_custom_call.1} parent=1 // pred_check
      _
    $region31: #{tpu_custom_call.1} parent=1 // pred_check_branch
      %71 = sbr.rel (0) target = $region33
    $region32: #{tpu_custom_call.1} parent=1 // pred_region
      %72 = dma.done [#allocation3], 12288
    $region33: #{tpu_custom_call.1} parent=1 // pred_fallthru
      _
    // Predicated region
    $region34: #{tpu_custom_call.1} parent=1 // pred_check
      _
    $region35: #{tpu_custom_call.1} parent=1 // pred_check_branch
      %74 = sbr.rel (0) target = $region37
    $region36: #{tpu_custom_call.1} parent=1 // pred_region
      %75 = dma.done [#allocation6], 24576
    $region37: #{tpu_custom_call.1} parent=1 // pred_fallthru
      _
    // Predicated region
    $region38: #{tpu_custom_call.1} parent=1 // pred_check
      _
    $region39: #{tpu_custom_call.1} parent=1 // pred_check_branch
      %77 = sbr.rel (0) target = $region41
    $region40: #{tpu_custom_call.1} parent=1 // pred_region
      %78 = dma.done [#allocation6], 4096
    $region41: #{tpu_custom_call.1} parent=1 // pred_fallthru
      _
    // Predicated region
    $region42: #{tpu_custom_call.1} parent=1 // pred_check
      _
    $region43: #{tpu_custom_call.1} parent=1 // pred_check_branch
      %80 = sbr.rel (0) target = $region45
    $region44: #{tpu_custom_call.1} parent=1 // pred_region
      %81 = dma.done [#allocation9], 1024
    $region45: #{tpu_custom_call.1} parent=1 // pred_fallthru
      _
    %v83 = vld [vmem:[#allocation2] sm:$0xff]
    %v84 = vld [vmem:[#allocation2 + $0x8] sm:$0xff]
    %v85 = vld [vmem:[#allocation2 + $0x10] sm:$0xff]
    %v86 = vld [vmem:[#allocation2 + $0x18] sm:$0xff]
    %v87 = vld [vmem:[#allocation2 + $0x20] sm:$0xff]
    %v88 = vld [vmem:[#allocation2 + $0x28] sm:$0xff]
    %v89 = vld [vmem:[#allocation2 + $0x30] sm:$0xff]
    %v90 = vld [vmem:[#allocation2 + $0x38] sm:$0xff]
    %v91 = vld [vmem:[#allocation2 + $0x40] sm:$0xff]
    %v92 = vld [vmem:[#allocation2 + $0x48] sm:$0xff]
    %v93 = vld [vmem:[#allocation2 + $0x50] sm:$0xff]
    %v94 = vld [vmem:[#allocation2 + $0x58] sm:$0xff]
    %v95 = vld [vmem:[#allocation2 + $0x60] sm:$0xff]
    %v96 = vld [vmem:[#allocation2 + $0x68] sm:$0xff]
    %v97 = vld [vmem:[#allocation2 + $0x70] sm:$0xff]
    %v98 = vld [vmem:[#allocation2 + $0x78] sm:$0xff]
    %v99 = vld [vmem:[#allocation2 + $0x80] sm:$0xff]
    %v100 = vld [vmem:[#allocation2 + $0x88] sm:$0xff]
    %v101 = vld [vmem:[#allocation2 + $0x90] sm:$0xff]
    %v102 = vld [vmem:[#allocation2 + $0x98] sm:$0xff]
    %v103 = vld [vmem:[#allocation2 + $0xa0] sm:$0xff]
    %v104 = vld [vmem:[#allocation2 + $0xa8] sm:$0xff]
    %v105 = vld [vmem:[#allocation2 + $0xb0] sm:$0xff]
    %v106 = vld [vmem:[#allocation2 + $0xb8] sm:$0xff]
    %v107 = vld [vmem:[#allocation2 + $0xc0] sm:$0xff]
    %v108 = vld [vmem:[#allocation2 + $0xc8] sm:$0xff]
    %v109 = vld [vmem:[#allocation2 + $0xd0] sm:$0xff]
    %v110 = vld [vmem:[#allocation2 + $0xd8] sm:$0xff]
    %v111 = vld [vmem:[#allocation2 + $0xe0] sm:$0xff]
    %v112 = vld [vmem:[#allocation2 + $0xe8] sm:$0xff]
    %v113 = vld [vmem:[#allocation2 + $0xf0] sm:$0xff]
    %v114 = vld [vmem:[#allocation2 + $0xf8] sm:$0xff]
    %v115 = vld [vmem:[#allocation2 + $0x100] sm:$0xff]
    %v116 = vld [vmem:[#allocation2 + $0x108] sm:$0xff]
    %v117 = vld [vmem:[#allocation2 + $0x110] sm:$0xff]
    %v118 = vld [vmem:[#allocation2 + $0x118] sm:$0xff]
    %v119 = vld [vmem:[#allocation2 + $0x120] sm:$0xff]
    %v120 = vld [vmem:[#allocation2 + $0x128] sm:$0xff]
    %v121 = vld [vmem:[#allocation2 + $0x130] sm:$0xff]
    %v122 = vld [vmem:[#allocation2 + $0x138] sm:$0xff]
    %v123 = vld [vmem:[#allocation2 + $0x140] sm:$0xff]
    %v124 = vld [vmem:[#allocation2 + $0x148] sm:$0xff]
    %v125 = vld [vmem:[#allocation2 + $0x150] sm:$0xff]
    %v126 = vld [vmem:[#allocation2 + $0x158] sm:$0xff]
    %v127 = vld [vmem:[#allocation2 + $0x160] sm:$0xff]
    %v128 = vld [vmem:[#allocation2 + $0x168] sm:$0xff]
    %v129 = vld [vmem:[#allocation2 + $0x170] sm:$0xff]
    %v130 = vld [vmem:[#allocation2 + $0x178] sm:$0xff]
    %v131 = vld [vmem:[#allocation2 + $0x180] sm:$0xff]
    %v132 = vld [vmem:[#allocation2 + $0x188] sm:$0xff]
    %v133 = vld [vmem:[#allocation2 + $0x190] sm:$0xff]
    %v134 = vld [vmem:[#allocation2 + $0x198] sm:$0xff]
    %v135 = vld [vmem:[#allocation2 + $0x1a0] sm:$0xff]
    %v136 = vld [vmem:[#allocation2 + $0x1a8] sm:$0xff]
    %v137 = vld [vmem:[#allocation2 + $0x1b0] sm:$0xff]
    %v138 = vld [vmem:[#allocation2 + $0x1b8] sm:$0xff]
    %v139 = vld [vmem:[#allocation2 + $0x1c0] sm:$0xff]
    %v140 = vld [vmem:[#allocation2 + $0x1c8] sm:$0xff]
    %v141 = vld [vmem:[#allocation2 + $0x1d0] sm:$0xff]
    %v142 = vld [vmem:[#allocation2 + $0x1d8] sm:$0xff]
    %v143 = vld [vmem:[#allocation2 + $0x1e0] sm:$0xff]
    %v144 = vld [vmem:[#allocation2 + $0x1e8] sm:$0xff]
    %v145 = vld [vmem:[#allocation2 + $0x1f0] sm:$0xff]
    %v146 = vld [vmem:[#allocation2 + $0x1f8] sm:$0xff]
    %v147 = vld [vmem:[#allocation2 + $0x200] sm:$0xff]
    %v148 = vld [vmem:[#allocation2 + $0x208] sm:$0xff]
    %v149 = vld [vmem:[#allocation2 + $0x210] sm:$0xff]
    %v150 = vld [vmem:[#allocation2 + $0x218] sm:$0xff]
    %v151 = vld [vmem:[#allocation2 + $0x220] sm:$0xff]
    %v152 = vld [vmem:[#allocation2 + $0x228] sm:$0xff]
    %v153 = vld [vmem:[#allocation2 + $0x230] sm:$0xff]
    %v154 = vld [vmem:[#allocation2 + $0x238] sm:$0xff]
    %v155 = vld [vmem:[#allocation2 + $0x240] sm:$0xff]
    %v156 = vld [vmem:[#allocation2 + $0x248] sm:$0xff]
    %v157 = vld [vmem:[#allocation2 + $0x250] sm:$0xff]
    %v158 = vld [vmem:[#allocation2 + $0x258] sm:$0xff]
    %v159 = vld [vmem:[#allocation2 + $0x260] sm:$0xff]
    %v160 = vld [vmem:[#allocation2 + $0x268] sm:$0xff]
    %v161 = vld [vmem:[#allocation2 + $0x270] sm:$0xff]
    %v162 = vld [vmem:[#allocation2 + $0x278] sm:$0xff]
    %v163 = vld [vmem:[#allocation2 + $0x280] sm:$0xff]
    %v164 = vld [vmem:[#allocation2 + $0x288] sm:$0xff]
    %v165 = vld [vmem:[#allocation2 + $0x290] sm:$0xff]
    %v166 = vld [vmem:[#allocation2 + $0x298] sm:$0xff]
    %v167 = vld [vmem:[#allocation2 + $0x2a0] sm:$0xff]
    %v168 = vld [vmem:[#allocation2 + $0x2a8] sm:$0xff]
    %v169 = vld [vmem:[#allocation2 + $0x2b0] sm:$0xff]
    %v170 = vld [vmem:[#allocation2 + $0x2b8] sm:$0xff]
    %v171 = vld [vmem:[#allocation2 + $0x2c0] sm:$0xff]
    %v172 = vld [vmem:[#allocation2 + $0x2c8] sm:$0xff]
    %v173 = vld [vmem:[#allocation2 + $0x2d0] sm:$0xff]
    %v174 = vld [vmem:[#allocation2 + $0x2d8] sm:$0xff]
    %v175 = vld [vmem:[#allocation2 + $0x2e0] sm:$0xff]
    %v176 = vld [vmem:[#allocation2 + $0x2e8] sm:$0xff]
    %v177 = vld [vmem:[#allocation2 + $0x2f0] sm:$0xff]
    %v178 = vld [vmem:[#allocation2 + $0x2f8] sm:$0xff]
    %v179 = vld [vmem:[#allocation5] sm:$0xff]
    %v180 = vld [vmem:[#allocation5 + $0x8] sm:$0xff]
    %v181 = vld [vmem:[#allocation5 + $0x10] sm:$0xff]
    %v182 = vld [vmem:[#allocation5 + $0x18] sm:$0xff]
    %v183 = vld [vmem:[#allocation5 + $0x20] sm:$0xff]
    %v184 = vld [vmem:[#allocation5 + $0x28] sm:$0xff]
    %v185 = vld [vmem:[#allocation5 + $0x30] sm:$0xff]
    %v186 = vld [vmem:[#allocation5 + $0x38] sm:$0xff]
    %v187 = vld [vmem:[#allocation5 + $0x40] sm:$0xff]
    %v188 = vld [vmem:[#allocation5 + $0x48] sm:$0xff]
    %v189 = vld [vmem:[#allocation5 + $0x50] sm:$0xff]
    %v190 = vld [vmem:[#allocation5 + $0x58] sm:$0xff]
    %v191 = vld [vmem:[#allocation5 + $0x60] sm:$0xff]
    %v192 = vld [vmem:[#allocation5 + $0x68] sm:$0xff]
    %v193 = vld [vmem:[#allocation5 + $0x70] sm:$0xff]
    %v194 = vld [vmem:[#allocation5 + $0x78] sm:$0xff]
    %v195 = vld [vmem:[#allocation5 + $0x80] sm:$0xff]
    %v196 = vld [vmem:[#allocation5 + $0x88] sm:$0xff]
    %v197 = vld [vmem:[#allocation5 + $0x90] sm:$0xff]
    %v198 = vld [vmem:[#allocation5 + $0x98] sm:$0xff]
    %v199 = vld [vmem:[#allocation5 + $0xa0] sm:$0xff]
    %v200 = vld [vmem:[#allocation5 + $0xa8] sm:$0xff]
    %v201 = vld [vmem:[#allocation5 + $0xb0] sm:$0xff]
    %v202 = vld [vmem:[#allocation5 + $0xb8] sm:$0xff]
    %v203 = vld [vmem:[#allocation5 + $0xc0] sm:$0xff]
    %v204 = vld [vmem:[#allocation5 + $0xc8] sm:$0xff]
    %v205 = vld [vmem:[#allocation5 + $0xd0] sm:$0xff]
    %v206 = vld [vmem:[#allocation5 + $0xd8] sm:$0xff]
    %v207 = vld [vmem:[#allocation5 + $0xe0] sm:$0xff]
    %v208 = vld [vmem:[#allocation5 + $0xe8] sm:$0xff]
    %v209 = vld [vmem:[#allocation5 + $0xf0] sm:$0xff]
    %v210 = vld [vmem:[#allocation5 + $0xf8] sm:$0xff]
    %v211 = vld [vmem:[#allocation5 + $0x100] sm:$0xff]
    %v212 = vld [vmem:[#allocation5 + $0x108] sm:$0xff]
    %v213 = vld [vmem:[#allocation5 + $0x110] sm:$0xff]
    %v214 = vld [vmem:[#allocation5 + $0x118] sm:$0xff]
    %v215 = vld [vmem:[#allocation5 + $0x120] sm:$0xff]
    %v216 = vld [vmem:[#allocation5 + $0x128] sm:$0xff]
    %v217 = vld [vmem:[#allocation5 + $0x130] sm:$0xff]
    %v218 = vld [vmem:[#allocation5 + $0x138] sm:$0xff]
    %v219 = vld [vmem:[#allocation5 + $0x140] sm:$0xff]
    %v220 = vld [vmem:[#allocation5 + $0x148] sm:$0xff]
    %v221 = vld [vmem:[#allocation5 + $0x150] sm:$0xff]
    %v222 = vld [vmem:[#allocation5 + $0x158] sm:$0xff]
    %v223 = vld [vmem:[#allocation5 + $0x160] sm:$0xff]
    %v224 = vld [vmem:[#allocation5 + $0x168] sm:$0xff]
    %v225 = vld [vmem:[#allocation5 + $0x170] sm:$0xff]
    %v226 = vld [vmem:[#allocation5 + $0x178] sm:$0xff]
    %v227 = vld [vmem:[#allocation5 + $0x180] sm:$0xff]
    %v228 = vld [vmem:[#allocation5 + $0x188] sm:$0xff]
    %v229 = vld [vmem:[#allocation5 + $0x190] sm:$0xff]
    %v230 = vld [vmem:[#allocation5 + $0x198] sm:$0xff]
    %v231 = vld [vmem:[#allocation5 + $0x1a0] sm:$0xff]
    %v232 = vld [vmem:[#allocation5 + $0x1a8] sm:$0xff]
    %v233 = vld [vmem:[#allocation5 + $0x1b0] sm:$0xff]
    %v234 = vld [vmem:[#allocation5 + $0x1b8] sm:$0xff]
    %v235 = vld [vmem:[#allocation5 + $0x1c0] sm:$0xff]
    %v236 = vld [vmem:[#allocation5 + $0x1c8] sm:$0xff]
    %v237 = vld [vmem:[#allocation5 + $0x1d0] sm:$0xff]
    %v238 = vld [vmem:[#allocation5 + $0x1d8] sm:$0xff]
    %v239 = vld [vmem:[#allocation5 + $0x1e0] sm:$0xff]
    %v240 = vld [vmem:[#allocation5 + $0x1e8] sm:$0xff]
    %v241 = vld [vmem:[#allocation5 + $0x1f0] sm:$0xff]
    %v242 = vld [vmem:[#allocation5 + $0x1f8] sm:$0xff]
    %v243 = vld [vmem:[#allocation5 + $0x200] sm:$0xff]
    %v244 = vld [vmem:[#allocation5 + $0x208] sm:$0xff]
    %v245 = vld [vmem:[#allocation5 + $0x210] sm:$0xff]
    %v246 = vld [vmem:[#allocation5 + $0x218] sm:$0xff]
    %v247 = vld [vmem:[#allocation5 + $0x220] sm:$0xff]
    %v248 = vld [vmem:[#allocation5 + $0x228] sm:$0xff]
    %v249 = vld [vmem:[#allocation5 + $0x230] sm:$0xff]
    %v250 = vld [vmem:[#allocation5 + $0x238] sm:$0xff]
    %v251 = vld [vmem:[#allocation5 + $0x240] sm:$0xff]
    %v252 = vld [vmem:[#allocation5 + $0x248] sm:$0xff]
    %v253 = vld [vmem:[#allocation5 + $0x250] sm:$0xff]
    %v254 = vld [vmem:[#allocation5 + $0x258] sm:$0xff]
    %v255 = vld [vmem:[#allocation5 + $0x260] sm:$0xff]
    %v256 = vld [vmem:[#allocation5 + $0x268] sm:$0xff]
    %v257 = vld [vmem:[#allocation5 + $0x270] sm:$0xff]
    %v258 = vld [vmem:[#allocation5 + $0x278] sm:$0xff]
    %v259 = vld [vmem:[#allocation5 + $0x280] sm:$0xff]
    %v260 = vld [vmem:[#allocation5 + $0x288] sm:$0xff]
    %v261 = vld [vmem:[#allocation5 + $0x290] sm:$0xff]
    %v262 = vld [vmem:[#allocation5 + $0x298] sm:$0xff]
    %v263 = vld [vmem:[#allocation5 + $0x2a0] sm:$0xff]
    %v264 = vld [vmem:[#allocation5 + $0x2a8] sm:$0xff]
    %v265 = vld [vmem:[#allocation5 + $0x2b0] sm:$0xff]
    %v266 = vld [vmem:[#allocation5 + $0x2b8] sm:$0xff]
    %v267 = vld [vmem:[#allocation5 + $0x2c0] sm:$0xff]
    %v268 = vld [vmem:[#allocation5 + $0x2c8] sm:$0xff]
    %v269 = vld [vmem:[#allocation5 + $0x2d0] sm:$0xff]
    %v270 = vld [vmem:[#allocation5 + $0x2d8] sm:$0xff]
    %v271 = vld [vmem:[#allocation5 + $0x2e0] sm:$0xff]
    %v272 = vld [vmem:[#allocation5 + $0x2e8] sm:$0xff]
    %v273 = vld [vmem:[#allocation5 + $0x2f0] sm:$0xff]
    %v274 = vld [vmem:[#allocation5 + $0x2f8] sm:$0xff]
    %v275 = vld [vmem:[#allocation5 + $0x300] sm:$0xff]
    %v276 = vld [vmem:[#allocation5 + $0x308] sm:$0xff]
    %v277 = vld [vmem:[#allocation5 + $0x310] sm:$0xff]
    %v278 = vld [vmem:[#allocation5 + $0x318] sm:$0xff]
    %v279 = vld [vmem:[#allocation5 + $0x320] sm:$0xff]
    %v280 = vld [vmem:[#allocation5 + $0x328] sm:$0xff]
    %v281 = vld [vmem:[#allocation5 + $0x330] sm:$0xff]
    %v282 = vld [vmem:[#allocation5 + $0x338] sm:$0xff]
    %v283 = vld [vmem:[#allocation5 + $0x340] sm:$0xff]
    %v284 = vld [vmem:[#allocation5 + $0x348] sm:$0xff]
    %v285 = vld [vmem:[#allocation5 + $0x350] sm:$0xff]
    %v286 = vld [vmem:[#allocation5 + $0x358] sm:$0xff]
    %v287 = vld [vmem:[#allocation5 + $0x360] sm:$0xff]
    %v288 = vld [vmem:[#allocation5 + $0x368] sm:$0xff]
    %v289 = vld [vmem:[#allocation5 + $0x370] sm:$0xff]
    %v290 = vld [vmem:[#allocation5 + $0x378] sm:$0xff]
    %v291 = vld [vmem:[#allocation5 + $0x380] sm:$0xff]
    %v292 = vld [vmem:[#allocation5 + $0x388] sm:$0xff]
    %v293 = vld [vmem:[#allocation5 + $0x390] sm:$0xff]
    %v294 = vld [vmem:[#allocation5 + $0x398] sm:$0xff]
    %v295 = vld [vmem:[#allocation5 + $0x3a0] sm:$0xff]
    %v296 = vld [vmem:[#allocation5 + $0x3a8] sm:$0xff]
    %v297 = vld [vmem:[#allocation5 + $0x3b0] sm:$0xff]
    %v298 = vld [vmem:[#allocation5 + $0x3b8] sm:$0xff]
    %v299 = vld [vmem:[#allocation5 + $0x3c0] sm:$0xff]
    %v300 = vld [vmem:[#allocation5 + $0x3c8] sm:$0xff]
    %v301 = vld [vmem:[#allocation5 + $0x3d0] sm:$0xff]
    %v302 = vld [vmem:[#allocation5 + $0x3d8] sm:$0xff]
    %v303 = vld [vmem:[#allocation5 + $0x3e0] sm:$0xff]
    %v304 = vld [vmem:[#allocation5 + $0x3e8] sm:$0xff]
    %v305 = vld [vmem:[#allocation5 + $0x3f0] sm:$0xff]
    %v306 = vld [vmem:[#allocation5 + $0x3f8] sm:$0xff]
    %v307 = vld [vmem:[#allocation5 + $0x400] sm:$0xff]
    %v308 = vld [vmem:[#allocation5 + $0x408] sm:$0xff]
    %v309 = vld [vmem:[#allocation5 + $0x410] sm:$0xff]
    %v310 = vld [vmem:[#allocation5 + $0x418] sm:$0xff]
    %v311 = vld [vmem:[#allocation5 + $0x420] sm:$0xff]
    %v312 = vld [vmem:[#allocation5 + $0x428] sm:$0xff]
    %v313 = vld [vmem:[#allocation5 + $0x430] sm:$0xff]
    %v314 = vld [vmem:[#allocation5 + $0x438] sm:$0xff]
    %v315 = vld [vmem:[#allocation5 + $0x440] sm:$0xff]
    %v316 = vld [vmem:[#allocation5 + $0x448] sm:$0xff]
    %v317 = vld [vmem:[#allocation5 + $0x450] sm:$0xff]
    %v318 = vld [vmem:[#allocation5 + $0x458] sm:$0xff]
    %v319 = vld [vmem:[#allocation5 + $0x460] sm:$0xff]
    %v320 = vld [vmem:[#allocation5 + $0x468] sm:$0xff]
    %v321 = vld [vmem:[#allocation5 + $0x470] sm:$0xff]
    %v322 = vld [vmem:[#allocation5 + $0x478] sm:$0xff]
    %v323 = vld [vmem:[#allocation5 + $0x480] sm:$0xff]
    %v324 = vld [vmem:[#allocation5 + $0x488] sm:$0xff]
    %v325 = vld [vmem:[#allocation5 + $0x490] sm:$0xff]
    %v326 = vld [vmem:[#allocation5 + $0x498] sm:$0xff]
    %v327 = vld [vmem:[#allocation5 + $0x4a0] sm:$0xff]
    %v328 = vld [vmem:[#allocation5 + $0x4a8] sm:$0xff]
    %v329 = vld [vmem:[#allocation5 + $0x4b0] sm:$0xff]
    %v330 = vld [vmem:[#allocation5 + $0x4b8] sm:$0xff]
    %v331 = vld [vmem:[#allocation5 + $0x4c0] sm:$0xff]
    %v332 = vld [vmem:[#allocation5 + $0x4c8] sm:$0xff]
    %v333 = vld [vmem:[#allocation5 + $0x4d0] sm:$0xff]
    %v334 = vld [vmem:[#allocation5 + $0x4d8] sm:$0xff]
    %v335 = vld [vmem:[#allocation5 + $0x4e0] sm:$0xff]
    %v336 = vld [vmem:[#allocation5 + $0x4e8] sm:$0xff]
    %v337 = vld [vmem:[#allocation5 + $0x4f0] sm:$0xff]
    %v338 = vld [vmem:[#allocation5 + $0x4f8] sm:$0xff]
    %v339 = vld [vmem:[#allocation5 + $0x500] sm:$0xff]
    %v340 = vld [vmem:[#allocation5 + $0x508] sm:$0xff]
    %v341 = vld [vmem:[#allocation5 + $0x510] sm:$0xff]
    %v342 = vld [vmem:[#allocation5 + $0x518] sm:$0xff]
    %v343 = vld [vmem:[#allocation5 + $0x520] sm:$0xff]
    %v344 = vld [vmem:[#allocation5 + $0x528] sm:$0xff]
    %v345 = vld [vmem:[#allocation5 + $0x530] sm:$0xff]
    %v346 = vld [vmem:[#allocation5 + $0x538] sm:$0xff]
    %v347 = vld [vmem:[#allocation5 + $0x540] sm:$0xff]
    %v348 = vld [vmem:[#allocation5 + $0x548] sm:$0xff]
    %v349 = vld [vmem:[#allocation5 + $0x550] sm:$0xff]
    %v350 = vld [vmem:[#allocation5 + $0x558] sm:$0xff]
    %v351 = vld [vmem:[#allocation5 + $0x560] sm:$0xff]
    %v352 = vld [vmem:[#allocation5 + $0x568] sm:$0xff]
    %v353 = vld [vmem:[#allocation5 + $0x570] sm:$0xff]
    %v354 = vld [vmem:[#allocation5 + $0x578] sm:$0xff]
    %v355 = vld [vmem:[#allocation5 + $0x580] sm:$0xff]
    %v356 = vld [vmem:[#allocation5 + $0x588] sm:$0xff]
    %v357 = vld [vmem:[#allocation5 + $0x590] sm:$0xff]
    %v358 = vld [vmem:[#allocation5 + $0x598] sm:$0xff]
    %v359 = vld [vmem:[#allocation5 + $0x5a0] sm:$0xff]
    %v360 = vld [vmem:[#allocation5 + $0x5a8] sm:$0xff]
    %v361 = vld [vmem:[#allocation5 + $0x5b0] sm:$0xff]
    %v362 = vld [vmem:[#allocation5 + $0x5b8] sm:$0xff]
    %v363 = vld [vmem:[#allocation5 + $0x5c0] sm:$0xff]
    %v364 = vld [vmem:[#allocation5 + $0x5c8] sm:$0xff]
    %v365 = vld [vmem:[#allocation5 + $0x5d0] sm:$0xff]
    %v366 = vld [vmem:[#allocation5 + $0x5d8] sm:$0xff]
    %v367 = vld [vmem:[#allocation5 + $0x5e0] sm:$0xff]
    %v368 = vld [vmem:[#allocation5 + $0x5e8] sm:$0xff]
    %v369 = vld [vmem:[#allocation5 + $0x5f0] sm:$0xff]
    %v370 = vld [vmem:[#allocation5 + $0x5f8] sm:$0xff]
    %v371 = vld [vmem:[%s2] sm:$0xf]
    %v373 = vlaneseq
    %v374 = vshrl.u32 %v373, 7
    %v375 = vsub.s32 0, %v374
    %v376 = vrot.slane %v371, %v375
    %v377 = vlaneseq
    %v378 = vshrl.u32 %v377, 7
    %v379 = vsub.s32 1, %v378
    %v380 = vrot.slane %v371, %v379
    %v381 = vlaneseq
    %v382 = vshrl.u32 %v381, 7
    %v383 = vsub.s32 2, %v382
    %v384 = vrot.slane %v371, %v383
    %v385 = vlaneseq
    %v386 = vshrl.u32 %v385, 7
    %v387 = vsub.s32 3, %v386
    %v388 = vrot.slane %v371, %v387
    %v489 = vunpack.c.l.b16 %v83
    %v490 = vunpack.c.h.b16 %v83
    %v491 = vunpack.c.l.b16 %v84
    %v492 = vunpack.c.h.b16 %v84
    %v493 = vunpack.c.l.b16 %v85
    %v494 = vunpack.c.h.b16 %v85
    %v495 = vunpack.c.l.b16 %v86
    %v496 = vunpack.c.h.b16 %v86
    %v497 = vunpack.c.l.b16 %v87
    %v498 = vunpack.c.h.b16 %v87
    %v499 = vunpack.c.l.b16 %v88
    %v500 = vunpack.c.h.b16 %v88
    %v501 = vunpack.c.l.b16 %v89
    %v502 = vunpack.c.h.b16 %v89
    %v503 = vunpack.c.l.b16 %v90
    %v504 = vunpack.c.h.b16 %v90
    %v505 = vunpack.c.l.b16 %v91
    %v506 = vunpack.c.h.b16 %v91
    %v507 = vunpack.c.l.b16 %v92
    %v508 = vunpack.c.h.b16 %v92
    %v509 = vunpack.c.l.b16 %v93
    %v510 = vunpack.c.h.b16 %v93
    %v511 = vunpack.c.l.b16 %v94
    %v512 = vunpack.c.h.b16 %v94
    %v513 = vunpack.c.l.b16 %v95
    %v514 = vunpack.c.h.b16 %v95
    %v515 = vunpack.c.l.b16 %v96
    %v516 = vunpack.c.h.b16 %v96
    %v517 = vunpack.c.l.b16 %v97
    %v518 = vunpack.c.h.b16 %v97
    %v519 = vunpack.c.l.b16 %v98
    %v520 = vunpack.c.h.b16 %v98
    %v521 = vunpack.c.l.b16 %v99
    %v522 = vunpack.c.h.b16 %v99
    %v523 = vunpack.c.l.b16 %v100
    %v524 = vunpack.c.h.b16 %v100
    %v525 = vunpack.c.l.b16 %v101
    %v526 = vunpack.c.h.b16 %v101
    %v527 = vunpack.c.l.b16 %v102
    %v528 = vunpack.c.h.b16 %v102
    %v529 = vunpack.c.l.b16 %v103
    %v530 = vunpack.c.h.b16 %v103
    %v531 = vunpack.c.l.b16 %v104
    %v532 = vunpack.c.h.b16 %v104
    %v533 = vunpack.c.l.b16 %v105
    %v534 = vunpack.c.h.b16 %v105
    %v535 = vunpack.c.l.b16 %v106
    %v536 = vunpack.c.h.b16 %v106
    %v537 = vunpack.c.l.b16 %v107
    %v538 = vunpack.c.h.b16 %v107
    %v539 = vunpack.c.l.b16 %v108
    %v540 = vunpack.c.h.b16 %v108
    %v541 = vunpack.c.l.b16 %v109
    %v542 = vunpack.c.h.b16 %v109
    %v543 = vunpack.c.l.b16 %v110
    %v544 = vunpack.c.h.b16 %v110
    %v545 = vunpack.c.l.b16 %v111
    %v546 = vunpack.c.h.b16 %v111
    %v547 = vunpack.c.l.b16 %v112
    %v548 = vunpack.c.h.b16 %v112
    %v549 = vunpack.c.l.b16 %v113
    %v550 = vunpack.c.h.b16 %v113
    %v551 = vunpack.c.l.b16 %v114
    %v552 = vunpack.c.h.b16 %v114
    %v553 = vunpack.c.l.b16 %v115
    %v554 = vunpack.c.h.b16 %v115
    %v555 = vunpack.c.l.b16 %v116
    %v556 = vunpack.c.h.b16 %v116
    %v557 = vunpack.c.l.b16 %v117
    %v558 = vunpack.c.h.b16 %v117
    %v559 = vunpack.c.l.b16 %v118
    %v560 = vunpack.c.h.b16 %v118
    %v561 = vunpack.c.l.b16 %v119
    %v562 = vunpack.c.h.b16 %v119
    %v563 = vunpack.c.l.b16 %v120
    %v564 = vunpack.c.h.b16 %v120
    %v565 = vunpack.c.l.b16 %v121
    %v566 = vunpack.c.h.b16 %v121
    %v567 = vunpack.c.l.b16 %v122
    %v568 = vunpack.c.h.b16 %v122
    %v569 = vunpack.c.l.b16 %v123
    %v570 = vunpack.c.h.b16 %v123
    %v571 = vunpack.c.l.b16 %v124
    %v572 = vunpack.c.h.b16 %v124
    %v573 = vunpack.c.l.b16 %v125
    %v574 = vunpack.c.h.b16 %v125
    %v575 = vunpack.c.l.b16 %v126
    %v576 = vunpack.c.h.b16 %v126
    %v577 = vunpack.c.l.b16 %v127
    %v578 = vunpack.c.h.b16 %v127
    %v579 = vunpack.c.l.b16 %v128
    %v580 = vunpack.c.h.b16 %v128
    %v581 = vunpack.c.l.b16 %v129
    %v582 = vunpack.c.h.b16 %v129
    %v583 = vunpack.c.l.b16 %v130
    %v584 = vunpack.c.h.b16 %v130
    %v585 = vunpack.c.l.b16 %v131
    %v586 = vunpack.c.h.b16 %v131
    %v587 = vunpack.c.l.b16 %v132
    %v588 = vunpack.c.h.b16 %v132
    %v589 = vunpack.c.l.b16 %v133
    %v590 = vunpack.c.h.b16 %v133
    %v591 = vunpack.c.l.b16 %v134
    %v592 = vunpack.c.h.b16 %v134
    %v593 = vunpack.c.l.b16 %v135
    %v594 = vunpack.c.h.b16 %v135
    %v595 = vunpack.c.l.b16 %v136
    %v596 = vunpack.c.h.b16 %v136
    %v597 = vunpack.c.l.b16 %v137
    %v598 = vunpack.c.h.b16 %v137
    %v599 = vunpack.c.l.b16 %v138
    %v600 = vunpack.c.h.b16 %v138
    %v601 = vunpack.c.l.b16 %v139
    %v602 = vunpack.c.h.b16 %v139
    %v603 = vunpack.c.l.b16 %v140
    %v604 = vunpack.c.h.b16 %v140
    %v605 = vunpack.c.l.b16 %v141
    %v606 = vunpack.c.h.b16 %v141
    %v607 = vunpack.c.l.b16 %v142
    %v608 = vunpack.c.h.b16 %v142
    %v609 = vunpack.c.l.b16 %v143
    %v610 = vunpack.c.h.b16 %v143
    %v611 = vunpack.c.l.b16 %v144
    %v612 = vunpack.c.h.b16 %v144
    %v613 = vunpack.c.l.b16 %v145
    %v614 = vunpack.c.h.b16 %v145
    %v615 = vunpack.c.l.b16 %v146
    %v616 = vunpack.c.h.b16 %v146
    %v617 = vunpack.c.l.b16 %v147
    %v618 = vunpack.c.h.b16 %v147
    %v619 = vunpack.c.l.b16 %v148
    %v620 = vunpack.c.h.b16 %v148
    %v621 = vunpack.c.l.b16 %v149
    %v622 = vunpack.c.h.b16 %v149
    %v623 = vunpack.c.l.b16 %v150
    %v624 = vunpack.c.h.b16 %v150
    %v625 = vunpack.c.l.b16 %v151
    %v626 = vunpack.c.h.b16 %v151
    %v627 = vunpack.c.l.b16 %v152
    %v628 = vunpack.c.h.b16 %v152
    %v629 = vunpack.c.l.b16 %v153
    %v630 = vunpack.c.h.b16 %v153
    %v631 = vunpack.c.l.b16 %v154
    %v632 = vunpack.c.h.b16 %v154
    %v633 = vunpack.c.l.b16 %v155
    %v634 = vunpack.c.h.b16 %v155
    %v635 = vunpack.c.l.b16 %v156
    %v636 = vunpack.c.h.b16 %v156
    %v637 = vunpack.c.l.b16 %v157
    %v638 = vunpack.c.h.b16 %v157
    %v639 = vunpack.c.l.b16 %v158
    %v640 = vunpack.c.h.b16 %v158
    %v641 = vunpack.c.l.b16 %v159
    %v642 = vunpack.c.h.b16 %v159
    %v643 = vunpack.c.l.b16 %v160
    %v644 = vunpack.c.h.b16 %v160
    %v645 = vunpack.c.l.b16 %v161
    %v646 = vunpack.c.h.b16 %v161
    %v647 = vunpack.c.l.b16 %v162
    %v648 = vunpack.c.h.b16 %v162
    %v649 = vunpack.c.l.b16 %v163
    %v650 = vunpack.c.h.b16 %v163
    %v651 = vunpack.c.l.b16 %v164
    %v652 = vunpack.c.h.b16 %v164
    %v653 = vunpack.c.l.b16 %v165
    %v654 = vunpack.c.h.b16 %v165
    %v655 = vunpack.c.l.b16 %v166
    %v656 = vunpack.c.h.b16 %v166
    %v657 = vunpack.c.l.b16 %v167
    %v658 = vunpack.c.h.b16 %v167
    %v659 = vunpack.c.l.b16 %v168
    %v660 = vunpack.c.h.b16 %v168
    %v661 = vunpack.c.l.b16 %v169
    %v662 = vunpack.c.h.b16 %v169
    %v663 = vunpack.c.l.b16 %v170
    %v664 = vunpack.c.h.b16 %v170
    %v665 = vunpack.c.l.b16 %v171
    %v666 = vunpack.c.h.b16 %v171
    %v667 = vunpack.c.l.b16 %v172
    %v668 = vunpack.c.h.b16 %v172
    %v669 = vunpack.c.l.b16 %v173
    %v670 = vunpack.c.h.b16 %v173
    %v671 = vunpack.c.l.b16 %v174
    %v672 = vunpack.c.h.b16 %v174
    %v673 = vunpack.c.l.b16 %v175
    %v674 = vunpack.c.h.b16 %v175
    %v675 = vunpack.c.l.b16 %v176
    %v676 = vunpack.c.h.b16 %v176
    %v677 = vunpack.c.l.b16 %v177
    %v678 = vunpack.c.h.b16 %v177
    %v679 = vunpack.c.l.b16 %v178
    %v680 = vunpack.c.h.b16 %v178
    %v681 = vpack.c.b16 %v495, %v489
    %v682 = vpack.c.b16 %v496, %v490
    %v683 = vpack.c.b16 %v497, %v491
    %v684 = vpack.c.b16 %v498, %v492
    %v685 = vpack.c.b16 %v499, %v493
    %v686 = vpack.c.b16 %v500, %v494
    %v687 = vpack.c.b16 %v507, %v501
    %v688 = vpack.c.b16 %v508, %v502
    %v689 = vpack.c.b16 %v509, %v503
    %v690 = vpack.c.b16 %v510, %v504
    %v691 = vpack.c.b16 %v511, %v505
    %v692 = vpack.c.b16 %v512, %v506
    %v693 = vpack.c.b16 %v519, %v513
    %v694 = vpack.c.b16 %v520, %v514
    %v695 = vpack.c.b16 %v521, %v515
    %v696 = vpack.c.b16 %v522, %v516
    %v697 = vpack.c.b16 %v523, %v517
    %v698 = vpack.c.b16 %v524, %v518
    %v699 = vpack.c.b16 %v531, %v525
    %v700 = vpack.c.b16 %v532, %v526
    %v701 = vpack.c.b16 %v533, %v527
    %v702 = vpack.c.b16 %v534, %v528
    %v703 = vpack.c.b16 %v535, %v529
    %v704 = vpack.c.b16 %v536, %v530
    %v705 = vpack.c.b16 %v543, %v537
    %v706 = vpack.c.b16 %v544, %v538
    %v707 = vpack.c.b16 %v545, %v539
    %v708 = vpack.c.b16 %v546, %v540
    %v709 = vpack.c.b16 %v547, %v541
    %v710 = vpack.c.b16 %v548, %v542
    %v711 = vpack.c.b16 %v555, %v549
    %v712 = vpack.c.b16 %v556, %v550
    %v713 = vpack.c.b16 %v557, %v551
    %v714 = vpack.c.b16 %v558, %v552
    %v715 = vpack.c.b16 %v559, %v553
    %v716 = vpack.c.b16 %v560, %v554
    %v717 = vpack.c.b16 %v567, %v561
    %v718 = vpack.c.b16 %v568, %v562
    %v719 = vpack.c.b16 %v569, %v563
    %v720 = vpack.c.b16 %v570, %v564
    %v721 = vpack.c.b16 %v571, %v565
    %v722 = vpack.c.b16 %v572, %v566
    %v723 = vpack.c.b16 %v579, %v573
    %v724 = vpack.c.b16 %v580, %v574
    %v725 = vpack.c.b16 %v581, %v575
    %v726 = vpack.c.b16 %v582, %v576
    %v727 = vpack.c.b16 %v583, %v577
    %v728 = vpack.c.b16 %v584, %v578
    %v729 = vpack.c.b16 %v591, %v585
    %v730 = vpack.c.b16 %v592, %v586
    %v731 = vpack.c.b16 %v593, %v587
    %v732 = vpack.c.b16 %v594, %v588
    %v733 = vpack.c.b16 %v595, %v589
    %v734 = vpack.c.b16 %v596, %v590
    %v735 = vpack.c.b16 %v603, %v597
    %v736 = vpack.c.b16 %v604, %v598
    %v737 = vpack.c.b16 %v605, %v599
    %v738 = vpack.c.b16 %v606, %v600
    %v739 = vpack.c.b16 %v607, %v601
    %v740 = vpack.c.b16 %v608, %v602
    %v741 = vpack.c.b16 %v615, %v609
    %v742 = vpack.c.b16 %v616, %v610
    %v743 = vpack.c.b16 %v617, %v611
    %v744 = vpack.c.b16 %v618, %v612
    %v745 = vpack.c.b16 %v619, %v613
    %v746 = vpack.c.b16 %v620, %v614
    %v747 = vpack.c.b16 %v627, %v621
    %v748 = vpack.c.b16 %v628, %v622
    %v749 = vpack.c.b16 %v629, %v623
    %v750 = vpack.c.b16 %v630, %v624
    %v751 = vpack.c.b16 %v631, %v625
    %v752 = vpack.c.b16 %v632, %v626
    %v753 = vpack.c.b16 %v639, %v633
    %v754 = vpack.c.b16 %v640, %v634
    %v755 = vpack.c.b16 %v641, %v635
    %v756 = vpack.c.b16 %v642, %v636
    %v757 = vpack.c.b16 %v643, %v637
    %v758 = vpack.c.b16 %v644, %v638
    %v759 = vpack.c.b16 %v651, %v645
    %v760 = vpack.c.b16 %v652, %v646
    %v761 = vpack.c.b16 %v653, %v647
    %v762 = vpack.c.b16 %v654, %v648
    %v763 = vpack.c.b16 %v655, %v649
    %v764 = vpack.c.b16 %v656, %v650
    %v765 = vpack.c.b16 %v663, %v657
    %v766 = vpack.c.b16 %v664, %v658
    %v767 = vpack.c.b16 %v665, %v659
    %v768 = vpack.c.b16 %v666, %v660
    %v769 = vpack.c.b16 %v667, %v661
    %v770 = vpack.c.b16 %v668, %v662
    %v771 = vpack.c.b16 %v675, %v669
    %v772 = vpack.c.b16 %v676, %v670
    %v773 = vpack.c.b16 %v677, %v671
    %v774 = vpack.c.b16 %v678, %v672
    %v775 = vpack.c.b16 %v679, %v673
    %v776 = vpack.c.b16 %v680, %v674
    %v1065 = vunpack.c.l.b16 %v179
    %v1066 = vunpack.c.h.b16 %v179
    %v1067 = vunpack.c.l.b16 %v180
    %v1068 = vunpack.c.h.b16 %v180
    %v1069 = vunpack.c.l.b16 %v181
    %v1070 = vunpack.c.h.b16 %v181
    %v1071 = vunpack.c.l.b16 %v182
    %v1072 = vunpack.c.h.b16 %v182
    %v1073 = vunpack.c.l.b16 %v183
    %v1074 = vunpack.c.h.b16 %v183
    %v1075 = vunpack.c.l.b16 %v184
    %v1076 = vunpack.c.h.b16 %v184
    %v1077 = vunpack.c.l.b16 %v185
    %v1078 = vunpack.c.h.b16 %v185
    %v1079 = vunpack.c.l.b16 %v186
    %v1080 = vunpack.c.h.b16 %v186
    %v1081 = vunpack.c.l.b16 %v187
    %v1082 = vunpack.c.h.b16 %v187
    %v1083 = vunpack.c.l.b16 %v188
    %v1084 = vunpack.c.h.b16 %v188
    %v1085 = vunpack.c.l.b16 %v189
    %v1086 = vunpack.c.h.b16 %v189
    %v1087 = vunpack.c.l.b16 %v190
    %v1088 = vunpack.c.h.b16 %v190
    %v1089 = vunpack.c.l.b16 %v191
    %v1090 = vunpack.c.h.b16 %v191
    %v1091 = vunpack.c.l.b16 %v192
    %v1092 = vunpack.c.h.b16 %v192
    %v1093 = vunpack.c.l.b16 %v193
    %v1094 = vunpack.c.h.b16 %v193
    %v1095 = vunpack.c.l.b16 %v194
    %v1096 = vunpack.c.h.b16 %v194
    %v1097 = vunpack.c.l.b16 %v195
    %v1098 = vunpack.c.h.b16 %v195
    %v1099 = vunpack.c.l.b16 %v196
    %v1100 = vunpack.c.h.b16 %v196
    %v1101 = vunpack.c.l.b16 %v197
    %v1102 = vunpack.c.h.b16 %v197
    %v1103 = vunpack.c.l.b16 %v198
    %v1104 = vunpack.c.h.b16 %v198
    %v1105 = vunpack.c.l.b16 %v199
    %v1106 = vunpack.c.h.b16 %v199
    %v1107 = vunpack.c.l.b16 %v200
    %v1108 = vunpack.c.h.b16 %v200
    %v1109 = vunpack.c.l.b16 %v201
    %v1110 = vunpack.c.h.b16 %v201
    %v1111 = vunpack.c.l.b16 %v202
    %v1112 = vunpack.c.h.b16 %v202
    %v1113 = vunpack.c.l.b16 %v203
    %v1114 = vunpack.c.h.b16 %v203
    %v1115 = vunpack.c.l.b16 %v204
    %v1116 = vunpack.c.h.b16 %v204
    %v1117 = vunpack.c.l.b16 %v205
    %v1118 = vunpack.c.h.b16 %v205
    %v1119 = vunpack.c.l.b16 %v206
    %v1120 = vunpack.c.h.b16 %v206
    %v1121 = vunpack.c.l.b16 %v207
    %v1122 = vunpack.c.h.b16 %v207
    %v1123 = vunpack.c.l.b16 %v208
    %v1124 = vunpack.c.h.b16 %v208
    %v1125 = vunpack.c.l.b16 %v209
    %v1126 = vunpack.c.h.b16 %v209
    %v1127 = vunpack.c.l.b16 %v210
    %v1128 = vunpack.c.h.b16 %v210
    %v1129 = vunpack.c.l.b16 %v211
    %v1130 = vunpack.c.h.b16 %v211
    %v1131 = vunpack.c.l.b16 %v212
    %v1132 = vunpack.c.h.b16 %v212
    %v1133 = vunpack.c.l.b16 %v213
    %v1134 = vunpack.c.h.b16 %v213
    %v1135 = vunpack.c.l.b16 %v214
    %v1136 = vunpack.c.h.b16 %v214
    %v1137 = vunpack.c.l.b16 %v215
    %v1138 = vunpack.c.h.b16 %v215
    %v1139 = vunpack.c.l.b16 %v216
    %v1140 = vunpack.c.h.b16 %v216
    %v1141 = vunpack.c.l.b16 %v217
    %v1142 = vunpack.c.h.b16 %v217
    %v1143 = vunpack.c.l.b16 %v218
    %v1144 = vunpack.c.h.b16 %v218
    %v1145 = vunpack.c.l.b16 %v219
    %v1146 = vunpack.c.h.b16 %v219
    %v1147 = vunpack.c.l.b16 %v220
    %v1148 = vunpack.c.h.b16 %v220
    %v1149 = vunpack.c.l.b16 %v221
    %v1150 = vunpack.c.h.b16 %v221
    %v1151 = vunpack.c.l.b16 %v222
    %v1152 = vunpack.c.h.b16 %v222
    %v1153 = vunpack.c.l.b16 %v223
    %v1154 = vunpack.c.h.b16 %v223
    %v1155 = vunpack.c.l.b16 %v224
    %v1156 = vunpack.c.h.b16 %v224
    %v1157 = vunpack.c.l.b16 %v225
    %v1158 = vunpack.c.h.b16 %v225
    %v1159 = vunpack.c.l.b16 %v226
    %v1160 = vunpack.c.h.b16 %v226
    %v1161 = vunpack.c.l.b16 %v227
    %v1162 = vunpack.c.h.b16 %v227
    %v1163 = vunpack.c.l.b16 %v228
    %v1164 = vunpack.c.h.b16 %v228
    %v1165 = vunpack.c.l.b16 %v229
    %v1166 = vunpack.c.h.b16 %v229
    %v1167 = vunpack.c.l.b16 %v230
    %v1168 = vunpack.c.h.b16 %v230
    %v1169 = vunpack.c.l.b16 %v231
    %v1170 = vunpack.c.h.b16 %v231
    %v1171 = vunpack.c.l.b16 %v232
    %v1172 = vunpack.c.h.b16 %v232
    %v1173 = vunpack.c.l.b16 %v233
    %v1174 = vunpack.c.h.b16 %v233
    %v1175 = vunpack.c.l.b16 %v234
    %v1176 = vunpack.c.h.b16 %v234
    %v1177 = vunpack.c.l.b16 %v235
    %v1178 = vunpack.c.h.b16 %v235
    %v1179 = vunpack.c.l.b16 %v236
    %v1180 = vunpack.c.h.b16 %v236
    %v1181 = vunpack.c.l.b16 %v237
    %v1182 = vunpack.c.h.b16 %v237
    %v1183 = vunpack.c.l.b16 %v238
    %v1184 = vunpack.c.h.b16 %v238
    %v1185 = vunpack.c.l.b16 %v239
    %v1186 = vunpack.c.h.b16 %v239
    %v1187 = vunpack.c.l.b16 %v240
    %v1188 = vunpack.c.h.b16 %v240
    %v1189 = vunpack.c.l.b16 %v241
    %v1190 = vunpack.c.h.b16 %v241
    %v1191 = vunpack.c.l.b16 %v242
    %v1192 = vunpack.c.h.b16 %v242
    %v1193 = vunpack.c.l.b16 %v243
    %v1194 = vunpack.c.h.b16 %v243
    %v1195 = vunpack.c.l.b16 %v244
    %v1196 = vunpack.c.h.b16 %v244
    %v1197 = vunpack.c.l.b16 %v245
    %v1198 = vunpack.c.h.b16 %v245
    %v1199 = vunpack.c.l.b16 %v246
    %v1200 = vunpack.c.h.b16 %v246
    %v1201 = vunpack.c.l.b16 %v247
    %v1202 = vunpack.c.h.b16 %v247
    %v1203 = vunpack.c.l.b16 %v248
    %v1204 = vunpack.c.h.b16 %v248
    %v1205 = vunpack.c.l.b16 %v249
    %v1206 = vunpack.c.h.b16 %v249
    %v1207 = vunpack.c.l.b16 %v250
    %v1208 = vunpack.c.h.b16 %v250
    %v1209 = vunpack.c.l.b16 %v251
    %v1210 = vunpack.c.h.b16 %v251
    %v1211 = vunpack.c.l.b16 %v252
    %v1212 = vunpack.c.h.b16 %v252
    %v1213 = vunpack.c.l.b16 %v253
    %v1214 = vunpack.c.h.b16 %v253
    %v1215 = vunpack.c.l.b16 %v254
    %v1216 = vunpack.c.h.b16 %v254
    %v1217 = vunpack.c.l.b16 %v255
    %v1218 = vunpack.c.h.b16 %v255
    %v1219 = vunpack.c.l.b16 %v256
    %v1220 = vunpack.c.h.b16 %v256
    %v1221 = vunpack.c.l.b16 %v257
    %v1222 = vunpack.c.h.b16 %v257
    %v1223 = vunpack.c.l.b16 %v258
    %v1224 = vunpack.c.h.b16 %v258
    %v1225 = vunpack.c.l.b16 %v259
    %v1226 = vunpack.c.h.b16 %v259
    %v1227 = vunpack.c.l.b16 %v260
    %v1228 = vunpack.c.h.b16 %v260
    %v1229 = vunpack.c.l.b16 %v261
    %v1230 = vunpack.c.h.b16 %v261
    %v1231 = vunpack.c.l.b16 %v262
    %v1232 = vunpack.c.h.b16 %v262
    %v1233 = vunpack.c.l.b16 %v263
    %v1234 = vunpack.c.h.b16 %v263
    %v1235 = vunpack.c.l.b16 %v264
    %v1236 = vunpack.c.h.b16 %v264
    %v1237 = vunpack.c.l.b16 %v265
    %v1238 = vunpack.c.h.b16 %v265
    %v1239 = vunpack.c.l.b16 %v266
    %v1240 = vunpack.c.h.b16 %v266
    %v1241 = vunpack.c.l.b16 %v267
    %v1242 = vunpack.c.h.b16 %v267
    %v1243 = vunpack.c.l.b16 %v268
    %v1244 = vunpack.c.h.b16 %v268
    %v1245 = vunpack.c.l.b16 %v269
    %v1246 = vunpack.c.h.b16 %v269
    %v1247 = vunpack.c.l.b16 %v270
    %v1248 = vunpack.c.h.b16 %v270
    %v1249 = vunpack.c.l.b16 %v271
    %v1250 = vunpack.c.h.b16 %v271
    %v1251 = vunpack.c.l.b16 %v272
    %v1252 = vunpack.c.h.b16 %v272
    %v1253 = vunpack.c.l.b16 %v273
    %v1254 = vunpack.c.h.b16 %v273
    %v1255 = vunpack.c.l.b16 %v274
    %v1256 = vunpack.c.h.b16 %v274
    %v1257 = vunpack.c.l.b16 %v275
    %v1258 = vunpack.c.h.b16 %v275
    %v1259 = vunpack.c.l.b16 %v276
    %v1260 = vunpack.c.h.b16 %v276
    %v1261 = vunpack.c.l.b16 %v277
    %v1262 = vunpack.c.h.b16 %v277
    %v1263 = vunpack.c.l.b16 %v278
    %v1264 = vunpack.c.h.b16 %v278
    %v1265 = vunpack.c.l.b16 %v279
    %v1266 = vunpack.c.h.b16 %v279
    %v1267 = vunpack.c.l.b16 %v280
    %v1268 = vunpack.c.h.b16 %v280
    %v1269 = vunpack.c.l.b16 %v281
    %v1270 = vunpack.c.h.b16 %v281
    %v1271 = vunpack.c.l.b16 %v282
    %v1272 = vunpack.c.h.b16 %v282
    %v1273 = vunpack.c.l.b16 %v283
    %v1274 = vunpack.c.h.b16 %v283
    %v1275 = vunpack.c.l.b16 %v284
    %v1276 = vunpack.c.h.b16 %v284
    %v1277 = vunpack.c.l.b16 %v285
    %v1278 = vunpack.c.h.b16 %v285
    %v1279 = vunpack.c.l.b16 %v286
    %v1280 = vunpack.c.h.b16 %v286
    %v1281 = vunpack.c.l.b16 %v287
    %v1282 = vunpack.c.h.b16 %v287
    %v1283 = vunpack.c.l.b16 %v288
    %v1284 = vunpack.c.h.b16 %v288
    %v1285 = vunpack.c.l.b16 %v289
    %v1286 = vunpack.c.h.b16 %v289
    %v1287 = vunpack.c.l.b16 %v290
    %v1288 = vunpack.c.h.b16 %v290
    %v1289 = vunpack.c.l.b16 %v291
    %v1290 = vunpack.c.h.b16 %v291
    %v1291 = vunpack.c.l.b16 %v292
    %v1292 = vunpack.c.h.b16 %v292
    %v1293 = vunpack.c.l.b16 %v293
    %v1294 = vunpack.c.h.b16 %v293
    %v1295 = vunpack.c.l.b16 %v294
    %v1296 = vunpack.c.h.b16 %v294
    %v1297 = vunpack.c.l.b16 %v295
    %v1298 = vunpack.c.h.b16 %v295
    %v1299 = vunpack.c.l.b16 %v296
    %v1300 = vunpack.c.h.b16 %v296
    %v1301 = vunpack.c.l.b16 %v297
    %v1302 = vunpack.c.h.b16 %v297
    %v1303 = vunpack.c.l.b16 %v298
    %v1304 = vunpack.c.h.b16 %v298
    %v1305 = vunpack.c.l.b16 %v299
    %v1306 = vunpack.c.h.b16 %v299
    %v1307 = vunpack.c.l.b16 %v300
    %v1308 = vunpack.c.h.b16 %v300
    %v1309 = vunpack.c.l.b16 %v301
    %v1310 = vunpack.c.h.b16 %v301
    %v1311 = vunpack.c.l.b16 %v302
    %v1312 = vunpack.c.h.b16 %v302
    %v1313 = vunpack.c.l.b16 %v303
    %v1314 = vunpack.c.h.b16 %v303
    %v1315 = vunpack.c.l.b16 %v304
    %v1316 = vunpack.c.h.b16 %v304
    %v1317 = vunpack.c.l.b16 %v305
    %v1318 = vunpack.c.h.b16 %v305
    %v1319 = vunpack.c.l.b16 %v306
    %v1320 = vunpack.c.h.b16 %v306
    %v1321 = vunpack.c.l.b16 %v307
    %v1322 = vunpack.c.h.b16 %v307
    %v1323 = vunpack.c.l.b16 %v308
    %v1324 = vunpack.c.h.b16 %v308
    %v1325 = vunpack.c.l.b16 %v309
    %v1326 = vunpack.c.h.b16 %v309
    %v1327 = vunpack.c.l.b16 %v310
    %v1328 = vunpack.c.h.b16 %v310
    %v1329 = vunpack.c.l.b16 %v311
    %v1330 = vunpack.c.h.b16 %v311
    %v1331 = vunpack.c.l.b16 %v312
    %v1332 = vunpack.c.h.b16 %v312
    %v1333 = vunpack.c.l.b16 %v313
    %v1334 = vunpack.c.h.b16 %v313
    %v1335 = vunpack.c.l.b16 %v314
    %v1336 = vunpack.c.h.b16 %v314
    %v1337 = vunpack.c.l.b16 %v315
    %v1338 = vunpack.c.h.b16 %v315
    %v1339 = vunpack.c.l.b16 %v316
    %v1340 = vunpack.c.h.b16 %v316
    %v1341 = vunpack.c.l.b16 %v317
    %v1342 = vunpack.c.h.b16 %v317
    %v1343 = vunpack.c.l.b16 %v318
    %v1344 = vunpack.c.h.b16 %v318
    %v1345 = vunpack.c.l.b16 %v319
    %v1346 = vunpack.c.h.b16 %v319
    %v1347 = vunpack.c.l.b16 %v320
    %v1348 = vunpack.c.h.b16 %v320
    %v1349 = vunpack.c.l.b16 %v321
    %v1350 = vunpack.c.h.b16 %v321
    %v1351 = vunpack.c.l.b16 %v322
    %v1352 = vunpack.c.h.b16 %v322
    %v1353 = vunpack.c.l.b16 %v323
    %v1354 = vunpack.c.h.b16 %v323
    %v1355 = vunpack.c.l.b16 %v324
    %v1356 = vunpack.c.h.b16 %v324
    %v1357 = vunpack.c.l.b16 %v325
    %v1358 = vunpack.c.h.b16 %v325
    %v1359 = vunpack.c.l.b16 %v326
    %v1360 = vunpack.c.h.b16 %v326
    %v1361 = vunpack.c.l.b16 %v327
    %v1362 = vunpack.c.h.b16 %v327
    %v1363 = vunpack.c.l.b16 %v328
    %v1364 = vunpack.c.h.b16 %v328
    %v1365 = vunpack.c.l.b16 %v329
    %v1366 = vunpack.c.h.b16 %v329
    %v1367 = vunpack.c.l.b16 %v330
    %v1368 = vunpack.c.h.b16 %v330
    %v1369 = vunpack.c.l.b16 %v331
    %v1370 = vunpack.c.h.b16 %v331
    %v1371 = vunpack.c.l.b16 %v332
    %v1372 = vunpack.c.h.b16 %v332
    %v1373 = vunpack.c.l.b16 %v333
    %v1374 = vunpack.c.h.b16 %v333
    %v1375 = vunpack.c.l.b16 %v334
    %v1376 = vunpack.c.h.b16 %v334
    %v1377 = vunpack.c.l.b16 %v335
    %v1378 = vunpack.c.h.b16 %v335
    %v1379 = vunpack.c.l.b16 %v336
    %v1380 = vunpack.c.h.b16 %v336
    %v1381 = vunpack.c.l.b16 %v337
    %v1382 = vunpack.c.h.b16 %v337
    %v1383 = vunpack.c.l.b16 %v338
    %v1384 = vunpack.c.h.b16 %v338
    %v1385 = vunpack.c.l.b16 %v339
    %v1386 = vunpack.c.h.b16 %v339
    %v1387 = vunpack.c.l.b16 %v340
    %v1388 = vunpack.c.h.b16 %v340
    %v1389 = vunpack.c.l.b16 %v341
    %v1390 = vunpack.c.h.b16 %v341
    %v1391 = vunpack.c.l.b16 %v342
    %v1392 = vunpack.c.h.b16 %v342
    %v1393 = vunpack.c.l.b16 %v343
    %v1394 = vunpack.c.h.b16 %v343
    %v1395 = vunpack.c.l.b16 %v344
    %v1396 = vunpack.c.h.b16 %v344
    %v1397 = vunpack.c.l.b16 %v345
    %v1398 = vunpack.c.h.b16 %v345
    %v1399 = vunpack.c.l.b16 %v346
    %v1400 = vunpack.c.h.b16 %v346
    %v1401 = vunpack.c.l.b16 %v347
    %v1402 = vunpack.c.h.b16 %v347
    %v1403 = vunpack.c.l.b16 %v348
    %v1404 = vunpack.c.h.b16 %v348
    %v1405 = vunpack.c.l.b16 %v349
    %v1406 = vunpack.c.h.b16 %v349
    %v1407 = vunpack.c.l.b16 %v350
    %v1408 = vunpack.c.h.b16 %v350
    %v1409 = vunpack.c.l.b16 %v351
    %v1410 = vunpack.c.h.b16 %v351
    %v1411 = vunpack.c.l.b16 %v352
    %v1412 = vunpack.c.h.b16 %v352
    %v1413 = vunpack.c.l.b16 %v353
    %v1414 = vunpack.c.h.b16 %v353
    %v1415 = vunpack.c.l.b16 %v354
    %v1416 = vunpack.c.h.b16 %v354
    %v1417 = vunpack.c.l.b16 %v355
    %v1418 = vunpack.c.h.b16 %v355
    %v1419 = vunpack.c.l.b16 %v356
    %v1420 = vunpack.c.h.b16 %v356
    %v1421 = vunpack.c.l.b16 %v357
    %v1422 = vunpack.c.h.b16 %v357
    %v1423 = vunpack.c.l.b16 %v358
    %v1424 = vunpack.c.h.b16 %v358
    %v1425 = vunpack.c.l.b16 %v359
    %v1426 = vunpack.c.h.b16 %v359
    %v1427 = vunpack.c.l.b16 %v360
    %v1428 = vunpack.c.h.b16 %v360
    %v1429 = vunpack.c.l.b16 %v361
    %v1430 = vunpack.c.h.b16 %v361
    %v1431 = vunpack.c.l.b16 %v362
    %v1432 = vunpack.c.h.b16 %v362
    %v1433 = vunpack.c.l.b16 %v363
    %v1434 = vunpack.c.h.b16 %v363
    %v1435 = vunpack.c.l.b16 %v364
    %v1436 = vunpack.c.h.b16 %v364
    %v1437 = vunpack.c.l.b16 %v365
    %v1438 = vunpack.c.h.b16 %v365
    %v1439 = vunpack.c.l.b16 %v366
    %v1440 = vunpack.c.h.b16 %v366
    %v1441 = vunpack.c.l.b16 %v367
    %v1442 = vunpack.c.h.b16 %v367
    %v1443 = vunpack.c.l.b16 %v368
    %v1444 = vunpack.c.h.b16 %v368
    %v1445 = vunpack.c.l.b16 %v369
    %v1446 = vunpack.c.h.b16 %v369
    %v1447 = vunpack.c.l.b16 %v370
    %v1448 = vunpack.c.h.b16 %v370
    %v1449 = vpack.c.b16 %v1069, %v1065
    %v1450 = vpack.c.b16 %v1070, %v1066
    %v1451 = vpack.c.b16 %v1071, %v1067
    %v1452 = vpack.c.b16 %v1072, %v1068
    %v1453 = vpack.c.b16 %v1077, %v1073
    %v1454 = vpack.c.b16 %v1078, %v1074
    %v1455 = vpack.c.b16 %v1079, %v1075
    %v1456 = vpack.c.b16 %v1080, %v1076
    %v1457 = vpack.c.b16 %v1085, %v1081
    %v1458 = vpack.c.b16 %v1086, %v1082
    %v1459 = vpack.c.b16 %v1087, %v1083
    %v1460 = vpack.c.b16 %v1088, %v1084
    %v1461 = vpack.c.b16 %v1093, %v1089
    %v1462 = vpack.c.b16 %v1094, %v1090
    %v1463 = vpack.c.b16 %v1095, %v1091
    %v1464 = vpack.c.b16 %v1096, %v1092
    %v1465 = vpack.c.b16 %v1101, %v1097
    %v1466 = vpack.c.b16 %v1102, %v1098
    %v1467 = vpack.c.b16 %v1103, %v1099
    %v1468 = vpack.c.b16 %v1104, %v1100
    %v1469 = vpack.c.b16 %v1109, %v1105
    %v1470 = vpack.c.b16 %v1110, %v1106
    %v1471 = vpack.c.b16 %v1111, %v1107
    %v1472 = vpack.c.b16 %v1112, %v1108
    %v1473 = vpack.c.b16 %v1117, %v1113
    %v1474 = vpack.c.b16 %v1118, %v1114
    %v1475 = vpack.c.b16 %v1119, %v1115
    %v1476 = vpack.c.b16 %v1120, %v1116
    %v1477 = vpack.c.b16 %v1125, %v1121
    %v1478 = vpack.c.b16 %v1126, %v1122
    %v1479 = vpack.c.b16 %v1127, %v1123
    %v1480 = vpack.c.b16 %v1128, %v1124
    %v1481 = vpack.c.b16 %v1133, %v1129
    %v1482 = vpack.c.b16 %v1134, %v1130
    %v1483 = vpack.c.b16 %v1135, %v1131
    %v1484 = vpack.c.b16 %v1136, %v1132
    %v1485 = vpack.c.b16 %v1141, %v1137
    %v1486 = vpack.c.b16 %v1142, %v1138
    %v1487 = vpack.c.b16 %v1143, %v1139
    %v1488 = vpack.c.b16 %v1144, %v1140
    %v1489 = vpack.c.b16 %v1149, %v1145
    %v1490 = vpack.c.b16 %v1150, %v1146
    %v1491 = vpack.c.b16 %v1151, %v1147
    %v1492 = vpack.c.b16 %v1152, %v1148
    %v1493 = vpack.c.b16 %v1157, %v1153
    %v1494 = vpack.c.b16 %v1158, %v1154
    %v1495 = vpack.c.b16 %v1159, %v1155
    %v1496 = vpack.c.b16 %v1160, %v1156
    %v1497 = vpack.c.b16 %v1165, %v1161
    %v1498 = vpack.c.b16 %v1166, %v1162
    %v1499 = vpack.c.b16 %v1167, %v1163
    %v1500 = vpack.c.b16 %v1168, %v1164
    %v1501 = vpack.c.b16 %v1173, %v1169
    %v1502 = vpack.c.b16 %v1174, %v1170
    %v1503 = vpack.c.b16 %v1175, %v1171
    %v1504 = vpack.c.b16 %v1176, %v1172
    %v1505 = vpack.c.b16 %v1181, %v1177
    %v1506 = vpack.c.b16 %v1182, %v1178
    %v1507 = vpack.c.b16 %v1183, %v1179
    %v1508 = vpack.c.b16 %v1184, %v1180
    %v1509 = vpack.c.b16 %v1189, %v1185
    %v1510 = vpack.c.b16 %v1190, %v1186
    %v1511 = vpack.c.b16 %v1191, %v1187
    %v1512 = vpack.c.b16 %v1192, %v1188
    %v1513 = vpack.c.b16 %v1197, %v1193
    %v1514 = vpack.c.b16 %v1198, %v1194
    %v1515 = vpack.c.b16 %v1199, %v1195
    %v1516 = vpack.c.b16 %v1200, %v1196
    %v1517 = vpack.c.b16 %v1205, %v1201
    %v1518 = vpack.c.b16 %v1206, %v1202
    %v1519 = vpack.c.b16 %v1207, %v1203
    %v1520 = vpack.c.b16 %v1208, %v1204
    %v1521 = vpack.c.b16 %v1213, %v1209
    %v1522 = vpack.c.b16 %v1214, %v1210
    %v1523 = vpack.c.b16 %v1215, %v1211
    %v1524 = vpack.c.b16 %v1216, %v1212
    %v1525 = vpack.c.b16 %v1221, %v1217
    %v1526 = vpack.c.b16 %v1222, %v1218
    %v1527 = vpack.c.b16 %v1223, %v1219
    %v1528 = vpack.c.b16 %v1224, %v1220
    %v1529 = vpack.c.b16 %v1229, %v1225
    %v1530 = vpack.c.b16 %v1230, %v1226
    %v1531 = vpack.c.b16 %v1231, %v1227
    %v1532 = vpack.c.b16 %v1232, %v1228
    %v1533 = vpack.c.b16 %v1237, %v1233
    %v1534 = vpack.c.b16 %v1238, %v1234
    %v1535 = vpack.c.b16 %v1239, %v1235
    %v1536 = vpack.c.b16 %v1240, %v1236
    %v1537 = vpack.c.b16 %v1245, %v1241
    %v1538 = vpack.c.b16 %v1246, %v1242
    %v1539 = vpack.c.b16 %v1247, %v1243
    %v1540 = vpack.c.b16 %v1248, %v1244
    %v1541 = vpack.c.b16 %v1253, %v1249
    %v1542 = vpack.c.b16 %v1254, %v1250
    %v1543 = vpack.c.b16 %v1255, %v1251
    %v1544 = vpack.c.b16 %v1256, %v1252
    %v1545 = vpack.c.b16 %v1261, %v1257
    %v1546 = vpack.c.b16 %v1262, %v1258
    %v1547 = vpack.c.b16 %v1263, %v1259
    %v1548 = vpack.c.b16 %v1264, %v1260
    %v1549 = vpack.c.b16 %v1269, %v1265
    %v1550 = vpack.c.b16 %v1270, %v1266
    %v1551 = vpack.c.b16 %v1271, %v1267
    %v1552 = vpack.c.b16 %v1272, %v1268
    %v1553 = vpack.c.b16 %v1277, %v1273
    %v1554 = vpack.c.b16 %v1278, %v1274
    %v1555 = vpack.c.b16 %v1279, %v1275
    %v1556 = vpack.c.b16 %v1280, %v1276
    %v1557 = vpack.c.b16 %v1285, %v1281
    %v1558 = vpack.c.b16 %v1286, %v1282
    %v1559 = vpack.c.b16 %v1287, %v1283
    %v1560 = vpack.c.b16 %v1288, %v1284
    %v1561 = vpack.c.b16 %v1293, %v1289
    %v1562 = vpack.c.b16 %v1294, %v1290
    %v1563 = vpack.c.b16 %v1295, %v1291
    %v1564 = vpack.c.b16 %v1296, %v1292
    %v1565 = vpack.c.b16 %v1301, %v1297
    %v1566 = vpack.c.b16 %v1302, %v1298
    %v1567 = vpack.c.b16 %v1303, %v1299
    %v1568 = vpack.c.b16 %v1304, %v1300
    %v1569 = vpack.c.b16 %v1309, %v1305
    %v1570 = vpack.c.b16 %v1310, %v1306
    %v1571 = vpack.c.b16 %v1311, %v1307
    %v1572 = vpack.c.b16 %v1312, %v1308
    %v1573 = vpack.c.b16 %v1317, %v1313
    %v1574 = vpack.c.b16 %v1318, %v1314
    %v1575 = vpack.c.b16 %v1319, %v1315
    %v1576 = vpack.c.b16 %v1320, %v1316
    %v1577 = vpack.c.b16 %v1325, %v1321
    %v1578 = vpack.c.b16 %v1326, %v1322
    %v1579 = vpack.c.b16 %v1327, %v1323
    %v1580 = vpack.c.b16 %v1328, %v1324
    %v1581 = vpack.c.b16 %v1333, %v1329
    %v1582 = vpack.c.b16 %v1334, %v1330
    %v1583 = vpack.c.b16 %v1335, %v1331
    %v1584 = vpack.c.b16 %v1336, %v1332
    %v1585 = vpack.c.b16 %v1341, %v1337
    %v1586 = vpack.c.b16 %v1342, %v1338
    %v1587 = vpack.c.b16 %v1343, %v1339
    %v1588 = vpack.c.b16 %v1344, %v1340
    %v1589 = vpack.c.b16 %v1349, %v1345
    %v1590 = vpack.c.b16 %v1350, %v1346
    %v1591 = vpack.c.b16 %v1351, %v1347
    %v1592 = vpack.c.b16 %v1352, %v1348
    %v1593 = vpack.c.b16 %v1357, %v1353
    %v1594 = vpack.c.b16 %v1358, %v1354
    %v1595 = vpack.c.b16 %v1359, %v1355
    %v1596 = vpack.c.b16 %v1360, %v1356
    %v1597 = vpack.c.b16 %v1365, %v1361
    %v1598 = vpack.c.b16 %v1366, %v1362
    %v1599 = vpack.c.b16 %v1367, %v1363
    %v1600 = vpack.c.b16 %v1368, %v1364
    %v1601 = vpack.c.b16 %v1373, %v1369
    %v1602 = vpack.c.b16 %v1374, %v1370
    %v1603 = vpack.c.b16 %v1375, %v1371
    %v1604 = vpack.c.b16 %v1376, %v1372
    %v1605 = vpack.c.b16 %v1381, %v1377
    %v1606 = vpack.c.b16 %v1382, %v1378
    %v1607 = vpack.c.b16 %v1383, %v1379
    %v1608 = vpack.c.b16 %v1384, %v1380
    %v1609 = vpack.c.b16 %v1389, %v1385
    %v1610 = vpack.c.b16 %v1390, %v1386
    %v1611 = vpack.c.b16 %v1391, %v1387
    %v1612 = vpack.c.b16 %v1392, %v1388
    %v1613 = vpack.c.b16 %v1397, %v1393
    %v1614 = vpack.c.b16 %v1398, %v1394
    %v1615 = vpack.c.b16 %v1399, %v1395
    %v1616 = vpack.c.b16 %v1400, %v1396
    %v1617 = vpack.c.b16 %v1405, %v1401
    %v1618 = vpack.c.b16 %v1406, %v1402
    %v1619 = vpack.c.b16 %v1407, %v1403
    %v1620 = vpack.c.b16 %v1408, %v1404
    %v1621 = vpack.c.b16 %v1413, %v1409
    %v1622 = vpack.c.b16 %v1414, %v1410
    %v1623 = vpack.c.b16 %v1415, %v1411
    %v1624 = vpack.c.b16 %v1416, %v1412
    %v1625 = vpack.c.b16 %v1421, %v1417
    %v1626 = vpack.c.b16 %v1422, %v1418
    %v1627 = vpack.c.b16 %v1423, %v1419
    %v1628 = vpack.c.b16 %v1424, %v1420
    %v1629 = vpack.c.b16 %v1429, %v1425
    %v1630 = vpack.c.b16 %v1430, %v1426
    %v1631 = vpack.c.b16 %v1431, %v1427
    %v1632 = vpack.c.b16 %v1432, %v1428
    %v1633 = vpack.c.b16 %v1437, %v1433
    %v1634 = vpack.c.b16 %v1438, %v1434
    %v1635 = vpack.c.b16 %v1439, %v1435
    %v1636 = vpack.c.b16 %v1440, %v1436
    %v1637 = vpack.c.b16 %v1445, %v1441
    %v1638 = vpack.c.b16 %v1446, %v1442
    %v1639 = vpack.c.b16 %v1447, %v1443
    %v1640 = vpack.c.b16 %v1448, %v1444
    %1833 = vmatprep.subr.bf16.mxu0 %v1450
    %1834 = vmatpush1.bf16.msra.mxu0 %v1449
    %1835 = vmatprep.subr.bf16.mxu0 %v1454
    %1836 = vmatpush1.bf16.msra.mxu0 %v1453
    %1837 = vmatprep.subr.bf16.mxu0 %v1458
    %1838 = vmatpush1.bf16.msra.mxu0 %v1457
    %1839 = vmatprep.subr.bf16.mxu0 %v1462
    %1840 = vmatpush1.bf16.msra.mxu0 %v1461
    %1841 = vmatprep.subr.bf16.mxu0 %v1466
    %1842 = vmatpush1.bf16.msra.mxu0 %v1465
    %1843 = vmatprep.subr.bf16.mxu0 %v1470
    %1844 = vmatpush1.bf16.msra.mxu0 %v1469
    %1845 = vmatprep.subr.bf16.mxu0 %v1474
    %1846 = vmatpush1.bf16.msra.mxu0 %v1473
    %1847 = vmatprep.subr.bf16.mxu0 %v1478
    %1848 = vmatpush1.bf16.msra.mxu0 %v1477
    %1849 = vmatprep.subr.bf16.mxu0 %v1482
    %1850 = vmatpush1.bf16.msra.mxu0 %v1481
    %1851 = vmatprep.subr.bf16.mxu0 %v1486
    %1852 = vmatpush1.bf16.msra.mxu0 %v1485
    %1853 = vmatprep.subr.bf16.mxu0 %v1490
    %1854 = vmatpush1.bf16.msra.mxu0 %v1489
    %1855 = vmatprep.subr.bf16.mxu0 %v1494
    %1856 = vmatpush1.bf16.msra.mxu0 %v1493
    %1857 = vmatprep.subr.bf16.mxu0 %v1498
    %1858 = vmatpush1.bf16.msra.mxu0 %v1497
    %1859 = vmatprep.subr.bf16.mxu0 %v1502
    %1860 = vmatpush1.bf16.msra.mxu0 %v1501
    %1861 = vmatprep.subr.bf16.mxu0 %v1506
    %1862 = vmatpush1.bf16.msra.mxu0 %v1505
    %1863 = vmatprep.subr.bf16.mxu0 %v1510
    %1864 = vmatpush1.bf16.msra.mxu0 %v1509
    %1865 = vmatprep.mubr.bf16.mxu0 %v682
    %1866 = vmatmul.mubr.bf16.gmra.mrb[0].mxu0 %v681
    %v1867 = vpop.f32.mrb[0].mxu0
    %v1868 = vadd.f32 %v376, %v1867
    %v1869 = vpop.f32.mrb[0].mxu0
    %v1870 = vadd.f32 %v380, %v1869
    %v1871 = vpop.f32.mrb[0].mxu0
    %v1872 = vadd.f32 %v376, %v1871
    %v1873 = vpop.f32.mrb[0].mxu0
    %v1874 = vadd.f32 %v380, %v1873
    %1875 = vmatprep.mubr.bf16.mxu0 %v688
    %1876 = vmatmul.mubr.bf16.gmra.mrb[0].mxu0 %v687
    %v1877 = vpop.f32.mrb[0].mxu0
    %v1878 = vadd.f32 %v376, %v1877
    %v1879 = vpop.f32.mrb[0].mxu0
    %v1880 = vadd.f32 %v380, %v1879
    %v1881 = vpop.f32.mrb[0].mxu0
    %v1882 = vadd.f32 %v376, %v1881
    %v1883 = vpop.f32.mrb[0].mxu0
    %v1884 = vadd.f32 %v380, %v1883
    %1885 = vmatprep.mubr.bf16.mxu0 %v694
    %1886 = vmatmul.mubr.bf16.gmra.mrb[0].mxu0 %v693
    %v1887 = vpop.f32.mrb[0].mxu0
    %v1888 = vadd.f32 %v376, %v1887
    %v1889 = vpop.f32.mrb[0].mxu0
    %v1890 = vadd.f32 %v380, %v1889
    %v1891 = vpop.f32.mrb[0].mxu0
    %v1892 = vadd.f32 %v376, %v1891
    %v1893 = vpop.f32.mrb[0].mxu0
    %v1894 = vadd.f32 %v380, %v1893
    %1895 = vmatprep.mubr.bf16.mxu0 %v700
    %1896 = vmatmul.mubr.bf16.gmra.mrb[0].mxu0 %v699
    %v1897 = vpop.f32.mrb[0].mxu0
    %v1898 = vadd.f32 %v376, %v1897
    %v1899 = vpop.f32.mrb[0].mxu0
    %v1900 = vadd.f32 %v380, %v1899
    %v1901 = vpop.f32.mrb[0].mxu0
    %v1902 = vadd.f32 %v376, %v1901
    %v1903 = vpop.f32.mrb[0].mxu0
    %v1904 = vadd.f32 %v380, %v1903
    %1905 = vmatprep.mubr.bf16.mxu0 %v706
    %1906 = vmatmul.mubr.bf16.gmra.mrb[0].mxu0 %v705
    %v1907 = vpop.f32.mrb[0].mxu0
    %v1908 = vadd.f32 %v376, %v1907
    %v1909 = vpop.f32.mrb[0].mxu0
    %v1910 = vadd.f32 %v380, %v1909
    %v1911 = vpop.f32.mrb[0].mxu0
    %v1912 = vadd.f32 %v376, %v1911
    %v1913 = vpop.f32.mrb[0].mxu0
    %v1914 = vadd.f32 %v380, %v1913
    %1915 = vmatprep.mubr.bf16.mxu0 %v712
    %1916 = vmatmul.mubr.bf16.gmra.mrb[0].mxu0 %v711
    %v1917 = vpop.f32.mrb[0].mxu0
    %v1918 = vadd.f32 %v376, %v1917
    %v1919 = vpop.f32.mrb[0].mxu0
    %v1920 = vadd.f32 %v380, %v1919
    %v1921 = vpop.f32.mrb[0].mxu0
    %v1922 = vadd.f32 %v376, %v1921
    %v1923 = vpop.f32.mrb[0].mxu0
    %v1924 = vadd.f32 %v380, %v1923
    %1925 = vmatprep.mubr.bf16.mxu0 %v718
    %1926 = vmatmul.mubr.bf16.gmra.mrb[0].mxu0 %v717
    %v1927 = vpop.f32.mrb[0].mxu0
    %v1928 = vadd.f32 %v376, %v1927
    %v1929 = vpop.f32.mrb[0].mxu0
    %v1930 = vadd.f32 %v380, %v1929
    %v1931 = vpop.f32.mrb[0].mxu0
    %v1932 = vadd.f32 %v376, %v1931
    %v1933 = vpop.f32.mrb[0].mxu0
    %v1934 = vadd.f32 %v380, %v1933
    %1935 = vmatprep.mubr.bf16.mxu0 %v724
    %1936 = vmatmul.mubr.bf16.gmra.mrb[0].mxu0 %v723
    %v1937 = vpop.f32.mrb[0].mxu0
    %v1938 = vadd.f32 %v376, %v1937
    %v1939 = vpop.f32.mrb[0].mxu0
    %v1940 = vadd.f32 %v380, %v1939
    %v1941 = vpop.f32.mrb[0].mxu0
    %v1942 = vadd.f32 %v376, %v1941
    %v1943 = vpop.f32.mrb[0].mxu0
    %v1944 = vadd.f32 %v380, %v1943
    %1945 = vmatprep.mubr.bf16.mxu0 %v730
    %1946 = vmatmul.mubr.bf16.gmra.mrb[0].mxu0 %v729
    %v1947 = vpop.f32.mrb[0].mxu0
    %v1948 = vadd.f32 %v376, %v1947
    %v1949 = vpop.f32.mrb[0].mxu0
    %v1950 = vadd.f32 %v380, %v1949
    %v1951 = vpop.f32.mrb[0].mxu0
    %v1952 = vadd.f32 %v376, %v1951
    %v1953 = vpop.f32.mrb[0].mxu0
    %v1954 = vadd.f32 %v380, %v1953
    %1955 = vmatprep.mubr.bf16.mxu0 %v736
    %1956 = vmatmul.mubr.bf16.gmra.mrb[0].mxu0 %v735
    %v1957 = vpop.f32.mrb[0].mxu0
    %v1958 = vadd.f32 %v376, %v1957
    %v1959 = vpop.f32.mrb[0].mxu0
    %v1960 = vadd.f32 %v380, %v1959
    %v1961 = vpop.f32.mrb[0].mxu0
    %v1962 = vadd.f32 %v376, %v1961
    %v1963 = vpop.f32.mrb[0].mxu0
    %v1964 = vadd.f32 %v380, %v1963
    %1965 = vmatprep.mubr.bf16.mxu0 %v742
    %1966 = vmatmul.mubr.bf16.gmra.mrb[0].mxu0 %v741
    %v1967 = vpop.f32.mrb[0].mxu0
    %v1968 = vadd.f32 %v376, %v1967
    %v1969 = vpop.f32.mrb[0].mxu0
    %v1970 = vadd.f32 %v380, %v1969
    %v1971 = vpop.f32.mrb[0].mxu0
    %v1972 = vadd.f32 %v376, %v1971
    %v1973 = vpop.f32.mrb[0].mxu0
    %v1974 = vadd.f32 %v380, %v1973
    %1975 = vmatprep.mubr.bf16.mxu0 %v748
    %1976 = vmatmul.mubr.bf16.gmra.mrb[0].mxu0 %v747
    %v1977 = vpop.f32.mrb[0].mxu0
    %v1978 = vadd.f32 %v376, %v1977
    %v1979 = vpop.f32.mrb[0].mxu0
    %v1980 = vadd.f32 %v380, %v1979
    %v1981 = vpop.f32.mrb[0].mxu0
    %v1982 = vadd.f32 %v376, %v1981
    %v1983 = vpop.f32.mrb[0].mxu0
    %v1984 = vadd.f32 %v380, %v1983
    %1985 = vmatprep.mubr.bf16.mxu0 %v754
    %1986 = vmatmul.mubr.bf16.gmra.mrb[0].mxu0 %v753
    %v1987 = vpop.f32.mrb[0].mxu0
    %v1988 = vadd.f32 %v376, %v1987
    %v1989 = vpop.f32.mrb[0].mxu0
    %v1990 = vadd.f32 %v380, %v1989
    %v1991 = vpop.f32.mrb[0].mxu0
    %v1992 = vadd.f32 %v376, %v1991
    %v1993 = vpop.f32.mrb[0].mxu0
    %v1994 = vadd.f32 %v380, %v1993
    %1995 = vmatprep.mubr.bf16.mxu0 %v760
    %1996 = vmatmul.mubr.bf16.gmra.mrb[0].mxu0 %v759
    %v1997 = vpop.f32.mrb[0].mxu0
    %v1998 = vadd.f32 %v376, %v1997
    %v1999 = vpop.f32.mrb[0].mxu0
    %v2000 = vadd.f32 %v380, %v1999
    %v2001 = vpop.f32.mrb[0].mxu0
    %v2002 = vadd.f32 %v376, %v2001
    %v2003 = vpop.f32.mrb[0].mxu0
    %v2004 = vadd.f32 %v380, %v2003
    %2005 = vmatprep.mubr.bf16.mxu0 %v766
    %2006 = vmatmul.mubr.bf16.gmra.mrb[0].mxu0 %v765
    %v2007 = vpop.f32.mrb[0].mxu0
    %v2008 = vadd.f32 %v376, %v2007
    %v2009 = vpop.f32.mrb[0].mxu0
    %v2010 = vadd.f32 %v380, %v2009
    %v2011 = vpop.f32.mrb[0].mxu0
    %v2012 = vadd.f32 %v376, %v2011
    %v2013 = vpop.f32.mrb[0].mxu0
    %v2014 = vadd.f32 %v380, %v2013
    %2015 = vmatprep.mubr.bf16.mxu0 %v772
    %2016 = vmatmul.mubr.bf16.gmra.mrb[0].mxu0 %v771
    %v2017 = vpop.f32.mrb[0].mxu0
    %v2018 = vadd.f32 %v376, %v2017
    %v2019 = vpop.f32.mrb[0].mxu0
    %v2020 = vadd.f32 %v380, %v2019
    %v2021 = vpop.f32.mrb[0].mxu0
    %v2022 = vadd.f32 %v376, %v2021
    %v2023 = vpop.f32.mrb[0].mxu0
    %v2024 = vadd.f32 %v380, %v2023
    %2025 = vdwg.mxu0
    %2026 = vmatprep.subr.bf16.mxu0 %v1514
    %2027 = vmatpush1.bf16.msra.mxu0 %v1513
    %2028 = vmatprep.subr.bf16.mxu0 %v1518
    %2029 = vmatpush1.bf16.msra.mxu0 %v1517
    %2030 = vmatprep.subr.bf16.mxu0 %v1522
    %2031 = vmatpush1.bf16.msra.mxu0 %v1521
    %2032 = vmatprep.subr.bf16.mxu0 %v1526
    %2033 = vmatpush1.bf16.msra.mxu0 %v1525
    %2034 = vmatprep.subr.bf16.mxu0 %v1530
    %2035 = vmatpush1.bf16.msra.mxu0 %v1529
    %2036 = vmatprep.subr.bf16.mxu0 %v1534
    %2037 = vmatpush1.bf16.msra.mxu0 %v1533
    %2038 = vmatprep.subr.bf16.mxu0 %v1538
    %2039 = vmatpush1.bf16.msra.mxu0 %v1537
    %2040 = vmatprep.subr.bf16.mxu0 %v1542
    %2041 = vmatpush1.bf16.msra.mxu0 %v1541
    %2042 = vmatprep.subr.bf16.mxu0 %v1546
    %2043 = vmatpush1.bf16.msra.mxu0 %v1545
    %2044 = vmatprep.subr.bf16.mxu0 %v1550
    %2045 = vmatpush1.bf16.msra.mxu0 %v1549
    %2046 = vmatprep.subr.bf16.mxu0 %v1554
    %2047 = vmatpush1.bf16.msra.mxu0 %v1553
    %2048 = vmatprep.subr.bf16.mxu0 %v1558
    %2049 = vmatpush1.bf16.msra.mxu0 %v1557
    %2050 = vmatprep.subr.bf16.mxu0 %v1562
    %2051 = vmatpush1.bf16.msra.mxu0 %v1561
    %2052 = vmatprep.subr.bf16.mxu0 %v1566
    %2053 = vmatpush1.bf16.msra.mxu0 %v1565
    %2054 = vmatprep.subr.bf16.mxu0 %v1570
    %2055 = vmatpush1.bf16.msra.mxu0 %v1569
    %2056 = vmatprep.subr.bf16.mxu0 %v1574
    %2057 = vmatpush1.bf16.msra.mxu0 %v1573
    %2058 = vmatprep.mubr.bf16.mxu0 %v684
    %2059 = vmatmul.mubr.bf16.gmra.mrb[0].mxu0 %v683
    %v2060 = vpop.f32.mrb[0].mxu0
    %v2061 = vadd.f32 %v1868, %v2060
    %v2062 = vpop.f32.mrb[0].mxu0
    %v2063 = vadd.f32 %v1870, %v2062
    %v2064 = vpop.f32.mrb[0].mxu0
    %v2065 = vadd.f32 %v1872, %v2064
    %v2066 = vpop.f32.mrb[0].mxu0
    %v2067 = vadd.f32 %v1874, %v2066
    %2068 = vmatprep.mubr.bf16.mxu0 %v690
    %2069 = vmatmul.mubr.bf16.gmra.mrb[0].mxu0 %v689
    %v2070 = vpop.f32.mrb[0].mxu0
    %v2071 = vadd.f32 %v1878, %v2070
    %v2072 = vpop.f32.mrb[0].mxu0
    %v2073 = vadd.f32 %v1880, %v2072
    %v2074 = vpop.f32.mrb[0].mxu0
    %v2075 = vadd.f32 %v1882, %v2074
    %v2076 = vpop.f32.mrb[0].mxu0
    %v2077 = vadd.f32 %v1884, %v2076
    %2078 = vmatprep.mubr.bf16.mxu0 %v696
    %2079 = vmatmul.mubr.bf16.gmra.mrb[0].mxu0 %v695
    %v2080 = vpop.f32.mrb[0].mxu0
    %v2081 = vadd.f32 %v1888, %v2080
    %v2082 = vpop.f32.mrb[0].mxu0
    %v2083 = vadd.f32 %v1890, %v2082
    %v2084 = vpop.f32.mrb[0].mxu0
    %v2085 = vadd.f32 %v1892, %v2084
    %v2086 = vpop.f32.mrb[0].mxu0
    %v2087 = vadd.f32 %v1894, %v2086
    %2088 = vmatprep.mubr.bf16.mxu0 %v702
    %2089 = vmatmul.mubr.bf16.gmra.mrb[0].mxu0 %v701
    %v2090 = vpop.f32.mrb[0].mxu0
    %v2091 = vadd.f32 %v1898, %v2090
    %v2092 = vpop.f32.mrb[0].mxu0
    %v2093 = vadd.f32 %v1900, %v2092
    %v2094 = vpop.f32.mrb[0].mxu0
    %v2095 = vadd.f32 %v1902, %v2094
    %v2096 = vpop.f32.mrb[0].mxu0
    %v2097 = vadd.f32 %v1904, %v2096
    %2098 = vmatprep.mubr.bf16.mxu0 %v708
    %2099 = vmatmul.mubr.bf16.gmra.mrb[0].mxu0 %v707
    %v2100 = vpop.f32.mrb[0].mxu0
    %v2101 = vadd.f32 %v1908, %v2100
    %v2102 = vpop.f32.mrb[0].mxu0
    %v2103 = vadd.f32 %v1910, %v2102
    %v2104 = vpop.f32.mrb[0].mxu0
    %v2105 = vadd.f32 %v1912, %v2104
    %v2106 = vpop.f32.mrb[0].mxu0
    %v2107 = vadd.f32 %v1914, %v2106
    %2108 = vmatprep.mubr.bf16.mxu0 %v714
    %2109 = vmatmul.mubr.bf16.gmra.mrb[0].mxu0 %v713
    %v2110 = vpop.f32.mrb[0].mxu0
    %v2111 = vadd.f32 %v1918, %v2110
    %v2112 = vpop.f32.mrb[0].mxu0
    %v2113 = vadd.f32 %v1920, %v2112
    %v2114 = vpop.f32.mrb[0].mxu0
    %v2115 = vadd.f32 %v1922, %v2114
    %v2116 = vpop.f32.mrb[0].mxu0
    %v2117 = vadd.f32 %v1924, %v2116
    %2118 = vmatprep.mubr.bf16.mxu0 %v720
    %2119 = vmatmul.mubr.bf16.gmra.mrb[0].mxu0 %v719
    %v2120 = vpop.f32.mrb[0].mxu0
    %v2121 = vadd.f32 %v1928, %v2120
    %v2122 = vpop.f32.mrb[0].mxu0
    %v2123 = vadd.f32 %v1930, %v2122
    %v2124 = vpop.f32.mrb[0].mxu0
    %v2125 = vadd.f32 %v1932, %v2124
    %v2126 = vpop.f32.mrb[0].mxu0
    %v2127 = vadd.f32 %v1934, %v2126
    %2128 = vmatprep.mubr.bf16.mxu0 %v726
    %2129 = vmatmul.mubr.bf16.gmra.mrb[0].mxu0 %v725
    %v2130 = vpop.f32.mrb[0].mxu0
    %v2131 = vadd.f32 %v1938, %v2130
    %v2132 = vpop.f32.mrb[0].mxu0
    %v2133 = vadd.f32 %v1940, %v2132
    %v2134 = vpop.f32.mrb[0].mxu0
    %v2135 = vadd.f32 %v1942, %v2134
    %v2136 = vpop.f32.mrb[0].mxu0
    %v2137 = vadd.f32 %v1944, %v2136
    %2138 = vmatprep.mubr.bf16.mxu0 %v732
    %2139 = vmatmul.mubr.bf16.gmra.mrb[0].mxu0 %v731
    %v2140 = vpop.f32.mrb[0].mxu0
    %v2141 = vadd.f32 %v1948, %v2140
    %v2142 = vpop.f32.mrb[0].mxu0
    %v2143 = vadd.f32 %v1950, %v2142
    %v2144 = vpop.f32.mrb[0].mxu0
    %v2145 = vadd.f32 %v1952, %v2144
    %v2146 = vpop.f32.mrb[0].mxu0
    %v2147 = vadd.f32 %v1954, %v2146
    %2148 = vmatprep.mubr.bf16.mxu0 %v738
    %2149 = vmatmul.mubr.bf16.gmra.mrb[0].mxu0 %v737
    %v2150 = vpop.f32.mrb[0].mxu0
    %v2151 = vadd.f32 %v1958, %v2150
    %v2152 = vpop.f32.mrb[0].mxu0
    %v2153 = vadd.f32 %v1960, %v2152
    %v2154 = vpop.f32.mrb[0].mxu0
    %v2155 = vadd.f32 %v1962, %v2154
    %v2156 = vpop.f32.mrb[0].mxu0
    %v2157 = vadd.f32 %v1964, %v2156
    %2158 = vmatprep.mubr.bf16.mxu0 %v744
    %2159 = vmatmul.mubr.bf16.gmra.mrb[0].mxu0 %v743
    %v2160 = vpop.f32.mrb[0].mxu0
    %v2161 = vadd.f32 %v1968, %v2160
    %v2162 = vpop.f32.mrb[0].mxu0
    %v2163 = vadd.f32 %v1970, %v2162
    %v2164 = vpop.f32.mrb[0].mxu0
    %v2165 = vadd.f32 %v1972, %v2164
    %v2166 = vpop.f32.mrb[0].mxu0
    %v2167 = vadd.f32 %v1974, %v2166
    %2168 = vmatprep.mubr.bf16.mxu0 %v750
    %2169 = vmatmul.mubr.bf16.gmra.mrb[0].mxu0 %v749
    %v2170 = vpop.f32.mrb[0].mxu0
    %v2171 = vadd.f32 %v1978, %v2170
    %v2172 = vpop.f32.mrb[0].mxu0
    %v2173 = vadd.f32 %v1980, %v2172
    %v2174 = vpop.f32.mrb[0].mxu0
    %v2175 = vadd.f32 %v1982, %v2174
    %v2176 = vpop.f32.mrb[0].mxu0
    %v2177 = vadd.f32 %v1984, %v2176
    %2178 = vmatprep.mubr.bf16.mxu0 %v756
    %2179 = vmatmul.mubr.bf16.gmra.mrb[0].mxu0 %v755
    %v2180 = vpop.f32.mrb[0].mxu0
    %v2181 = vadd.f32 %v1988, %v2180
    %v2182 = vpop.f32.mrb[0].mxu0
    %v2183 = vadd.f32 %v1990, %v2182
    %v2184 = vpop.f32.mrb[0].mxu0
    %v2185 = vadd.f32 %v1992, %v2184
    %v2186 = vpop.f32.mrb[0].mxu0
    %v2187 = vadd.f32 %v1994, %v2186
    %2188 = vmatprep.mubr.bf16.mxu0 %v762
    %2189 = vmatmul.mubr.bf16.gmra.mrb[0].mxu0 %v761
    %v2190 = vpop.f32.mrb[0].mxu0
    %v2191 = vadd.f32 %v1998, %v2190
    %v2192 = vpop.f32.mrb[0].mxu0
    %v2193 = vadd.f32 %v2000, %v2192
    %v2194 = vpop.f32.mrb[0].mxu0
    %v2195 = vadd.f32 %v2002, %v2194
    %v2196 = vpop.f32.mrb[0].mxu0
    %v2197 = vadd.f32 %v2004, %v2196
    %2198 = vmatprep.mubr.bf16.mxu0 %v768
    %2199 = vmatmul.mubr.bf16.gmra.mrb[0].mxu0 %v767
    %v2200 = vpop.f32.mrb[0].mxu0
    %v2201 = vadd.f32 %v2008, %v2200
    %v2202 = vpop.f32.mrb[0].mxu0
    %v2203 = vadd.f32 %v2010, %v2202
    %v2204 = vpop.f32.mrb[0].mxu0
    %v2205 = vadd.f32 %v2012, %v2204
    %v2206 = vpop.f32.mrb[0].mxu0
    %v2207 = vadd.f32 %v2014, %v2206
    %2208 = vmatprep.mubr.bf16.mxu0 %v774
    %2209 = vmatmul.mubr.bf16.gmra.mrb[0].mxu0 %v773
    %v2210 = vpop.f32.mrb[0].mxu0
    %v2211 = vadd.f32 %v2018, %v2210
    %v2212 = vpop.f32.mrb[0].mxu0
    %v2213 = vadd.f32 %v2020, %v2212
    %v2214 = vpop.f32.mrb[0].mxu0
    %v2215 = vadd.f32 %v2022, %v2214
    %v2216 = vpop.f32.mrb[0].mxu0
    %v2217 = vadd.f32 %v2024, %v2216
    %2218 = vdwg.mxu0
    %2219 = vmatprep.subr.bf16.mxu0 %v1578
    %2220 = vmatpush1.bf16.msra.mxu0 %v1577
    %2221 = vmatprep.subr.bf16.mxu0 %v1582
    %2222 = vmatpush1.bf16.msra.mxu0 %v1581
    %2223 = vmatprep.subr.bf16.mxu0 %v1586
    %2224 = vmatpush1.bf16.msra.mxu0 %v1585
    %2225 = vmatprep.subr.bf16.mxu0 %v1590
    %2226 = vmatpush1.bf16.msra.mxu0 %v1589
    %2227 = vmatprep.subr.bf16.mxu0 %v1594
    %2228 = vmatpush1.bf16.msra.mxu0 %v1593
    %2229 = vmatprep.subr.bf16.mxu0 %v1598
    %2230 = vmatpush1.bf16.msra.mxu0 %v1597
    %2231 = vmatprep.subr.bf16.mxu0 %v1602
    %2232 = vmatpush1.bf16.msra.mxu0 %v1601
    %2233 = vmatprep.subr.bf16.mxu0 %v1606
    %2234 = vmatpush1.bf16.msra.mxu0 %v1605
    %2235 = vmatprep.subr.bf16.mxu0 %v1610
    %2236 = vmatpush1.bf16.msra.mxu0 %v1609
    %2237 = vmatprep.subr.bf16.mxu0 %v1614
    %2238 = vmatpush1.bf16.msra.mxu0 %v1613
    %2239 = vmatprep.subr.bf16.mxu0 %v1618
    %2240 = vmatpush1.bf16.msra.mxu0 %v1617
    %2241 = vmatprep.subr.bf16.mxu0 %v1622
    %2242 = vmatpush1.bf16.msra.mxu0 %v1621
    %2243 = vmatprep.subr.bf16.mxu0 %v1626
    %2244 = vmatpush1.bf16.msra.mxu0 %v1625
    %2245 = vmatprep.subr.bf16.mxu0 %v1630
    %2246 = vmatpush1.bf16.msra.mxu0 %v1629
    %2247 = vmatprep.subr.bf16.mxu0 %v1634
    %2248 = vmatpush1.bf16.msra.mxu0 %v1633
    %2249 = vmatprep.subr.bf16.mxu0 %v1638
    %2250 = vmatpush1.bf16.msra.mxu0 %v1637
    %2251 = vmatprep.mubr.bf16.mxu0 %v686
    %2252 = vmatmul.mubr.bf16.gmra.mrb[0].mxu0 %v685
    %v2253 = vpop.f32.mrb[0].mxu0
    %v2254 = vadd.f32 %v2061, %v2253
    %v2255 = vpop.f32.mrb[0].mxu0
    %v2256 = vadd.f32 %v2063, %v2255
    %v2257 = vpop.f32.mrb[0].mxu0
    %v2258 = vadd.f32 %v2065, %v2257
    %v2259 = vpop.f32.mrb[0].mxu0
    %v2260 = vadd.f32 %v2067, %v2259
    %2261 = vmatprep.mubr.bf16.mxu0 %v692
    %2262 = vmatmul.mubr.bf16.gmra.mrb[0].mxu0 %v691
    %v2263 = vpop.f32.mrb[0].mxu0
    %v2264 = vadd.f32 %v2071, %v2263
    %v2265 = vpop.f32.mrb[0].mxu0
    %v2266 = vadd.f32 %v2073, %v2265
    %v2267 = vpop.f32.mrb[0].mxu0
    %v2268 = vadd.f32 %v2075, %v2267
    %v2269 = vpop.f32.mrb[0].mxu0
    %v2270 = vadd.f32 %v2077, %v2269
    %2271 = vmatprep.mubr.bf16.mxu0 %v698
    %2272 = vmatmul.mubr.bf16.gmra.mrb[0].mxu0 %v697
    %v2273 = vpop.f32.mrb[0].mxu0
    %v2274 = vadd.f32 %v2081, %v2273
    %v2275 = vpop.f32.mrb[0].mxu0
    %v2276 = vadd.f32 %v2083, %v2275
    %v2277 = vpop.f32.mrb[0].mxu0
    %v2278 = vadd.f32 %v2085, %v2277
    %v2279 = vpop.f32.mrb[0].mxu0
    %v2280 = vadd.f32 %v2087, %v2279
    %2281 = vmatprep.mubr.bf16.mxu0 %v704
    %2282 = vmatmul.mubr.bf16.gmra.mrb[0].mxu0 %v703
    %v2283 = vpop.f32.mrb[0].mxu0
    %v2284 = vadd.f32 %v2091, %v2283
    %v2285 = vpop.f32.mrb[0].mxu0
    %v2286 = vadd.f32 %v2093, %v2285
    %v2287 = vpop.f32.mrb[0].mxu0
    %v2288 = vadd.f32 %v2095, %v2287
    %v2289 = vpop.f32.mrb[0].mxu0
    %v2290 = vadd.f32 %v2097, %v2289
    %2291 = vmatprep.mubr.bf16.mxu0 %v710
    %2292 = vmatmul.mubr.bf16.gmra.mrb[0].mxu0 %v709
    %v2293 = vpop.f32.mrb[0].mxu0
    %v2294 = vadd.f32 %v2101, %v2293
    %v2295 = vpop.f32.mrb[0].mxu0
    %v2296 = vadd.f32 %v2103, %v2295
    %v2297 = vpop.f32.mrb[0].mxu0
    %v2298 = vadd.f32 %v2105, %v2297
    %v2299 = vpop.f32.mrb[0].mxu0
    %v2300 = vadd.f32 %v2107, %v2299
    %2301 = vmatprep.mubr.bf16.mxu0 %v716
    %2302 = vmatmul.mubr.bf16.gmra.mrb[0].mxu0 %v715
    %v2303 = vpop.f32.mrb[0].mxu0
    %v2304 = vadd.f32 %v2111, %v2303
    %v2305 = vpop.f32.mrb[0].mxu0
    %v2306 = vadd.f32 %v2113, %v2305
    %v2307 = vpop.f32.mrb[0].mxu0
    %v2308 = vadd.f32 %v2115, %v2307
    %v2309 = vpop.f32.mrb[0].mxu0
    %v2310 = vadd.f32 %v2117, %v2309
    %2311 = vmatprep.mubr.bf16.mxu0 %v722
    %2312 = vmatmul.mubr.bf16.gmra.mrb[0].mxu0 %v721
    %v2313 = vpop.f32.mrb[0].mxu0
    %v2314 = vadd.f32 %v2121, %v2313
    %v2315 = vpop.f32.mrb[0].mxu0
    %v2316 = vadd.f32 %v2123, %v2315
    %v2317 = vpop.f32.mrb[0].mxu0
    %v2318 = vadd.f32 %v2125, %v2317
    %v2319 = vpop.f32.mrb[0].mxu0
    %v2320 = vadd.f32 %v2127, %v2319
    %2321 = vmatprep.mubr.bf16.mxu0 %v728
    %2322 = vmatmul.mubr.bf16.gmra.mrb[0].mxu0 %v727
    %v2323 = vpop.f32.mrb[0].mxu0
    %v2324 = vadd.f32 %v2131, %v2323
    %v2325 = vpop.f32.mrb[0].mxu0
    %v2326 = vadd.f32 %v2133, %v2325
    %v2327 = vpop.f32.mrb[0].mxu0
    %v2328 = vadd.f32 %v2135, %v2327
    %v2329 = vpop.f32.mrb[0].mxu0
    %v2330 = vadd.f32 %v2137, %v2329
    %2331 = vmatprep.mubr.bf16.mxu0 %v734
    %2332 = vmatmul.mubr.bf16.gmra.mrb[0].mxu0 %v733
    %v2333 = vpop.f32.mrb[0].mxu0
    %v2334 = vadd.f32 %v2141, %v2333
    %v2335 = vpop.f32.mrb[0].mxu0
    %v2336 = vadd.f32 %v2143, %v2335
    %v2337 = vpop.f32.mrb[0].mxu0
    %v2338 = vadd.f32 %v2145, %v2337
    %v2339 = vpop.f32.mrb[0].mxu0
    %v2340 = vadd.f32 %v2147, %v2339
    %2341 = vmatprep.mubr.bf16.mxu0 %v740
    %2342 = vmatmul.mubr.bf16.gmra.mrb[0].mxu0 %v739
    %v2343 = vpop.f32.mrb[0].mxu0
    %v2344 = vadd.f32 %v2151, %v2343
    %v2345 = vpop.f32.mrb[0].mxu0
    %v2346 = vadd.f32 %v2153, %v2345
    %v2347 = vpop.f32.mrb[0].mxu0
    %v2348 = vadd.f32 %v2155, %v2347
    %v2349 = vpop.f32.mrb[0].mxu0
    %v2350 = vadd.f32 %v2157, %v2349
    %2351 = vmatprep.mubr.bf16.mxu0 %v746
    %2352 = vmatmul.mubr.bf16.gmra.mrb[0].mxu0 %v745
    %v2353 = vpop.f32.mrb[0].mxu0
    %v2354 = vadd.f32 %v2161, %v2353
    %v2355 = vpop.f32.mrb[0].mxu0
    %v2356 = vadd.f32 %v2163, %v2355
    %v2357 = vpop.f32.mrb[0].mxu0
    %v2358 = vadd.f32 %v2165, %v2357
    %v2359 = vpop.f32.mrb[0].mxu0
    %v2360 = vadd.f32 %v2167, %v2359
    %2361 = vmatprep.mubr.bf16.mxu0 %v752
    %2362 = vmatmul.mubr.bf16.gmra.mrb[0].mxu0 %v751
    %v2363 = vpop.f32.mrb[0].mxu0
    %v2364 = vadd.f32 %v2171, %v2363
    %v2365 = vpop.f32.mrb[0].mxu0
    %v2366 = vadd.f32 %v2173, %v2365
    %v2367 = vpop.f32.mrb[0].mxu0
    %v2368 = vadd.f32 %v2175, %v2367
    %v2369 = vpop.f32.mrb[0].mxu0
    %v2370 = vadd.f32 %v2177, %v2369
    %2371 = vmatprep.mubr.bf16.mxu0 %v758
    %2372 = vmatmul.mubr.bf16.gmra.mrb[0].mxu0 %v757
    %v2373 = vpop.f32.mrb[0].mxu0
    %v2374 = vadd.f32 %v2181, %v2373
    %v2375 = vpop.f32.mrb[0].mxu0
    %v2376 = vadd.f32 %v2183, %v2375
    %v2377 = vpop.f32.mrb[0].mxu0
    %v2378 = vadd.f32 %v2185, %v2377
    %v2379 = vpop.f32.mrb[0].mxu0
    %v2380 = vadd.f32 %v2187, %v2379
    %2381 = vmatprep.mubr.bf16.mxu0 %v764
    %2382 = vmatmul.mubr.bf16.gmra.mrb[0].mxu0 %v763
    %v2383 = vpop.f32.mrb[0].mxu0
    %v2384 = vadd.f32 %v2191, %v2383
    %v2385 = vpop.f32.mrb[0].mxu0
    %v2386 = vadd.f32 %v2193, %v2385
    %v2387 = vpop.f32.mrb[0].mxu0
    %v2388 = vadd.f32 %v2195, %v2387
    %v2389 = vpop.f32.mrb[0].mxu0
    %v2390 = vadd.f32 %v2197, %v2389
    %2391 = vmatprep.mubr.bf16.mxu0 %v770
    %2392 = vmatmul.mubr.bf16.gmra.mrb[0].mxu0 %v769
    %v2393 = vpop.f32.mrb[0].mxu0
    %v2394 = vadd.f32 %v2201, %v2393
    %v2395 = vpop.f32.mrb[0].mxu0
    %v2396 = vadd.f32 %v2203, %v2395
    %v2397 = vpop.f32.mrb[0].mxu0
    %v2398 = vadd.f32 %v2205, %v2397
    %v2399 = vpop.f32.mrb[0].mxu0
    %v2400 = vadd.f32 %v2207, %v2399
    %2401 = vmatprep.mubr.bf16.mxu0 %v776
    %2402 = vmatmul.mubr.bf16.gmra.mrb[0].mxu0 %v775
    %v2403 = vpop.f32.mrb[0].mxu0
    %v2404 = vadd.f32 %v2211, %v2403
    %v2405 = vpop.f32.mrb[0].mxu0
    %v2406 = vadd.f32 %v2213, %v2405
    %v2407 = vpop.f32.mrb[0].mxu0
    %v2408 = vadd.f32 %v2215, %v2407
    %v2409 = vpop.f32.mrb[0].mxu0
    %v2410 = vadd.f32 %v2217, %v2409
    %2411 = vdwg.mxu0
    %2412 = vmatprep.subr.bf16.mxu0 %v1452
    %2413 = vmatpush1.bf16.msra.mxu0 %v1451
    %2414 = vmatprep.subr.bf16.mxu0 %v1456
    %2415 = vmatpush1.bf16.msra.mxu0 %v1455
    %2416 = vmatprep.subr.bf16.mxu0 %v1460
    %2417 = vmatpush1.bf16.msra.mxu0 %v1459
    %2418 = vmatprep.subr.bf16.mxu0 %v1464
    %2419 = vmatpush1.bf16.msra.mxu0 %v1463
    %2420 = vmatprep.subr.bf16.mxu0 %v1468
    %2421 = vmatpush1.bf16.msra.mxu0 %v1467
    %2422 = vmatprep.subr.bf16.mxu0 %v1472
    %2423 = vmatpush1.bf16.msra.mxu0 %v1471
    %2424 = vmatprep.subr.bf16.mxu0 %v1476
    %2425 = vmatpush1.bf16.msra.mxu0 %v1475
    %2426 = vmatprep.subr.bf16.mxu0 %v1480
    %2427 = vmatpush1.bf16.msra.mxu0 %v1479
    %2428 = vmatprep.subr.bf16.mxu0 %v1484
    %2429 = vmatpush1.bf16.msra.mxu0 %v1483
    %2430 = vmatprep.subr.bf16.mxu0 %v1488
    %2431 = vmatpush1.bf16.msra.mxu0 %v1487
    %2432 = vmatprep.subr.bf16.mxu0 %v1492
    %2433 = vmatpush1.bf16.msra.mxu0 %v1491
    %2434 = vmatprep.subr.bf16.mxu0 %v1496
    %2435 = vmatpush1.bf16.msra.mxu0 %v1495
    %2436 = vmatprep.subr.bf16.mxu0 %v1500
    %2437 = vmatpush1.bf16.msra.mxu0 %v1499
    %2438 = vmatprep.subr.bf16.mxu0 %v1504
    %2439 = vmatpush1.bf16.msra.mxu0 %v1503
    %2440 = vmatprep.subr.bf16.mxu0 %v1508
    %2441 = vmatpush1.bf16.msra.mxu0 %v1507
    %2442 = vmatprep.subr.bf16.mxu0 %v1512
    %2443 = vmatpush1.bf16.msra.mxu0 %v1511
    %2444 = vmatprep.mubr.bf16.mxu0 %v682
    %2445 = vmatmul.mubr.bf16.gmra.mrb[0].mxu0 %v681
    %v2446 = vpop.f32.mrb[0].mxu0
    %v2447 = vadd.f32 %v384, %v2446
    %v2448 = vpop.f32.mrb[0].mxu0
    %v2449 = vadd.f32 %v388, %v2448
    %v2450 = vpop.f32.mrb[0].mxu0
    %v2451 = vadd.f32 %v384, %v2450
    %v2452 = vpop.f32.mrb[0].mxu0
    %v2453 = vadd.f32 %v388, %v2452
    %2454 = vmatprep.mubr.bf16.mxu0 %v688
    %2455 = vmatmul.mubr.bf16.gmra.mrb[0].mxu0 %v687
    %v2456 = vpop.f32.mrb[0].mxu0
    %v2457 = vadd.f32 %v384, %v2456
    %v2458 = vpop.f32.mrb[0].mxu0
    %v2459 = vadd.f32 %v388, %v2458
    %v2460 = vpop.f32.mrb[0].mxu0
    %v2461 = vadd.f32 %v384, %v2460
    %v2462 = vpop.f32.mrb[0].mxu0
    %v2463 = vadd.f32 %v388, %v2462
    %2464 = vmatprep.mubr.bf16.mxu0 %v694
    %2465 = vmatmul.mubr.bf16.gmra.mrb[0].mxu0 %v693
    %v2466 = vpop.f32.mrb[0].mxu0
    %v2467 = vadd.f32 %v384, %v2466
    %v2468 = vpop.f32.mrb[0].mxu0
    %v2469 = vadd.f32 %v388, %v2468
    %v2470 = vpop.f32.mrb[0].mxu0
    %v2471 = vadd.f32 %v384, %v2470
    %v2472 = vpop.f32.mrb[0].mxu0
    %v2473 = vadd.f32 %v388, %v2472
    %2474 = vmatprep.mubr.bf16.mxu0 %v700
    %2475 = vmatmul.mubr.bf16.gmra.mrb[0].mxu0 %v699
    %v2476 = vpop.f32.mrb[0].mxu0
    %v2477 = vadd.f32 %v384, %v2476
    %v2478 = vpop.f32.mrb[0].mxu0
    %v2479 = vadd.f32 %v388, %v2478
    %v2480 = vpop.f32.mrb[0].mxu0
    %v2481 = vadd.f32 %v384, %v2480
    %v2482 = vpop.f32.mrb[0].mxu0
    %v2483 = vadd.f32 %v388, %v2482
    %2484 = vmatprep.mubr.bf16.mxu0 %v706
    %2485 = vmatmul.mubr.bf16.gmra.mrb[0].mxu0 %v705
    %v2486 = vpop.f32.mrb[0].mxu0
    %v2487 = vadd.f32 %v384, %v2486
    %v2488 = vpop.f32.mrb[0].mxu0
    %v2489 = vadd.f32 %v388, %v2488
    %v2490 = vpop.f32.mrb[0].mxu0
    %v2491 = vadd.f32 %v384, %v2490
    %v2492 = vpop.f32.mrb[0].mxu0
    %v2493 = vadd.f32 %v388, %v2492
    %2494 = vmatprep.mubr.bf16.mxu0 %v712
    %2495 = vmatmul.mubr.bf16.gmra.mrb[0].mxu0 %v711
    %v2496 = vpop.f32.mrb[0].mxu0
    %v2497 = vadd.f32 %v384, %v2496
    %v2498 = vpop.f32.mrb[0].mxu0
    %v2499 = vadd.f32 %v388, %v2498
    %v2500 = vpop.f32.mrb[0].mxu0
    %v2501 = vadd.f32 %v384, %v2500
    %v2502 = vpop.f32.mrb[0].mxu0
    %v2503 = vadd.f32 %v388, %v2502
    %2504 = vmatprep.mubr.bf16.mxu0 %v718
    %2505 = vmatmul.mubr.bf16.gmra.mrb[0].mxu0 %v717
    %v2506 = vpop.f32.mrb[0].mxu0
    %v2507 = vadd.f32 %v384, %v2506
    %v2508 = vpop.f32.mrb[0].mxu0
    %v2509 = vadd.f32 %v388, %v2508
    %v2510 = vpop.f32.mrb[0].mxu0
    %v2511 = vadd.f32 %v384, %v2510
    %v2512 = vpop.f32.mrb[0].mxu0
    %v2513 = vadd.f32 %v388, %v2512
    %2514 = vmatprep.mubr.bf16.mxu0 %v724
    %2515 = vmatmul.mubr.bf16.gmra.mrb[0].mxu0 %v723
    %v2516 = vpop.f32.mrb[0].mxu0
    %v2517 = vadd.f32 %v384, %v2516
    %v2518 = vpop.f32.mrb[0].mxu0
    %v2519 = vadd.f32 %v388, %v2518
    %v2520 = vpop.f32.mrb[0].mxu0
    %v2521 = vadd.f32 %v384, %v2520
    %v2522 = vpop.f32.mrb[0].mxu0
    %v2523 = vadd.f32 %v388, %v2522
    %2524 = vmatprep.mubr.bf16.mxu0 %v730
    %2525 = vmatmul.mubr.bf16.gmra.mrb[0].mxu0 %v729
    %v2526 = vpop.f32.mrb[0].mxu0
    %v2527 = vadd.f32 %v384, %v2526
    %v2528 = vpop.f32.mrb[0].mxu0
    %v2529 = vadd.f32 %v388, %v2528
    %v2530 = vpop.f32.mrb[0].mxu0
    %v2531 = vadd.f32 %v384, %v2530
    %v2532 = vpop.f32.mrb[0].mxu0
    %v2533 = vadd.f32 %v388, %v2532
    %2534 = vmatprep.mubr.bf16.mxu0 %v736
    %2535 = vmatmul.mubr.bf16.gmra.mrb[0].mxu0 %v735
    %v2536 = vpop.f32.mrb[0].mxu0
    %v2537 = vadd.f32 %v384, %v2536
    %v2538 = vpop.f32.mrb[0].mxu0
    %v2539 = vadd.f32 %v388, %v2538
    %v2540 = vpop.f32.mrb[0].mxu0
    %v2541 = vadd.f32 %v384, %v2540
    %v2542 = vpop.f32.mrb[0].mxu0
    %v2543 = vadd.f32 %v388, %v2542
    %2544 = vmatprep.mubr.bf16.mxu0 %v742
    %2545 = vmatmul.mubr.bf16.gmra.mrb[0].mxu0 %v741
    %v2546 = vpop.f32.mrb[0].mxu0
    %v2547 = vadd.f32 %v384, %v2546
    %v2548 = vpop.f32.mrb[0].mxu0
    %v2549 = vadd.f32 %v388, %v2548
    %v2550 = vpop.f32.mrb[0].mxu0
    %v2551 = vadd.f32 %v384, %v2550
    %v2552 = vpop.f32.mrb[0].mxu0
    %v2553 = vadd.f32 %v388, %v2552
    %2554 = vmatprep.mubr.bf16.mxu0 %v748
    %2555 = vmatmul.mubr.bf16.gmra.mrb[0].mxu0 %v747
    %v2556 = vpop.f32.mrb[0].mxu0
    %v2557 = vadd.f32 %v384, %v2556
    %v2558 = vpop.f32.mrb[0].mxu0
    %v2559 = vadd.f32 %v388, %v2558
    %v2560 = vpop.f32.mrb[0].mxu0
    %v2561 = vadd.f32 %v384, %v2560
    %v2562 = vpop.f32.mrb[0].mxu0
    %v2563 = vadd.f32 %v388, %v2562
    %2564 = vmatprep.mubr.bf16.mxu0 %v754
    %2565 = vmatmul.mubr.bf16.gmra.mrb[0].mxu0 %v753
    %v2566 = vpop.f32.mrb[0].mxu0
    %v2567 = vadd.f32 %v384, %v2566
    %v2568 = vpop.f32.mrb[0].mxu0
    %v2569 = vadd.f32 %v388, %v2568
    %v2570 = vpop.f32.mrb[0].mxu0
    %v2571 = vadd.f32 %v384, %v2570
    %v2572 = vpop.f32.mrb[0].mxu0
    %v2573 = vadd.f32 %v388, %v2572
    %2574 = vmatprep.mubr.bf16.mxu0 %v760
    %2575 = vmatmul.mubr.bf16.gmra.mrb[0].mxu0 %v759
    %v2576 = vpop.f32.mrb[0].mxu0
    %v2577 = vadd.f32 %v384, %v2576
    %v2578 = vpop.f32.mrb[0].mxu0
    %v2579 = vadd.f32 %v388, %v2578
    %v2580 = vpop.f32.mrb[0].mxu0
    %v2581 = vadd.f32 %v384, %v2580
    %v2582 = vpop.f32.mrb[0].mxu0
    %v2583 = vadd.f32 %v388, %v2582
    %2584 = vmatprep.mubr.bf16.mxu0 %v766
    %2585 = vmatmul.mubr.bf16.gmra.mrb[0].mxu0 %v765
    %v2586 = vpop.f32.mrb[0].mxu0
    %v2587 = vadd.f32 %v384, %v2586
    %v2588 = vpop.f32.mrb[0].mxu0
    %v2589 = vadd.f32 %v388, %v2588
    %v2590 = vpop.f32.mrb[0].mxu0
    %v2591 = vadd.f32 %v384, %v2590
    %v2592 = vpop.f32.mrb[0].mxu0
    %v2593 = vadd.f32 %v388, %v2592
    %2594 = vmatprep.mubr.bf16.mxu0 %v772
    %2595 = vmatmul.mubr.bf16.gmra.mrb[0].mxu0 %v771
    %v2596 = vpop.f32.mrb[0].mxu0
    %v2597 = vadd.f32 %v384, %v2596
    %v2598 = vpop.f32.mrb[0].mxu0
    %v2599 = vadd.f32 %v388, %v2598
    %v2600 = vpop.f32.mrb[0].mxu0
    %v2601 = vadd.f32 %v384, %v2600
    %v2602 = vpop.f32.mrb[0].mxu0
    %v2603 = vadd.f32 %v388, %v2602
    %2604 = vdwg.mxu0
    %2605 = vmatprep.subr.bf16.mxu0 %v1516
    %2606 = vmatpush1.bf16.msra.mxu0 %v1515
    %2607 = vmatprep.subr.bf16.mxu0 %v1520
    %2608 = vmatpush1.bf16.msra.mxu0 %v1519
    %2609 = vmatprep.subr.bf16.mxu0 %v1524
    %2610 = vmatpush1.bf16.msra.mxu0 %v1523
    %2611 = vmatprep.subr.bf16.mxu0 %v1528
    %2612 = vmatpush1.bf16.msra.mxu0 %v1527
    %2613 = vmatprep.subr.bf16.mxu0 %v1532
    %2614 = vmatpush1.bf16.msra.mxu0 %v1531
    %2615 = vmatprep.subr.bf16.mxu0 %v1536
    %2616 = vmatpush1.bf16.msra.mxu0 %v1535
    %2617 = vmatprep.subr.bf16.mxu0 %v1540
    %2618 = vmatpush1.bf16.msra.mxu0 %v1539
    %2619 = vmatprep.subr.bf16.mxu0 %v1544
    %2620 = vmatpush1.bf16.msra.mxu0 %v1543
    %2621 = vmatprep.subr.bf16.mxu0 %v1548
    %2622 = vmatpush1.bf16.msra.mxu0 %v1547
    %2623 = vmatprep.subr.bf16.mxu0 %v1552
    %2624 = vmatpush1.bf16.msra.mxu0 %v1551
    %2625 = vmatprep.subr.bf16.mxu0 %v1556
    %2626 = vmatpush1.bf16.msra.mxu0 %v1555
    %2627 = vmatprep.subr.bf16.mxu0 %v1560
    %2628 = vmatpush1.bf16.msra.mxu0 %v1559
    %2629 = vmatprep.subr.bf16.mxu0 %v1564
    %2630 = vmatpush1.bf16.msra.mxu0 %v1563
    %2631 = vmatprep.subr.bf16.mxu0 %v1568
    %2632 = vmatpush1.bf16.msra.mxu0 %v1567
    %2633 = vmatprep.subr.bf16.mxu0 %v1572
    %2634 = vmatpush1.bf16.msra.mxu0 %v1571
    %2635 = vmatprep.subr.bf16.mxu0 %v1576
    %2636 = vmatpush1.bf16.msra.mxu0 %v1575
    %2637 = vmatprep.mubr.bf16.mxu0 %v684
    %2638 = vmatmul.mubr.bf16.gmra.mrb[0].mxu0 %v683
    %v2639 = vpop.f32.mrb[0].mxu0
    %v2640 = vadd.f32 %v2447, %v2639
    %v2641 = vpop.f32.mrb[0].mxu0
    %v2642 = vadd.f32 %v2449, %v2641
    %v2643 = vpop.f32.mrb[0].mxu0
    %v2644 = vadd.f32 %v2451, %v2643
    %v2645 = vpop.f32.mrb[0].mxu0
    %v2646 = vadd.f32 %v2453, %v2645
    %2647 = vmatprep.mubr.bf16.mxu0 %v690
    %2648 = vmatmul.mubr.bf16.gmra.mrb[0].mxu0 %v689
    %v2649 = vpop.f32.mrb[0].mxu0
    %v2650 = vadd.f32 %v2457, %v2649
    %v2651 = vpop.f32.mrb[0].mxu0
    %v2652 = vadd.f32 %v2459, %v2651
    %v2653 = vpop.f32.mrb[0].mxu0
    %v2654 = vadd.f32 %v2461, %v2653
    %v2655 = vpop.f32.mrb[0].mxu0
    %v2656 = vadd.f32 %v2463, %v2655
    %2657 = vmatprep.mubr.bf16.mxu0 %v696
    %2658 = vmatmul.mubr.bf16.gmra.mrb[0].mxu0 %v695
    %v2659 = vpop.f32.mrb[0].mxu0
    %v2660 = vadd.f32 %v2467, %v2659
    %v2661 = vpop.f32.mrb[0].mxu0
    %v2662 = vadd.f32 %v2469, %v2661
    %v2663 = vpop.f32.mrb[0].mxu0
    %v2664 = vadd.f32 %v2471, %v2663
    %v2665 = vpop.f32.mrb[0].mxu0
    %v2666 = vadd.f32 %v2473, %v2665
    %2667 = vmatprep.mubr.bf16.mxu0 %v702
    %2668 = vmatmul.mubr.bf16.gmra.mrb[0].mxu0 %v701
    %v2669 = vpop.f32.mrb[0].mxu0
    %v2670 = vadd.f32 %v2477, %v2669
    %v2671 = vpop.f32.mrb[0].mxu0
    %v2672 = vadd.f32 %v2479, %v2671
    %v2673 = vpop.f32.mrb[0].mxu0
    %v2674 = vadd.f32 %v2481, %v2673
    %v2675 = vpop.f32.mrb[0].mxu0
    %v2676 = vadd.f32 %v2483, %v2675
    %2677 = vmatprep.mubr.bf16.mxu0 %v708
    %2678 = vmatmul.mubr.bf16.gmra.mrb[0].mxu0 %v707
    %v2679 = vpop.f32.mrb[0].mxu0
    %v2680 = vadd.f32 %v2487, %v2679
    %v2681 = vpop.f32.mrb[0].mxu0
    %v2682 = vadd.f32 %v2489, %v2681
    %v2683 = vpop.f32.mrb[0].mxu0
    %v2684 = vadd.f32 %v2491, %v2683
    %v2685 = vpop.f32.mrb[0].mxu0
    %v2686 = vadd.f32 %v2493, %v2685
    %2687 = vmatprep.mubr.bf16.mxu0 %v714
    %2688 = vmatmul.mubr.bf16.gmra.mrb[0].mxu0 %v713
    %v2689 = vpop.f32.mrb[0].mxu0
    %v2690 = vadd.f32 %v2497, %v2689
    %v2691 = vpop.f32.mrb[0].mxu0
    %v2692 = vadd.f32 %v2499, %v2691
    %v2693 = vpop.f32.mrb[0].mxu0
    %v2694 = vadd.f32 %v2501, %v2693
    %v2695 = vpop.f32.mrb[0].mxu0
    %v2696 = vadd.f32 %v2503, %v2695
    %2697 = vmatprep.mubr.bf16.mxu0 %v720
    %2698 = vmatmul.mubr.bf16.gmra.mrb[0].mxu0 %v719
    %v2699 = vpop.f32.mrb[0].mxu0
    %v2700 = vadd.f32 %v2507, %v2699
    %v2701 = vpop.f32.mrb[0].mxu0
    %v2702 = vadd.f32 %v2509, %v2701
    %v2703 = vpop.f32.mrb[0].mxu0
    %v2704 = vadd.f32 %v2511, %v2703
    %v2705 = vpop.f32.mrb[0].mxu0
    %v2706 = vadd.f32 %v2513, %v2705
    %2707 = vmatprep.mubr.bf16.mxu0 %v726
    %2708 = vmatmul.mubr.bf16.gmra.mrb[0].mxu0 %v725
    %v2709 = vpop.f32.mrb[0].mxu0
    %v2710 = vadd.f32 %v2517, %v2709
    %v2711 = vpop.f32.mrb[0].mxu0
    %v2712 = vadd.f32 %v2519, %v2711
    %v2713 = vpop.f32.mrb[0].mxu0
    %v2714 = vadd.f32 %v2521, %v2713
    %v2715 = vpop.f32.mrb[0].mxu0
    %v2716 = vadd.f32 %v2523, %v2715
    %2717 = vmatprep.mubr.bf16.mxu0 %v732
    %2718 = vmatmul.mubr.bf16.gmra.mrb[0].mxu0 %v731
    %v2719 = vpop.f32.mrb[0].mxu0
    %v2720 = vadd.f32 %v2527, %v2719
    %v2721 = vpop.f32.mrb[0].mxu0
    %v2722 = vadd.f32 %v2529, %v2721
    %v2723 = vpop.f32.mrb[0].mxu0
    %v2724 = vadd.f32 %v2531, %v2723
    %v2725 = vpop.f32.mrb[0].mxu0
    %v2726 = vadd.f32 %v2533, %v2725
    %2727 = vmatprep.mubr.bf16.mxu0 %v738
    %2728 = vmatmul.mubr.bf16.gmra.mrb[0].mxu0 %v737
    %v2729 = vpop.f32.mrb[0].mxu0
    %v2730 = vadd.f32 %v2537, %v2729
    %v2731 = vpop.f32.mrb[0].mxu0
    %v2732 = vadd.f32 %v2539, %v2731
    %v2733 = vpop.f32.mrb[0].mxu0
    %v2734 = vadd.f32 %v2541, %v2733
    %v2735 = vpop.f32.mrb[0].mxu0
    %v2736 = vadd.f32 %v2543, %v2735
    %2737 = vmatprep.mubr.bf16.mxu0 %v744
    %2738 = vmatmul.mubr.bf16.gmra.mrb[0].mxu0 %v743
    %v2739 = vpop.f32.mrb[0].mxu0
    %v2740 = vadd.f32 %v2547, %v2739
    %v2741 = vpop.f32.mrb[0].mxu0
    %v2742 = vadd.f32 %v2549, %v2741
    %v2743 = vpop.f32.mrb[0].mxu0
    %v2744 = vadd.f32 %v2551, %v2743
    %v2745 = vpop.f32.mrb[0].mxu0
    %v2746 = vadd.f32 %v2553, %v2745
    %2747 = vmatprep.mubr.bf16.mxu0 %v750
    %2748 = vmatmul.mubr.bf16.gmra.mrb[0].mxu0 %v749
    %v2749 = vpop.f32.mrb[0].mxu0
    %v2750 = vadd.f32 %v2557, %v2749
    %v2751 = vpop.f32.mrb[0].mxu0
    %v2752 = vadd.f32 %v2559, %v2751
    %v2753 = vpop.f32.mrb[0].mxu0
    %v2754 = vadd.f32 %v2561, %v2753
    %v2755 = vpop.f32.mrb[0].mxu0
    %v2756 = vadd.f32 %v2563, %v2755
    %2757 = vmatprep.mubr.bf16.mxu0 %v756
    %2758 = vmatmul.mubr.bf16.gmra.mrb[0].mxu0 %v755
    %v2759 = vpop.f32.mrb[0].mxu0
    %v2760 = vadd.f32 %v2567, %v2759
    %v2761 = vpop.f32.mrb[0].mxu0
    %v2762 = vadd.f32 %v2569, %v2761
    %v2763 = vpop.f32.mrb[0].mxu0
    %v2764 = vadd.f32 %v2571, %v2763
    %v2765 = vpop.f32.mrb[0].mxu0
    %v2766 = vadd.f32 %v2573, %v2765
    %2767 = vmatprep.mubr.bf16.mxu0 %v762
    %2768 = vmatmul.mubr.bf16.gmra.mrb[0].mxu0 %v761
    %v2769 = vpop.f32.mrb[0].mxu0
    %v2770 = vadd.f32 %v2577, %v2769
    %v2771 = vpop.f32.mrb[0].mxu0
    %v2772 = vadd.f32 %v2579, %v2771
    %v2773 = vpop.f32.mrb[0].mxu0
    %v2774 = vadd.f32 %v2581, %v2773
    %v2775 = vpop.f32.mrb[0].mxu0
    %v2776 = vadd.f32 %v2583, %v2775
    %2777 = vmatprep.mubr.bf16.mxu0 %v768
    %2778 = vmatmul.mubr.bf16.gmra.mrb[0].mxu0 %v767
    %v2779 = vpop.f32.mrb[0].mxu0
    %v2780 = vadd.f32 %v2587, %v2779
    %v2781 = vpop.f32.mrb[0].mxu0
    %v2782 = vadd.f32 %v2589, %v2781
    %v2783 = vpop.f32.mrb[0].mxu0
    %v2784 = vadd.f32 %v2591, %v2783
    %v2785 = vpop.f32.mrb[0].mxu0
    %v2786 = vadd.f32 %v2593, %v2785
    %2787 = vmatprep.mubr.bf16.mxu0 %v774
    %2788 = vmatmul.mubr.bf16.gmra.mrb[0].mxu0 %v773
    %v2789 = vpop.f32.mrb[0].mxu0
    %v2790 = vadd.f32 %v2597, %v2789
    %v2791 = vpop.f32.mrb[0].mxu0
    %v2792 = vadd.f32 %v2599, %v2791
    %v2793 = vpop.f32.mrb[0].mxu0
    %v2794 = vadd.f32 %v2601, %v2793
    %v2795 = vpop.f32.mrb[0].mxu0
    %v2796 = vadd.f32 %v2603, %v2795
    %2797 = vdwg.mxu0
    %2798 = vmatprep.subr.bf16.mxu0 %v1580
    %2799 = vmatpush1.bf16.msra.mxu0 %v1579
    %2800 = vmatprep.subr.bf16.mxu0 %v1584
    %2801 = vmatpush1.bf16.msra.mxu0 %v1583
    %2802 = vmatprep.subr.bf16.mxu0 %v1588
    %2803 = vmatpush1.bf16.msra.mxu0 %v1587
    %2804 = vmatprep.subr.bf16.mxu0 %v1592
    %2805 = vmatpush1.bf16.msra.mxu0 %v1591
    %2806 = vmatprep.subr.bf16.mxu0 %v1596
    %2807 = vmatpush1.bf16.msra.mxu0 %v1595
    %2808 = vmatprep.subr.bf16.mxu0 %v1600
    %2809 = vmatpush1.bf16.msra.mxu0 %v1599
    %2810 = vmatprep.subr.bf16.mxu0 %v1604
    %2811 = vmatpush1.bf16.msra.mxu0 %v1603
    %2812 = vmatprep.subr.bf16.mxu0 %v1608
    %2813 = vmatpush1.bf16.msra.mxu0 %v1607
    %2814 = vmatprep.subr.bf16.mxu0 %v1612
    %2815 = vmatpush1.bf16.msra.mxu0 %v1611
    %2816 = vmatprep.subr.bf16.mxu0 %v1616
    %2817 = vmatpush1.bf16.msra.mxu0 %v1615
    %2818 = vmatprep.subr.bf16.mxu0 %v1620
    %2819 = vmatpush1.bf16.msra.mxu0 %v1619
    %2820 = vmatprep.subr.bf16.mxu0 %v1624
    %2821 = vmatpush1.bf16.msra.mxu0 %v1623
    %2822 = vmatprep.subr.bf16.mxu0 %v1628
    %2823 = vmatpush1.bf16.msra.mxu0 %v1627
    %2824 = vmatprep.subr.bf16.mxu0 %v1632
    %2825 = vmatpush1.bf16.msra.mxu0 %v1631
    %2826 = vmatprep.subr.bf16.mxu0 %v1636
    %2827 = vmatpush1.bf16.msra.mxu0 %v1635
    %2828 = vmatprep.subr.bf16.mxu0 %v1640
    %2829 = vmatpush1.bf16.msra.mxu0 %v1639
    %2830 = vmatprep.mubr.bf16.mxu0 %v686
    %2831 = vmatmul.mubr.bf16.gmra.mrb[0].mxu0 %v685
    %v2832 = vpop.f32.mrb[0].mxu0
    %v2833 = vadd.f32 %v2640, %v2832
    %v2834 = vpop.f32.mrb[0].mxu0
    %v2835 = vadd.f32 %v2642, %v2834
    %v2836 = vpop.f32.mrb[0].mxu0
    %v2837 = vadd.f32 %v2644, %v2836
    %v2838 = vpop.f32.mrb[0].mxu0
    %v2839 = vadd.f32 %v2646, %v2838
    %2840 = vmatprep.mubr.bf16.mxu0 %v692
    %2841 = vmatmul.mubr.bf16.gmra.mrb[0].mxu0 %v691
    %v2842 = vpop.f32.mrb[0].mxu0
    %v2843 = vadd.f32 %v2650, %v2842
    %v2844 = vpop.f32.mrb[0].mxu0
    %v2845 = vadd.f32 %v2652, %v2844
    %v2846 = vpop.f32.mrb[0].mxu0
    %v2847 = vadd.f32 %v2654, %v2846
    %v2848 = vpop.f32.mrb[0].mxu0
    %v2849 = vadd.f32 %v2656, %v2848
    %2850 = vmatprep.mubr.bf16.mxu0 %v698
    %2851 = vmatmul.mubr.bf16.gmra.mrb[0].mxu0 %v697
    %v2852 = vpop.f32.mrb[0].mxu0
    %v2853 = vadd.f32 %v2660, %v2852
    %v2854 = vpop.f32.mrb[0].mxu0
    %v2855 = vadd.f32 %v2662, %v2854
    %v2856 = vpop.f32.mrb[0].mxu0
    %v2857 = vadd.f32 %v2664, %v2856
    %v2858 = vpop.f32.mrb[0].mxu0
    %v2859 = vadd.f32 %v2666, %v2858
    %2860 = vmatprep.mubr.bf16.mxu0 %v704
    %2861 = vmatmul.mubr.bf16.gmra.mrb[0].mxu0 %v703
    %v2862 = vpop.f32.mrb[0].mxu0
    %v2863 = vadd.f32 %v2670, %v2862
    %v2864 = vpop.f32.mrb[0].mxu0
    %v2865 = vadd.f32 %v2672, %v2864
    %v2866 = vpop.f32.mrb[0].mxu0
    %v2867 = vadd.f32 %v2674, %v2866
    %v2868 = vpop.f32.mrb[0].mxu0
    %v2869 = vadd.f32 %v2676, %v2868
    %2870 = vmatprep.mubr.bf16.mxu0 %v710
    %2871 = vmatmul.mubr.bf16.gmra.mrb[0].mxu0 %v709
    %v2872 = vpop.f32.mrb[0].mxu0
    %v2873 = vadd.f32 %v2680, %v2872
    %v2874 = vpop.f32.mrb[0].mxu0
    %v2875 = vadd.f32 %v2682, %v2874
    %v2876 = vpop.f32.mrb[0].mxu0
    %v2877 = vadd.f32 %v2684, %v2876
    %v2878 = vpop.f32.mrb[0].mxu0
    %v2879 = vadd.f32 %v2686, %v2878
    %2880 = vmatprep.mubr.bf16.mxu0 %v716
    %2881 = vmatmul.mubr.bf16.gmra.mrb[0].mxu0 %v715
    %v2882 = vpop.f32.mrb[0].mxu0
    %v2883 = vadd.f32 %v2690, %v2882
    %v2884 = vpop.f32.mrb[0].mxu0
    %v2885 = vadd.f32 %v2692, %v2884
    %v2886 = vpop.f32.mrb[0].mxu0
    %v2887 = vadd.f32 %v2694, %v2886
    %v2888 = vpop.f32.mrb[0].mxu0
    %v2889 = vadd.f32 %v2696, %v2888
    %2890 = vmatprep.mubr.bf16.mxu0 %v722
    %2891 = vmatmul.mubr.bf16.gmra.mrb[0].mxu0 %v721
    %v2892 = vpop.f32.mrb[0].mxu0
    %v2893 = vadd.f32 %v2700, %v2892
    %v2894 = vpop.f32.mrb[0].mxu0
    %v2895 = vadd.f32 %v2702, %v2894
    %v2896 = vpop.f32.mrb[0].mxu0
    %v2897 = vadd.f32 %v2704, %v2896
    %v2898 = vpop.f32.mrb[0].mxu0
    %v2899 = vadd.f32 %v2706, %v2898
    %2900 = vmatprep.mubr.bf16.mxu0 %v728
    %2901 = vmatmul.mubr.bf16.gmra.mrb[0].mxu0 %v727
    %v2902 = vpop.f32.mrb[0].mxu0
    %v2903 = vadd.f32 %v2710, %v2902
    %v2904 = vpop.f32.mrb[0].mxu0
    %v2905 = vadd.f32 %v2712, %v2904
    %v2906 = vpop.f32.mrb[0].mxu0
    %v2907 = vadd.f32 %v2714, %v2906
    %v2908 = vpop.f32.mrb[0].mxu0
    %v2909 = vadd.f32 %v2716, %v2908
    %2910 = vmatprep.mubr.bf16.mxu0 %v734
    %2911 = vmatmul.mubr.bf16.gmra.mrb[0].mxu0 %v733
    %v2912 = vpop.f32.mrb[0].mxu0
    %v2913 = vadd.f32 %v2720, %v2912
    %v2914 = vpop.f32.mrb[0].mxu0
    %v2915 = vadd.f32 %v2722, %v2914
    %v2916 = vpop.f32.mrb[0].mxu0
    %v2917 = vadd.f32 %v2724, %v2916
    %v2918 = vpop.f32.mrb[0].mxu0
    %v2919 = vadd.f32 %v2726, %v2918
    %2920 = vmatprep.mubr.bf16.mxu0 %v740
    %2921 = vmatmul.mubr.bf16.gmra.mrb[0].mxu0 %v739
    %v2922 = vpop.f32.mrb[0].mxu0
    %v2923 = vadd.f32 %v2730, %v2922
    %v2924 = vpop.f32.mrb[0].mxu0
    %v2925 = vadd.f32 %v2732, %v2924
    %v2926 = vpop.f32.mrb[0].mxu0
    %v2927 = vadd.f32 %v2734, %v2926
    %v2928 = vpop.f32.mrb[0].mxu0
    %v2929 = vadd.f32 %v2736, %v2928
    %2930 = vmatprep.mubr.bf16.mxu0 %v746
    %2931 = vmatmul.mubr.bf16.gmra.mrb[0].mxu0 %v745
    %v2932 = vpop.f32.mrb[0].mxu0
    %v2933 = vadd.f32 %v2740, %v2932
    %v2934 = vpop.f32.mrb[0].mxu0
    %v2935 = vadd.f32 %v2742, %v2934
    %v2936 = vpop.f32.mrb[0].mxu0
    %v2937 = vadd.f32 %v2744, %v2936
    %v2938 = vpop.f32.mrb[0].mxu0
    %v2939 = vadd.f32 %v2746, %v2938
    %2940 = vmatprep.mubr.bf16.mxu0 %v752
    %2941 = vmatmul.mubr.bf16.gmra.mrb[0].mxu0 %v751
    %v2942 = vpop.f32.mrb[0].mxu0
    %v2943 = vadd.f32 %v2750, %v2942
    %v2944 = vpop.f32.mrb[0].mxu0
    %v2945 = vadd.f32 %v2752, %v2944
    %v2946 = vpop.f32.mrb[0].mxu0
    %v2947 = vadd.f32 %v2754, %v2946
    %v2948 = vpop.f32.mrb[0].mxu0
    %v2949 = vadd.f32 %v2756, %v2948
    %2950 = vmatprep.mubr.bf16.mxu0 %v758
    %2951 = vmatmul.mubr.bf16.gmra.mrb[0].mxu0 %v757
    %v2952 = vpop.f32.mrb[0].mxu0
    %v2953 = vadd.f32 %v2760, %v2952
    %v2954 = vpop.f32.mrb[0].mxu0
    %v2955 = vadd.f32 %v2762, %v2954
    %v2956 = vpop.f32.mrb[0].mxu0
    %v2957 = vadd.f32 %v2764, %v2956
    %v2958 = vpop.f32.mrb[0].mxu0
    %v2959 = vadd.f32 %v2766, %v2958
    %2960 = vmatprep.mubr.bf16.mxu0 %v764
    %2961 = vmatmul.mubr.bf16.gmra.mrb[0].mxu0 %v763
    %v2962 = vpop.f32.mrb[0].mxu0
    %v2963 = vadd.f32 %v2770, %v2962
    %v2964 = vpop.f32.mrb[0].mxu0
    %v2965 = vadd.f32 %v2772, %v2964
    %v2966 = vpop.f32.mrb[0].mxu0
    %v2967 = vadd.f32 %v2774, %v2966
    %v2968 = vpop.f32.mrb[0].mxu0
    %v2969 = vadd.f32 %v2776, %v2968
    %2970 = vmatprep.mubr.bf16.mxu0 %v770
    %2971 = vmatmul.mubr.bf16.gmra.mrb[0].mxu0 %v769
    %v2972 = vpop.f32.mrb[0].mxu0
    %v2973 = vadd.f32 %v2780, %v2972
    %v2974 = vpop.f32.mrb[0].mxu0
    %v2975 = vadd.f32 %v2782, %v2974
    %v2976 = vpop.f32.mrb[0].mxu0
    %v2977 = vadd.f32 %v2784, %v2976
    %v2978 = vpop.f32.mrb[0].mxu0
    %v2979 = vadd.f32 %v2786, %v2978
    %2980 = vmatprep.mubr.bf16.mxu0 %v776
    %2981 = vmatmul.mubr.bf16.gmra.mrb[0].mxu0 %v775
    %v2982 = vpop.f32.mrb[0].mxu0
    %v2983 = vadd.f32 %v2790, %v2982
    %v2984 = vpop.f32.mrb[0].mxu0
    %v2985 = vadd.f32 %v2792, %v2984
    %v2986 = vpop.f32.mrb[0].mxu0
    %v2987 = vadd.f32 %v2794, %v2986
    %v2988 = vpop.f32.mrb[0].mxu0
    %v2989 = vadd.f32 %v2796, %v2988
    %2990 = vdwg.mxu0
    %v2991 = vmax.f32 %v2254, 0.0
    %v2992 = vmax.f32 %v2256, 0.0
    %v2993 = vmax.f32 %v2833, 0.0
    %v2994 = vmax.f32 %v2835, 0.0
    %v2995 = vmax.f32 %v2258, 0.0
    %v2996 = vmax.f32 %v2260, 0.0
    %v2997 = vmax.f32 %v2837, 0.0
    %v2998 = vmax.f32 %v2839, 0.0
    %v2999 = vmax.f32 %v2264, 0.0
    %v3000 = vmax.f32 %v2266, 0.0
    %v3001 = vmax.f32 %v2843, 0.0
    %v3002 = vmax.f32 %v2845, 0.0
    %v3003 = vmax.f32 %v2268, 0.0
    %v3004 = vmax.f32 %v2270, 0.0
    %v3005 = vmax.f32 %v2847, 0.0
    %v3006 = vmax.f32 %v2849, 0.0
    %v3007 = vmax.f32 %v2274, 0.0
    %v3008 = vmax.f32 %v2276, 0.0
    %v3009 = vmax.f32 %v2853, 0.0
    %v3010 = vmax.f32 %v2855, 0.0
    %v3011 = vmax.f32 %v2278, 0.0
    %v3012 = vmax.f32 %v2280, 0.0
    %v3013 = vmax.f32 %v2857, 0.0
    %v3014 = vmax.f32 %v2859, 0.0
    %v3015 = vmax.f32 %v2284, 0.0
    %v3016 = vmax.f32 %v2286, 0.0
    %v3017 = vmax.f32 %v2863, 0.0
    %v3018 = vmax.f32 %v2865, 0.0
    %v3019 = vmax.f32 %v2288, 0.0
    %v3020 = vmax.f32 %v2290, 0.0
    %v3021 = vmax.f32 %v2867, 0.0
    %v3022 = vmax.f32 %v2869, 0.0
    %v3023 = vmax.f32 %v2294, 0.0
    %v3024 = vmax.f32 %v2296, 0.0
    %v3025 = vmax.f32 %v2873, 0.0
    %v3026 = vmax.f32 %v2875, 0.0
    %v3027 = vmax.f32 %v2298, 0.0
    %v3028 = vmax.f32 %v2300, 0.0
    %v3029 = vmax.f32 %v2877, 0.0
    %v3030 = vmax.f32 %v2879, 0.0
    %v3031 = vmax.f32 %v2304, 0.0
    %v3032 = vmax.f32 %v2306, 0.0
    %v3033 = vmax.f32 %v2883, 0.0
    %v3034 = vmax.f32 %v2885, 0.0
    %v3035 = vmax.f32 %v2308, 0.0
    %v3036 = vmax.f32 %v2310, 0.0
    %v3037 = vmax.f32 %v2887, 0.0
    %v3038 = vmax.f32 %v2889, 0.0
    %v3039 = vmax.f32 %v2314, 0.0
    %v3040 = vmax.f32 %v2316, 0.0
    %v3041 = vmax.f32 %v2893, 0.0
    %v3042 = vmax.f32 %v2895, 0.0
    %v3043 = vmax.f32 %v2318, 0.0
    %v3044 = vmax.f32 %v2320, 0.0
    %v3045 = vmax.f32 %v2897, 0.0
    %v3046 = vmax.f32 %v2899, 0.0
    %v3047 = vmax.f32 %v2324, 0.0
    %v3048 = vmax.f32 %v2326, 0.0
    %v3049 = vmax.f32 %v2903, 0.0
    %v3050 = vmax.f32 %v2905, 0.0
    %v3051 = vmax.f32 %v2328, 0.0
    %v3052 = vmax.f32 %v2330, 0.0
    %v3053 = vmax.f32 %v2907, 0.0
    %v3054 = vmax.f32 %v2909, 0.0
    %v3055 = vmax.f32 %v2334, 0.0
    %v3056 = vmax.f32 %v2336, 0.0
    %v3057 = vmax.f32 %v2913, 0.0
    %v3058 = vmax.f32 %v2915, 0.0
    %v3059 = vmax.f32 %v2338, 0.0
    %v3060 = vmax.f32 %v2340, 0.0
    %v3061 = vmax.f32 %v2917, 0.0
    %v3062 = vmax.f32 %v2919, 0.0
    %v3063 = vmax.f32 %v2344, 0.0
    %v3064 = vmax.f32 %v2346, 0.0
    %v3065 = vmax.f32 %v2923, 0.0
    %v3066 = vmax.f32 %v2925, 0.0
    %v3067 = vmax.f32 %v2348, 0.0
    %v3068 = vmax.f32 %v2350, 0.0
    %v3069 = vmax.f32 %v2927, 0.0
    %v3070 = vmax.f32 %v2929, 0.0
    %v3071 = vmax.f32 %v2354, 0.0
    %v3072 = vmax.f32 %v2356, 0.0
    %v3073 = vmax.f32 %v2933, 0.0
    %v3074 = vmax.f32 %v2935, 0.0
    %v3075 = vmax.f32 %v2358, 0.0
    %v3076 = vmax.f32 %v2360, 0.0
    %v3077 = vmax.f32 %v2937, 0.0
    %v3078 = vmax.f32 %v2939, 0.0
    %v3079 = vmax.f32 %v2364, 0.0
    %v3080 = vmax.f32 %v2366, 0.0
    %v3081 = vmax.f32 %v2943, 0.0
    %v3082 = vmax.f32 %v2945, 0.0
    %v3083 = vmax.f32 %v2368, 0.0
    %v3084 = vmax.f32 %v2370, 0.0
    %v3085 = vmax.f32 %v2947, 0.0
    %v3086 = vmax.f32 %v2949, 0.0
    %v3087 = vmax.f32 %v2374, 0.0
    %v3088 = vmax.f32 %v2376, 0.0
    %v3089 = vmax.f32 %v2953, 0.0
    %v3090 = vmax.f32 %v2955, 0.0
    %v3091 = vmax.f32 %v2378, 0.0
    %v3092 = vmax.f32 %v2380, 0.0
    %v3093 = vmax.f32 %v2957, 0.0
    %v3094 = vmax.f32 %v2959, 0.0
    %v3095 = vmax.f32 %v2384, 0.0
    %v3096 = vmax.f32 %v2386, 0.0
    %v3097 = vmax.f32 %v2963, 0.0
    %v3098 = vmax.f32 %v2965, 0.0
    %v3099 = vmax.f32 %v2388, 0.0
    %v3100 = vmax.f32 %v2390, 0.0
    %v3101 = vmax.f32 %v2967, 0.0
    %v3102 = vmax.f32 %v2969, 0.0
    %v3103 = vmax.f32 %v2394, 0.0
    %v3104 = vmax.f32 %v2396, 0.0
    %v3105 = vmax.f32 %v2973, 0.0
    %v3106 = vmax.f32 %v2975, 0.0
    %v3107 = vmax.f32 %v2398, 0.0
    %v3108 = vmax.f32 %v2400, 0.0
    %v3109 = vmax.f32 %v2977, 0.0
    %v3110 = vmax.f32 %v2979, 0.0
    %v3111 = vmax.f32 %v2404, 0.0
    %v3112 = vmax.f32 %v2406, 0.0
    %v3113 = vmax.f32 %v2983, 0.0
    %v3114 = vmax.f32 %v2985, 0.0
    %v3115 = vmax.f32 %v2408, 0.0
    %v3116 = vmax.f32 %v2410, 0.0
    %v3117 = vmax.f32 %v2987, 0.0
    %v3118 = vmax.f32 %v2989, 0.0
    %v3119 = vpack.c.bf16 %v2995, %v2991
    %v3120 = vpack.c.bf16 %v2996, %v2992
    %v3121 = vpack.c.bf16 %v2997, %v2993
    %v3122 = vpack.c.bf16 %v2998, %v2994
    %v3123 = vpack.c.bf16 %v3003, %v2999
    %v3124 = vpack.c.bf16 %v3004, %v3000
    %v3125 = vpack.c.bf16 %v3005, %v3001
    %v3126 = vpack.c.bf16 %v3006, %v3002
    %v3127 = vpack.c.bf16 %v3011, %v3007
    %v3128 = vpack.c.bf16 %v3012, %v3008
    %v3129 = vpack.c.bf16 %v3013, %v3009
    %v3130 = vpack.c.bf16 %v3014, %v3010
    %v3131 = vpack.c.bf16 %v3019, %v3015
    %v3132 = vpack.c.bf16 %v3020, %v3016
    %v3133 = vpack.c.bf16 %v3021, %v3017
    %v3134 = vpack.c.bf16 %v3022, %v3018
    %v3135 = vpack.c.bf16 %v3027, %v3023
    %v3136 = vpack.c.bf16 %v3028, %v3024
    %v3137 = vpack.c.bf16 %v3029, %v3025
    %v3138 = vpack.c.bf16 %v3030, %v3026
    %v3139 = vpack.c.bf16 %v3035, %v3031
    %v3140 = vpack.c.bf16 %v3036, %v3032
    %v3141 = vpack.c.bf16 %v3037, %v3033
    %v3142 = vpack.c.bf16 %v3038, %v3034
    %v3143 = vpack.c.bf16 %v3043, %v3039
    %v3144 = vpack.c.bf16 %v3044, %v3040
    %v3145 = vpack.c.bf16 %v3045, %v3041
    %v3146 = vpack.c.bf16 %v3046, %v3042
    %v3147 = vpack.c.bf16 %v3051, %v3047
    %v3148 = vpack.c.bf16 %v3052, %v3048
    %v3149 = vpack.c.bf16 %v3053, %v3049
    %v3150 = vpack.c.bf16 %v3054, %v3050
    %v3151 = vpack.c.bf16 %v3059, %v3055
    %v3152 = vpack.c.bf16 %v3060, %v3056
    %v3153 = vpack.c.bf16 %v3061, %v3057
    %v3154 = vpack.c.bf16 %v3062, %v3058
    %v3155 = vpack.c.bf16 %v3067, %v3063
    %v3156 = vpack.c.bf16 %v3068, %v3064
    %v3157 = vpack.c.bf16 %v3069, %v3065
    %v3158 = vpack.c.bf16 %v3070, %v3066
    %v3159 = vpack.c.bf16 %v3075, %v3071
    %v3160 = vpack.c.bf16 %v3076, %v3072
    %v3161 = vpack.c.bf16 %v3077, %v3073
    %v3162 = vpack.c.bf16 %v3078, %v3074
    %v3163 = vpack.c.bf16 %v3083, %v3079
    %v3164 = vpack.c.bf16 %v3084, %v3080
    %v3165 = vpack.c.bf16 %v3085, %v3081
    %v3166 = vpack.c.bf16 %v3086, %v3082
    %v3167 = vpack.c.bf16 %v3091, %v3087
    %v3168 = vpack.c.bf16 %v3092, %v3088
    %v3169 = vpack.c.bf16 %v3093, %v3089
    %v3170 = vpack.c.bf16 %v3094, %v3090
    %v3171 = vpack.c.bf16 %v3099, %v3095
    %v3172 = vpack.c.bf16 %v3100, %v3096
    %v3173 = vpack.c.bf16 %v3101, %v3097
    %v3174 = vpack.c.bf16 %v3102, %v3098
    %v3175 = vpack.c.bf16 %v3107, %v3103
    %v3176 = vpack.c.bf16 %v3108, %v3104
    %v3177 = vpack.c.bf16 %v3109, %v3105
    %v3178 = vpack.c.bf16 %v3110, %v3106
    %v3179 = vpack.c.bf16 %v3115, %v3111
    %v3180 = vpack.c.bf16 %v3116, %v3112
    %v3181 = vpack.c.bf16 %v3117, %v3113
    %v3182 = vpack.c.bf16 %v3118, %v3114
    %v3183 = vld [vmem:[#allocation7] sm:$0xf]
    %v3184 = vld [vmem:[#allocation7 + $0x4] sm:$0xf]
    %v3185 = vld [vmem:[#allocation7 + $0x8] sm:$0xf]
    %v3186 = vld [vmem:[#allocation7 + $0xc] sm:$0xf]
    %v3187 = vld [vmem:[#allocation7 + $0x10] sm:$0xf]
    %v3188 = vld [vmem:[#allocation7 + $0x14] sm:$0xf]
    %v3189 = vld [vmem:[#allocation7 + $0x18] sm:$0xf]
    %v3190 = vld [vmem:[#allocation7 + $0x1c] sm:$0xf]
    %v3191 = vld [vmem:[#allocation7 + $0x20] sm:$0xf]
    %v3192 = vld [vmem:[#allocation7 + $0x24] sm:$0xf]
    %v3193 = vld [vmem:[#allocation7 + $0x28] sm:$0xf]
    %v3194 = vld [vmem:[#allocation7 + $0x2c] sm:$0xf]
    %v3195 = vld [vmem:[#allocation7 + $0x30] sm:$0xf]
    %v3196 = vld [vmem:[#allocation7 + $0x34] sm:$0xf]
    %v3197 = vld [vmem:[#allocation7 + $0x38] sm:$0xf]
    %v3198 = vld [vmem:[#allocation7 + $0x3c] sm:$0xf]
    %v3199 = vld [vmem:[#allocation7 + $0x40] sm:$0xf]
    %v3200 = vld [vmem:[#allocation7 + $0x44] sm:$0xf]
    %v3201 = vld [vmem:[#allocation7 + $0x48] sm:$0xf]
    %v3202 = vld [vmem:[#allocation7 + $0x4c] sm:$0xf]
    %v3203 = vld [vmem:[#allocation7 + $0x50] sm:$0xf]
    %v3204 = vld [vmem:[#allocation7 + $0x54] sm:$0xf]
    %v3205 = vld [vmem:[#allocation7 + $0x58] sm:$0xf]
    %v3206 = vld [vmem:[#allocation7 + $0x5c] sm:$0xf]
    %v3207 = vld [vmem:[#allocation7 + $0x60] sm:$0xf]
    %v3208 = vld [vmem:[#allocation7 + $0x64] sm:$0xf]
    %v3209 = vld [vmem:[#allocation7 + $0x68] sm:$0xf]
    %v3210 = vld [vmem:[#allocation7 + $0x6c] sm:$0xf]
    %v3211 = vld [vmem:[#allocation7 + $0x70] sm:$0xf]
    %v3212 = vld [vmem:[#allocation7 + $0x74] sm:$0xf]
    %v3213 = vld [vmem:[#allocation7 + $0x78] sm:$0xf]
    %v3214 = vld [vmem:[#allocation7 + $0x7c] sm:$0xf]
    %v3215 = vld [vmem:[#allocation7 + $0x80] sm:$0xf]
    %v3216 = vld [vmem:[#allocation7 + $0x84] sm:$0xf]
    %v3217 = vld [vmem:[#allocation7 + $0x88] sm:$0xf]
    %v3218 = vld [vmem:[#allocation7 + $0x8c] sm:$0xf]
    %v3219 = vld [vmem:[#allocation7 + $0x90] sm:$0xf]
    %v3220 = vld [vmem:[#allocation7 + $0x94] sm:$0xf]
    %v3221 = vld [vmem:[#allocation7 + $0x98] sm:$0xf]
    %v3222 = vld [vmem:[#allocation7 + $0x9c] sm:$0xf]
    %v3223 = vld [vmem:[#allocation7 + $0xa0] sm:$0xf]
    %v3224 = vld [vmem:[#allocation7 + $0xa4] sm:$0xf]
    %v3225 = vld [vmem:[#allocation7 + $0xa8] sm:$0xf]
    %v3226 = vld [vmem:[#allocation7 + $0xac] sm:$0xf]
    %v3227 = vld [vmem:[#allocation7 + $0xb0] sm:$0xf]
    %v3228 = vld [vmem:[#allocation7 + $0xb4] sm:$0xf]
    %v3229 = vld [vmem:[#allocation7 + $0xb8] sm:$0xf]
    %v3230 = vld [vmem:[#allocation7 + $0xbc] sm:$0xf]
    %v3231 = vld [vmem:[#allocation7 + $0xc0] sm:$0xf]
    %v3232 = vld [vmem:[#allocation7 + $0xc4] sm:$0xf]
    %v3233 = vld [vmem:[#allocation7 + $0xc8] sm:$0xf]
    %v3234 = vld [vmem:[#allocation7 + $0xcc] sm:$0xf]
    %v3235 = vld [vmem:[#allocation7 + $0xd0] sm:$0xf]
    %v3236 = vld [vmem:[#allocation7 + $0xd4] sm:$0xf]
    %v3237 = vld [vmem:[#allocation7 + $0xd8] sm:$0xf]
    %v3238 = vld [vmem:[#allocation7 + $0xdc] sm:$0xf]
    %v3239 = vld [vmem:[#allocation7 + $0xe0] sm:$0xf]
    %v3240 = vld [vmem:[#allocation7 + $0xe4] sm:$0xf]
    %v3241 = vld [vmem:[#allocation7 + $0xe8] sm:$0xf]
    %v3242 = vld [vmem:[#allocation7 + $0xec] sm:$0xf]
    %v3243 = vld [vmem:[#allocation7 + $0xf0] sm:$0xf]
    %v3244 = vld [vmem:[#allocation7 + $0xf4] sm:$0xf]
    %v3245 = vld [vmem:[#allocation7 + $0xf8] sm:$0xf]
    %v3246 = vld [vmem:[#allocation7 + $0xfc] sm:$0xf]
    %v3247 = vld [vmem:[%s4] sm:$0x1]
    %v3249 = vlaneseq
    %v3250 = vshrl.u32 %v3249, 7
    %v3251 = vsub.s32 0, %v3250
    %v3252 = vrot.slane %v3247, %v3251
    %v3318 = vunpack.c.l.b16 %v3183
    %v3319 = vunpack.c.l.b16 %v3184
    %v3320 = vunpack.c.l.b16 %v3185
    %v3321 = vunpack.c.l.b16 %v3186
    %v3322 = vunpack.c.l.b16 %v3187
    %v3323 = vunpack.c.l.b16 %v3188
    %v3324 = vunpack.c.l.b16 %v3189
    %v3325 = vunpack.c.l.b16 %v3190
    %v3326 = vunpack.c.l.b16 %v3191
    %v3327 = vunpack.c.l.b16 %v3192
    %v3328 = vunpack.c.l.b16 %v3193
    %v3329 = vunpack.c.l.b16 %v3194
    %v3330 = vunpack.c.l.b16 %v3195
    %v3331 = vunpack.c.l.b16 %v3196
    %v3332 = vunpack.c.l.b16 %v3197
    %v3333 = vunpack.c.l.b16 %v3198
    %v3334 = vunpack.c.l.b16 %v3199
    %v3335 = vunpack.c.l.b16 %v3200
    %v3336 = vunpack.c.l.b16 %v3201
    %v3337 = vunpack.c.l.b16 %v3202
    %v3338 = vunpack.c.l.b16 %v3203
    %v3339 = vunpack.c.l.b16 %v3204
    %v3340 = vunpack.c.l.b16 %v3205
    %v3341 = vunpack.c.l.b16 %v3206
    %v3342 = vunpack.c.l.b16 %v3207
    %v3343 = vunpack.c.l.b16 %v3208
    %v3344 = vunpack.c.l.b16 %v3209
    %v3345 = vunpack.c.l.b16 %v3210
    %v3346 = vunpack.c.l.b16 %v3211
    %v3347 = vunpack.c.l.b16 %v3212
    %v3348 = vunpack.c.l.b16 %v3213
    %v3349 = vunpack.c.l.b16 %v3214
    %v3350 = vunpack.c.l.b16 %v3215
    %v3351 = vunpack.c.l.b16 %v3216
    %v3352 = vunpack.c.l.b16 %v3217
    %v3353 = vunpack.c.l.b16 %v3218
    %v3354 = vunpack.c.l.b16 %v3219
    %v3355 = vunpack.c.l.b16 %v3220
    %v3356 = vunpack.c.l.b16 %v3221
    %v3357 = vunpack.c.l.b16 %v3222
    %v3358 = vunpack.c.l.b16 %v3223
    %v3359 = vunpack.c.l.b16 %v3224
    %v3360 = vunpack.c.l.b16 %v3225
    %v3361 = vunpack.c.l.b16 %v3226
    %v3362 = vunpack.c.l.b16 %v3227
    %v3363 = vunpack.c.l.b16 %v3228
    %v3364 = vunpack.c.l.b16 %v3229
    %v3365 = vunpack.c.l.b16 %v3230
    %v3366 = vunpack.c.l.b16 %v3231
    %v3367 = vunpack.c.l.b16 %v3232
    %v3368 = vunpack.c.l.b16 %v3233
    %v3369 = vunpack.c.l.b16 %v3234
    %v3370 = vunpack.c.l.b16 %v3235
    %v3371 = vunpack.c.l.b16 %v3236
    %v3372 = vunpack.c.l.b16 %v3237
    %v3373 = vunpack.c.l.b16 %v3238
    %v3374 = vunpack.c.l.b16 %v3239
    %v3375 = vunpack.c.l.b16 %v3240
    %v3376 = vunpack.c.l.b16 %v3241
    %v3377 = vunpack.c.l.b16 %v3242
    %v3378 = vunpack.c.l.b16 %v3243
    %v3379 = vunpack.c.l.b16 %v3244
    %v3380 = vunpack.c.l.b16 %v3245
    %v3381 = vunpack.c.l.b16 %v3246
    %v3382 = vpack.c.b16 %v3319, %v3318
    %v3383 = vpack.c.b16 %v3321, %v3320
    %v3384 = vpack.c.b16 %v3323, %v3322
    %v3385 = vpack.c.b16 %v3325, %v3324
    %v3386 = vpack.c.b16 %v3327, %v3326
    %v3387 = vpack.c.b16 %v3329, %v3328
    %v3388 = vpack.c.b16 %v3331, %v3330
    %v3389 = vpack.c.b16 %v3333, %v3332
    %v3390 = vpack.c.b16 %v3335, %v3334
    %v3391 = vpack.c.b16 %v3337, %v3336
    %v3392 = vpack.c.b16 %v3339, %v3338
    %v3393 = vpack.c.b16 %v3341, %v3340
    %v3394 = vpack.c.b16 %v3343, %v3342
    %v3395 = vpack.c.b16 %v3345, %v3344
    %v3396 = vpack.c.b16 %v3347, %v3346
    %v3397 = vpack.c.b16 %v3349, %v3348
    %v3398 = vpack.c.b16 %v3351, %v3350
    %v3399 = vpack.c.b16 %v3353, %v3352
    %v3400 = vpack.c.b16 %v3355, %v3354
    %v3401 = vpack.c.b16 %v3357, %v3356
    %v3402 = vpack.c.b16 %v3359, %v3358
    %v3403 = vpack.c.b16 %v3361, %v3360
    %v3404 = vpack.c.b16 %v3363, %v3362
    %v3405 = vpack.c.b16 %v3365, %v3364
    %v3406 = vpack.c.b16 %v3367, %v3366
    %v3407 = vpack.c.b16 %v3369, %v3368
    %v3408 = vpack.c.b16 %v3371, %v3370
    %v3409 = vpack.c.b16 %v3373, %v3372
    %v3410 = vpack.c.b16 %v3375, %v3374
    %v3411 = vpack.c.b16 %v3377, %v3376
    %v3412 = vpack.c.b16 %v3379, %v3378
    %v3413 = vpack.c.b16 %v3381, %v3380
    %3446 = vmatprep.subr.bf16.mxu0 0
    %3447 = vmatpush1.bf16.msra.mxu0 %v3382
    %3448 = vmatprep.subr.bf16.mxu0 0
    %3449 = vmatpush1.bf16.msra.mxu0 %v3383
    %3450 = vmatprep.subr.bf16.mxu0 0
    %3451 = vmatpush1.bf16.msra.mxu0 %v3384
    %3452 = vmatprep.subr.bf16.mxu0 0
    %3453 = vmatpush1.bf16.msra.mxu0 %v3385
    %3454 = vmatprep.subr.bf16.mxu0 0
    %3455 = vmatpush1.bf16.msra.mxu0 %v3386
    %3456 = vmatprep.subr.bf16.mxu0 0
    %3457 = vmatpush1.bf16.msra.mxu0 %v3387
    %3458 = vmatprep.subr.bf16.mxu0 0
    %3459 = vmatpush1.bf16.msra.mxu0 %v3388
    %3460 = vmatprep.subr.bf16.mxu0 0
    %3461 = vmatpush1.bf16.msra.mxu0 %v3389
    %3462 = vmatprep.subr.bf16.mxu0 0
    %3463 = vmatpush1.bf16.msra.mxu0 %v3390
    %3464 = vmatprep.subr.bf16.mxu0 0
    %3465 = vmatpush1.bf16.msra.mxu0 %v3391
    %3466 = vmatprep.subr.bf16.mxu0 0
    %3467 = vmatpush1.bf16.msra.mxu0 %v3392
    %3468 = vmatprep.subr.bf16.mxu0 0
    %3469 = vmatpush1.bf16.msra.mxu0 %v3393
    %3470 = vmatprep.subr.bf16.mxu0 0
    %3471 = vmatpush1.bf16.msra.mxu0 %v3394
    %3472 = vmatprep.subr.bf16.mxu0 0
    %3473 = vmatpush1.bf16.msra.mxu0 %v3395
    %3474 = vmatprep.subr.bf16.mxu0 0
    %3475 = vmatpush1.bf16.msra.mxu0 %v3396
    %3476 = vmatprep.subr.bf16.mxu0 0
    %3477 = vmatpush1.bf16.msra.mxu0 %v3397
    %3478 = vmatprep.mubr.bf16.mxu0 %v3120
    %3479 = vmatmul.mubr.bf16.gmra.mrb[0].mxu0 %v3119
    %v3480 = vpop.f32.mrb[0].mxu0
    %v3481 = vadd.f32 %v3252, %v3480
    %v3482 = vpop.f32.mrb[0].mxu0
    %v3483 = vpop.f32.mrb[0].mxu0
    %v3484 = vadd.f32 %v3252, %v3483
    %v3485 = vpop.f32.mrb[0].mxu0
    %3486 = vmatprep.mubr.bf16.mxu0 %v3124
    %3487 = vmatmul.mubr.bf16.gmra.mrb[0].mxu0 %v3123
    %v3488 = vpop.f32.mrb[0].mxu0
    %v3489 = vadd.f32 %v3252, %v3488
    %v3490 = vpop.f32.mrb[0].mxu0
    %v3491 = vpop.f32.mrb[0].mxu0
    %v3492 = vadd.f32 %v3252, %v3491
    %v3493 = vpop.f32.mrb[0].mxu0
    %3494 = vmatprep.mubr.bf16.mxu0 %v3128
    %3495 = vmatmul.mubr.bf16.gmra.mrb[0].mxu0 %v3127
    %v3496 = vpop.f32.mrb[0].mxu0
    %v3497 = vadd.f32 %v3252, %v3496
    %v3498 = vpop.f32.mrb[0].mxu0
    %v3499 = vpop.f32.mrb[0].mxu0
    %v3500 = vadd.f32 %v3252, %v3499
    %v3501 = vpop.f32.mrb[0].mxu0
    %3502 = vmatprep.mubr.bf16.mxu0 %v3132
    %3503 = vmatmul.mubr.bf16.gmra.mrb[0].mxu0 %v3131
    %v3504 = vpop.f32.mrb[0].mxu0
    %v3505 = vadd.f32 %v3252, %v3504
    %v3506 = vpop.f32.mrb[0].mxu0
    %v3507 = vpop.f32.mrb[0].mxu0
    %v3508 = vadd.f32 %v3252, %v3507
    %v3509 = vpop.f32.mrb[0].mxu0
    %3510 = vmatprep.mubr.bf16.mxu0 %v3136
    %3511 = vmatmul.mubr.bf16.gmra.mrb[0].mxu0 %v3135
    %v3512 = vpop.f32.mrb[0].mxu0
    %v3513 = vadd.f32 %v3252, %v3512
    %v3514 = vpop.f32.mrb[0].mxu0
    %v3515 = vpop.f32.mrb[0].mxu0
    %v3516 = vadd.f32 %v3252, %v3515
    %v3517 = vpop.f32.mrb[0].mxu0
    %3518 = vmatprep.mubr.bf16.mxu0 %v3140
    %3519 = vmatmul.mubr.bf16.gmra.mrb[0].mxu0 %v3139
    %v3520 = vpop.f32.mrb[0].mxu0
    %v3521 = vadd.f32 %v3252, %v3520
    %v3522 = vpop.f32.mrb[0].mxu0
    %v3523 = vpop.f32.mrb[0].mxu0
    %v3524 = vadd.f32 %v3252, %v3523
    %v3525 = vpop.f32.mrb[0].mxu0
    %3526 = vmatprep.mubr.bf16.mxu0 %v3144
    %3527 = vmatmul.mubr.bf16.gmra.mrb[0].mxu0 %v3143
    %v3528 = vpop.f32.mrb[0].mxu0
    %v3529 = vadd.f32 %v3252, %v3528
    %v3530 = vpop.f32.mrb[0].mxu0
    %v3531 = vpop.f32.mrb[0].mxu0
    %v3532 = vadd.f32 %v3252, %v3531
    %v3533 = vpop.f32.mrb[0].mxu0
    %3534 = vmatprep.mubr.bf16.mxu0 %v3148
    %3535 = vmatmul.mubr.bf16.gmra.mrb[0].mxu0 %v3147
    %v3536 = vpop.f32.mrb[0].mxu0
    %v3537 = vadd.f32 %v3252, %v3536
    %v3538 = vpop.f32.mrb[0].mxu0
    %v3539 = vpop.f32.mrb[0].mxu0
    %v3540 = vadd.f32 %v3252, %v3539
    %v3541 = vpop.f32.mrb[0].mxu0
    %3542 = vmatprep.mubr.bf16.mxu0 %v3152
    %3543 = vmatmul.mubr.bf16.gmra.mrb[0].mxu0 %v3151
    %v3544 = vpop.f32.mrb[0].mxu0
    %v3545 = vadd.f32 %v3252, %v3544
    %v3546 = vpop.f32.mrb[0].mxu0
    %v3547 = vpop.f32.mrb[0].mxu0
    %v3548 = vadd.f32 %v3252, %v3547
    %v3549 = vpop.f32.mrb[0].mxu0
    %3550 = vmatprep.mubr.bf16.mxu0 %v3156
    %3551 = vmatmul.mubr.bf16.gmra.mrb[0].mxu0 %v3155
    %v3552 = vpop.f32.mrb[0].mxu0
    %v3553 = vadd.f32 %v3252, %v3552
    %v3554 = vpop.f32.mrb[0].mxu0
    %v3555 = vpop.f32.mrb[0].mxu0
    %v3556 = vadd.f32 %v3252, %v3555
    %v3557 = vpop.f32.mrb[0].mxu0
    %3558 = vmatprep.mubr.bf16.mxu0 %v3160
    %3559 = vmatmul.mubr.bf16.gmra.mrb[0].mxu0 %v3159
    %v3560 = vpop.f32.mrb[0].mxu0
    %v3561 = vadd.f32 %v3252, %v3560
    %v3562 = vpop.f32.mrb[0].mxu0
    %v3563 = vpop.f32.mrb[0].mxu0
    %v3564 = vadd.f32 %v3252, %v3563
    %v3565 = vpop.f32.mrb[0].mxu0
    %3566 = vmatprep.mubr.bf16.mxu0 %v3164
    %3567 = vmatmul.mubr.bf16.gmra.mrb[0].mxu0 %v3163
    %v3568 = vpop.f32.mrb[0].mxu0
    %v3569 = vadd.f32 %v3252, %v3568
    %v3570 = vpop.f32.mrb[0].mxu0
    %v3571 = vpop.f32.mrb[0].mxu0
    %v3572 = vadd.f32 %v3252, %v3571
    %v3573 = vpop.f32.mrb[0].mxu0
    %3574 = vmatprep.mubr.bf16.mxu0 %v3168
    %3575 = vmatmul.mubr.bf16.gmra.mrb[0].mxu0 %v3167
    %v3576 = vpop.f32.mrb[0].mxu0
    %v3577 = vadd.f32 %v3252, %v3576
    %v3578 = vpop.f32.mrb[0].mxu0
    %v3579 = vpop.f32.mrb[0].mxu0
    %v3580 = vadd.f32 %v3252, %v3579
    %v3581 = vpop.f32.mrb[0].mxu0
    %3582 = vmatprep.mubr.bf16.mxu0 %v3172
    %3583 = vmatmul.mubr.bf16.gmra.mrb[0].mxu0 %v3171
    %v3584 = vpop.f32.mrb[0].mxu0
    %v3585 = vadd.f32 %v3252, %v3584
    %v3586 = vpop.f32.mrb[0].mxu0
    %v3587 = vpop.f32.mrb[0].mxu0
    %v3588 = vadd.f32 %v3252, %v3587
    %v3589 = vpop.f32.mrb[0].mxu0
    %3590 = vmatprep.mubr.bf16.mxu0 %v3176
    %3591 = vmatmul.mubr.bf16.gmra.mrb[0].mxu0 %v3175
    %v3592 = vpop.f32.mrb[0].mxu0
    %v3593 = vadd.f32 %v3252, %v3592
    %v3594 = vpop.f32.mrb[0].mxu0
    %v3595 = vpop.f32.mrb[0].mxu0
    %v3596 = vadd.f32 %v3252, %v3595
    %v3597 = vpop.f32.mrb[0].mxu0
    %3598 = vmatprep.mubr.bf16.mxu0 %v3180
    %3599 = vmatmul.mubr.bf16.gmra.mrb[0].mxu0 %v3179
    %v3600 = vpop.f32.mrb[0].mxu0
    %v3601 = vadd.f32 %v3252, %v3600
    %v3602 = vpop.f32.mrb[0].mxu0
    %v3603 = vpop.f32.mrb[0].mxu0
    %v3604 = vadd.f32 %v3252, %v3603
    %v3605 = vpop.f32.mrb[0].mxu0
    %3606 = vdwg.mxu0
    %3607 = vmatprep.subr.bf16.mxu0 0
    %3608 = vmatpush1.bf16.msra.mxu0 %v3398
    %3609 = vmatprep.subr.bf16.mxu0 0
    %3610 = vmatpush1.bf16.msra.mxu0 %v3399
    %3611 = vmatprep.subr.bf16.mxu0 0
    %3612 = vmatpush1.bf16.msra.mxu0 %v3400
    %3613 = vmatprep.subr.bf16.mxu0 0
    %3614 = vmatpush1.bf16.msra.mxu0 %v3401
    %3615 = vmatprep.subr.bf16.mxu0 0
    %3616 = vmatpush1.bf16.msra.mxu0 %v3402
    %3617 = vmatprep.subr.bf16.mxu0 0
    %3618 = vmatpush1.bf16.msra.mxu0 %v3403
    %3619 = vmatprep.subr.bf16.mxu0 0
    %3620 = vmatpush1.bf16.msra.mxu0 %v3404
    %3621 = vmatprep.subr.bf16.mxu0 0
    %3622 = vmatpush1.bf16.msra.mxu0 %v3405
    %3623 = vmatprep.subr.bf16.mxu0 0
    %3624 = vmatpush1.bf16.msra.mxu0 %v3406
    %3625 = vmatprep.subr.bf16.mxu0 0
    %3626 = vmatpush1.bf16.msra.mxu0 %v3407
    %3627 = vmatprep.subr.bf16.mxu0 0
    %3628 = vmatpush1.bf16.msra.mxu0 %v3408
    %3629 = vmatprep.subr.bf16.mxu0 0
    %3630 = vmatpush1.bf16.msra.mxu0 %v3409
    %3631 = vmatprep.subr.bf16.mxu0 0
    %3632 = vmatpush1.bf16.msra.mxu0 %v3410
    %3633 = vmatprep.subr.bf16.mxu0 0
    %3634 = vmatpush1.bf16.msra.mxu0 %v3411
    %3635 = vmatprep.subr.bf16.mxu0 0
    %3636 = vmatpush1.bf16.msra.mxu0 %v3412
    %3637 = vmatprep.subr.bf16.mxu0 0
    %3638 = vmatpush1.bf16.msra.mxu0 %v3413
    %3639 = vmatprep.mubr.bf16.mxu0 %v3122
    %3640 = vmatmul.mubr.bf16.gmra.mrb[0].mxu0 %v3121
    %v3641 = vpop.f32.mrb[0].mxu0
    %v3642 = vadd.f32 %v3481, %v3641
    %v3643 = vpop.f32.mrb[0].mxu0
    %v3644 = vpop.f32.mrb[0].mxu0
    %v3645 = vadd.f32 %v3484, %v3644
    %v3646 = vpop.f32.mrb[0].mxu0
    %3647 = vmatprep.mubr.bf16.mxu0 %v3126
    %3648 = vmatmul.mubr.bf16.gmra.mrb[0].mxu0 %v3125
    %v3649 = vpop.f32.mrb[0].mxu0
    %v3650 = vadd.f32 %v3489, %v3649
    %v3651 = vpop.f32.mrb[0].mxu0
    %v3652 = vpop.f32.mrb[0].mxu0
    %v3653 = vadd.f32 %v3492, %v3652
    %v3654 = vpop.f32.mrb[0].mxu0
    %3655 = vmatprep.mubr.bf16.mxu0 %v3130
    %3656 = vmatmul.mubr.bf16.gmra.mrb[0].mxu0 %v3129
    %v3657 = vpop.f32.mrb[0].mxu0
    %v3658 = vadd.f32 %v3497, %v3657
    %v3659 = vpop.f32.mrb[0].mxu0
    %v3660 = vpop.f32.mrb[0].mxu0
    %v3661 = vadd.f32 %v3500, %v3660
    %v3662 = vpop.f32.mrb[0].mxu0
    %3663 = vmatprep.mubr.bf16.mxu0 %v3134
    %3664 = vmatmul.mubr.bf16.gmra.mrb[0].mxu0 %v3133
    %v3665 = vpop.f32.mrb[0].mxu0
    %v3666 = vadd.f32 %v3505, %v3665
    %v3667 = vpop.f32.mrb[0].mxu0
    %v3668 = vpop.f32.mrb[0].mxu0
    %v3669 = vadd.f32 %v3508, %v3668
    %v3670 = vpop.f32.mrb[0].mxu0
    %3671 = vmatprep.mubr.bf16.mxu0 %v3138
    %3672 = vmatmul.mubr.bf16.gmra.mrb[0].mxu0 %v3137
    %v3673 = vpop.f32.mrb[0].mxu0
    %v3674 = vadd.f32 %v3513, %v3673
    %v3675 = vpop.f32.mrb[0].mxu0
    %v3676 = vpop.f32.mrb[0].mxu0
    %v3677 = vadd.f32 %v3516, %v3676
    %v3678 = vpop.f32.mrb[0].mxu0
    %3679 = vmatprep.mubr.bf16.mxu0 %v3142
    %3680 = vmatmul.mubr.bf16.gmra.mrb[0].mxu0 %v3141
    %v3681 = vpop.f32.mrb[0].mxu0
    %v3682 = vadd.f32 %v3521, %v3681
    %v3683 = vpop.f32.mrb[0].mxu0
    %v3684 = vpop.f32.mrb[0].mxu0
    %v3685 = vadd.f32 %v3524, %v3684
    %v3686 = vpop.f32.mrb[0].mxu0
    %3687 = vmatprep.mubr.bf16.mxu0 %v3146
    %3688 = vmatmul.mubr.bf16.gmra.mrb[0].mxu0 %v3145
    %v3689 = vpop.f32.mrb[0].mxu0
    %v3690 = vadd.f32 %v3529, %v3689
    %v3691 = vpop.f32.mrb[0].mxu0
    %v3692 = vpop.f32.mrb[0].mxu0
    %v3693 = vadd.f32 %v3532, %v3692
    %v3694 = vpop.f32.mrb[0].mxu0
    %3695 = vmatprep.mubr.bf16.mxu0 %v3150
    %3696 = vmatmul.mubr.bf16.gmra.mrb[0].mxu0 %v3149
    %v3697 = vpop.f32.mrb[0].mxu0
    %v3698 = vadd.f32 %v3537, %v3697
    %v3699 = vpop.f32.mrb[0].mxu0
    %v3700 = vpop.f32.mrb[0].mxu0
    %v3701 = vadd.f32 %v3540, %v3700
    %v3702 = vpop.f32.mrb[0].mxu0
    %3703 = vmatprep.mubr.bf16.mxu0 %v3154
    %3704 = vmatmul.mubr.bf16.gmra.mrb[0].mxu0 %v3153
    %v3705 = vpop.f32.mrb[0].mxu0
    %v3706 = vadd.f32 %v3545, %v3705
    %v3707 = vpop.f32.mrb[0].mxu0
    %v3708 = vpop.f32.mrb[0].mxu0
    %v3709 = vadd.f32 %v3548, %v3708
    %v3710 = vpop.f32.mrb[0].mxu0
    %3711 = vmatprep.mubr.bf16.mxu0 %v3158
    %3712 = vmatmul.mubr.bf16.gmra.mrb[0].mxu0 %v3157
    %v3713 = vpop.f32.mrb[0].mxu0
    %v3714 = vadd.f32 %v3553, %v3713
    %v3715 = vpop.f32.mrb[0].mxu0
    %v3716 = vpop.f32.mrb[0].mxu0
    %v3717 = vadd.f32 %v3556, %v3716
    %v3718 = vpop.f32.mrb[0].mxu0
    %3719 = vmatprep.mubr.bf16.mxu0 %v3162
    %3720 = vmatmul.mubr.bf16.gmra.mrb[0].mxu0 %v3161
    %v3721 = vpop.f32.mrb[0].mxu0
    %v3722 = vadd.f32 %v3561, %v3721
    %v3723 = vpop.f32.mrb[0].mxu0
    %v3724 = vpop.f32.mrb[0].mxu0
    %v3725 = vadd.f32 %v3564, %v3724
    %v3726 = vpop.f32.mrb[0].mxu0
    %3727 = vmatprep.mubr.bf16.mxu0 %v3166
    %3728 = vmatmul.mubr.bf16.gmra.mrb[0].mxu0 %v3165
    %v3729 = vpop.f32.mrb[0].mxu0
    %v3730 = vadd.f32 %v3569, %v3729
    %v3731 = vpop.f32.mrb[0].mxu0
    %v3732 = vpop.f32.mrb[0].mxu0
    %v3733 = vadd.f32 %v3572, %v3732
    %v3734 = vpop.f32.mrb[0].mxu0
    %3735 = vmatprep.mubr.bf16.mxu0 %v3170
    %3736 = vmatmul.mubr.bf16.gmra.mrb[0].mxu0 %v3169
    %v3737 = vpop.f32.mrb[0].mxu0
    %v3738 = vadd.f32 %v3577, %v3737
    %v3739 = vpop.f32.mrb[0].mxu0
    %v3740 = vpop.f32.mrb[0].mxu0
    %v3741 = vadd.f32 %v3580, %v3740
    %v3742 = vpop.f32.mrb[0].mxu0
    %3743 = vmatprep.mubr.bf16.mxu0 %v3174
    %3744 = vmatmul.mubr.bf16.gmra.mrb[0].mxu0 %v3173
    %v3745 = vpop.f32.mrb[0].mxu0
    %v3746 = vadd.f32 %v3585, %v3745
    %v3747 = vpop.f32.mrb[0].mxu0
    %v3748 = vpop.f32.mrb[0].mxu0
    %v3749 = vadd.f32 %v3588, %v3748
    %v3750 = vpop.f32.mrb[0].mxu0
    %3751 = vmatprep.mubr.bf16.mxu0 %v3178
    %3752 = vmatmul.mubr.bf16.gmra.mrb[0].mxu0 %v3177
    %v3753 = vpop.f32.mrb[0].mxu0
    %v3754 = vadd.f32 %v3593, %v3753
    %v3755 = vpop.f32.mrb[0].mxu0
    %v3756 = vpop.f32.mrb[0].mxu0
    %v3757 = vadd.f32 %v3596, %v3756
    %v3758 = vpop.f32.mrb[0].mxu0
    %3759 = vmatprep.mubr.bf16.mxu0 %v3182
    %3760 = vmatmul.mubr.bf16.gmra.mrb[0].mxu0 %v3181
    %v3761 = vpop.f32.mrb[0].mxu0
    %v3762 = vadd.f32 %v3601, %v3761
    %v3763 = vpop.f32.mrb[0].mxu0
    %v3764 = vpop.f32.mrb[0].mxu0
    %v3765 = vadd.f32 %v3604, %v3764
    %v3766 = vpop.f32.mrb[0].mxu0
    %3767 = vdwg.mxu0
    %v3768 = vmax.f32 %v3642, 0.0
    %v3769 = vmax.f32 %v3645, 0.0
    %v3770 = vmax.f32 %v3650, 0.0
    %v3771 = vmax.f32 %v3653, 0.0
    %v3772 = vmax.f32 %v3658, 0.0
    %v3773 = vmax.f32 %v3661, 0.0
    %v3774 = vmax.f32 %v3666, 0.0
    %v3775 = vmax.f32 %v3669, 0.0
    %v3776 = vmax.f32 %v3674, 0.0
    %v3777 = vmax.f32 %v3677, 0.0
    %v3778 = vmax.f32 %v3682, 0.0
    %v3779 = vmax.f32 %v3685, 0.0
    %v3780 = vmax.f32 %v3690, 0.0
    %v3781 = vmax.f32 %v3693, 0.0
    %v3782 = vmax.f32 %v3698, 0.0
    %v3783 = vmax.f32 %v3701, 0.0
    %v3784 = vmax.f32 %v3706, 0.0
    %v3785 = vmax.f32 %v3709, 0.0
    %v3786 = vmax.f32 %v3714, 0.0
    %v3787 = vmax.f32 %v3717, 0.0
    %v3788 = vmax.f32 %v3722, 0.0
    %v3789 = vmax.f32 %v3725, 0.0
    %v3790 = vmax.f32 %v3730, 0.0
    %v3791 = vmax.f32 %v3733, 0.0
    %v3792 = vmax.f32 %v3738, 0.0
    %v3793 = vmax.f32 %v3741, 0.0
    %v3794 = vmax.f32 %v3746, 0.0
    %v3795 = vmax.f32 %v3749, 0.0
    %v3796 = vmax.f32 %v3754, 0.0
    %v3797 = vmax.f32 %v3757, 0.0
    %v3798 = vmax.f32 %v3762, 0.0
    %v3799 = vmax.f32 %v3765, 0.0
    %v3800 = vpack.c.bf16 %v3769, %v3768
    %v3801 = vpack.c.bf16 %v3771, %v3770
    %v3802 = vpack.c.bf16 %v3773, %v3772
    %v3803 = vpack.c.bf16 %v3775, %v3774
    %v3804 = vpack.c.bf16 %v3777, %v3776
    %v3805 = vpack.c.bf16 %v3779, %v3778
    %v3806 = vpack.c.bf16 %v3781, %v3780
    %v3807 = vpack.c.bf16 %v3783, %v3782
    %v3808 = vpack.c.bf16 %v3785, %v3784
    %v3809 = vpack.c.bf16 %v3787, %v3786
    %v3810 = vpack.c.bf16 %v3789, %v3788
    %v3811 = vpack.c.bf16 %v3791, %v3790
    %v3812 = vpack.c.bf16 %v3793, %v3792
    %v3813 = vpack.c.bf16 %v3795, %v3794
    %v3814 = vpack.c.bf16 %v3797, %v3796
    %v3815 = vpack.c.bf16 %v3799, %v3798
    %v3816 = vld [vmem:[#allocation8] sm:$0xf]
    %v3817 = vld [vmem:[#allocation8 + $0x4] sm:$0xf]
    %v3818 = vld [vmem:[#allocation8 + $0x8] sm:$0xf]
    %v3819 = vld [vmem:[#allocation8 + $0xc] sm:$0xf]
    %v3820 = vld [vmem:[#allocation8 + $0x10] sm:$0xf]
    %v3821 = vld [vmem:[#allocation8 + $0x14] sm:$0xf]
    %v3822 = vld [vmem:[#allocation8 + $0x18] sm:$0xf]
    %v3823 = vld [vmem:[#allocation8 + $0x1c] sm:$0xf]
    %v3824 = vld [vmem:[#allocation8 + $0x20] sm:$0xf]
    %v3825 = vld [vmem:[#allocation8 + $0x24] sm:$0xf]
    %v3826 = vld [vmem:[#allocation8 + $0x28] sm:$0xf]
    %v3827 = vld [vmem:[#allocation8 + $0x2c] sm:$0xf]
    %v3828 = vld [vmem:[#allocation8 + $0x30] sm:$0xf]
    %v3829 = vld [vmem:[#allocation8 + $0x34] sm:$0xf]
    %v3830 = vld [vmem:[#allocation8 + $0x38] sm:$0xf]
    %v3831 = vld [vmem:[#allocation8 + $0x3c] sm:$0xf]
    %v3832 = vld [vmem:[%s6] sm:$0x1]
    %v3834 = vlaneseq
    %v3835 = vshrl.u32 %v3834, 7
    %v3836 = vsub.s32 0, %v3835
    %v3837 = vrot.slane %v3832, %v3836
    %v3855 = vunpack.c.l.b16 %v3816
    %v3856 = vunpack.c.l.b16 %v3817
    %v3857 = vunpack.c.l.b16 %v3818
    %v3858 = vunpack.c.l.b16 %v3819
    %v3859 = vunpack.c.l.b16 %v3820
    %v3860 = vunpack.c.l.b16 %v3821
    %v3861 = vunpack.c.l.b16 %v3822
    %v3862 = vunpack.c.l.b16 %v3823
    %v3863 = vunpack.c.l.b16 %v3824
    %v3864 = vunpack.c.l.b16 %v3825
    %v3865 = vunpack.c.l.b16 %v3826
    %v3866 = vunpack.c.l.b16 %v3827
    %v3867 = vunpack.c.l.b16 %v3828
    %v3868 = vunpack.c.l.b16 %v3829
    %v3869 = vunpack.c.l.b16 %v3830
    %v3870 = vunpack.c.l.b16 %v3831
    %v3871 = vpack.c.b16 %v3856, %v3855
    %v3872 = vpack.c.b16 %v3858, %v3857
    %v3873 = vpack.c.b16 %v3860, %v3859
    %v3874 = vpack.c.b16 %v3862, %v3861
    %v3875 = vpack.c.b16 %v3864, %v3863
    %v3876 = vpack.c.b16 %v3866, %v3865
    %v3877 = vpack.c.b16 %v3868, %v3867
    %v3878 = vpack.c.b16 %v3870, %v3869
    %3887 = vmatprep.subr.bf16.mxu0 0
    %3888 = vmatpush1.bf16.msra.mxu0 %v3871
    %3889 = vmatprep.subr.bf16.mxu0 0
    %3890 = vmatpush1.bf16.msra.mxu0 %v3872
    %3891 = vmatprep.subr.bf16.mxu0 0
    %3892 = vmatpush1.bf16.msra.mxu0 %v3873
    %3893 = vmatprep.subr.bf16.mxu0 0
    %3894 = vmatpush1.bf16.msra.mxu0 %v3874
    %3895 = vmatprep.subr.bf16.mxu0 0
    %3896 = vmatpush1.bf16.msra.mxu0 %v3875
    %3897 = vmatprep.subr.bf16.mxu0 0
    %3898 = vmatpush1.bf16.msra.mxu0 %v3876
    %3899 = vmatprep.subr.bf16.mxu0 0
    %3900 = vmatpush1.bf16.msra.mxu0 %v3877
    %3901 = vmatprep.subr.bf16.mxu0 0
    %3902 = vmatpush1.bf16.msra.mxu0 %v3878
    %3903 = vmatprep.subr.bf16.mxu0 0
    %3904 = vmatpush1.bf16.msra.mxu0 0
    %3905 = vmatprep.subr.bf16.mxu0 0
    %3906 = vmatpush1.bf16.msra.mxu0 0
    %3907 = vmatprep.subr.bf16.mxu0 0
    %3908 = vmatpush1.bf16.msra.mxu0 0
    %3909 = vmatprep.subr.bf16.mxu0 0
    %3910 = vmatpush1.bf16.msra.mxu0 0
    %3911 = vmatprep.subr.bf16.mxu0 0
    %3912 = vmatpush1.bf16.msra.mxu0 0
    %3913 = vmatprep.subr.bf16.mxu0 0
    %3914 = vmatpush1.bf16.msra.mxu0 0
    %3915 = vmatprep.subr.bf16.mxu0 0
    %3916 = vmatpush1.bf16.msra.mxu0 0
    %3917 = vmatprep.subr.bf16.mxu0 0
    %3918 = vmatpush1.bf16.msra.mxu0 0
    %3919 = vmatprep.mubr.bf16.mxu0 0
    %3920 = vmatmul.mubr.bf16.gmra.mrb[0].mxu0 %v3800
    %v3921 = vpop.f32.mrb[0].mxu0
    %v3922 = vadd.f32 %v3837, %v3921
    %v3923 = vpop.f32.mrb[0].mxu0
    %v3924 = vpop.f32.mrb[0].mxu0
    %v3925 = vadd.f32 %v3837, %v3924
    %v3926 = vpop.f32.mrb[0].mxu0
    %3927 = vmatprep.mubr.bf16.mxu0 0
    %3928 = vmatmul.mubr.bf16.gmra.mrb[0].mxu0 %v3801
    %v3929 = vpop.f32.mrb[0].mxu0
    %v3930 = vadd.f32 %v3837, %v3929
    %v3931 = vpop.f32.mrb[0].mxu0
    %v3932 = vpop.f32.mrb[0].mxu0
    %v3933 = vadd.f32 %v3837, %v3932
    %v3934 = vpop.f32.mrb[0].mxu0
    %3935 = vmatprep.mubr.bf16.mxu0 0
    %3936 = vmatmul.mubr.bf16.gmra.mrb[0].mxu0 %v3802
    %v3937 = vpop.f32.mrb[0].mxu0
    %v3938 = vadd.f32 %v3837, %v3937
    %v3939 = vpop.f32.mrb[0].mxu0
    %v3940 = vpop.f32.mrb[0].mxu0
    %v3941 = vadd.f32 %v3837, %v3940
    %v3942 = vpop.f32.mrb[0].mxu0
    %3943 = vmatprep.mubr.bf16.mxu0 0
    %3944 = vmatmul.mubr.bf16.gmra.mrb[0].mxu0 %v3803
    %v3945 = vpop.f32.mrb[0].mxu0
    %v3946 = vadd.f32 %v3837, %v3945
    %v3947 = vpop.f32.mrb[0].mxu0
    %v3948 = vpop.f32.mrb[0].mxu0
    %v3949 = vadd.f32 %v3837, %v3948
    %v3950 = vpop.f32.mrb[0].mxu0
    %3951 = vmatprep.mubr.bf16.mxu0 0
    %3952 = vmatmul.mubr.bf16.gmra.mrb[0].mxu0 %v3804
    %v3953 = vpop.f32.mrb[0].mxu0
    %v3954 = vadd.f32 %v3837, %v3953
    %v3955 = vpop.f32.mrb[0].mxu0
    %v3956 = vpop.f32.mrb[0].mxu0
    %v3957 = vadd.f32 %v3837, %v3956
    %v3958 = vpop.f32.mrb[0].mxu0
    %3959 = vmatprep.mubr.bf16.mxu0 0
    %3960 = vmatmul.mubr.bf16.gmra.mrb[0].mxu0 %v3805
    %v3961 = vpop.f32.mrb[0].mxu0
    %v3962 = vadd.f32 %v3837, %v3961
    %v3963 = vpop.f32.mrb[0].mxu0
    %v3964 = vpop.f32.mrb[0].mxu0
    %v3965 = vadd.f32 %v3837, %v3964
    %v3966 = vpop.f32.mrb[0].mxu0
    %3967 = vmatprep.mubr.bf16.mxu0 0
    %3968 = vmatmul.mubr.bf16.gmra.mrb[0].mxu0 %v3806
    %v3969 = vpop.f32.mrb[0].mxu0
    %v3970 = vadd.f32 %v3837, %v3969
    %v3971 = vpop.f32.mrb[0].mxu0
    %v3972 = vpop.f32.mrb[0].mxu0
    %v3973 = vadd.f32 %v3837, %v3972
    %v3974 = vpop.f32.mrb[0].mxu0
    %3975 = vmatprep.mubr.bf16.mxu0 0
    %3976 = vmatmul.mubr.bf16.gmra.mrb[0].mxu0 %v3807
    %v3977 = vpop.f32.mrb[0].mxu0
    %v3978 = vadd.f32 %v3837, %v3977
    %v3979 = vpop.f32.mrb[0].mxu0
    %v3980 = vpop.f32.mrb[0].mxu0
    %v3981 = vadd.f32 %v3837, %v3980
    %v3982 = vpop.f32.mrb[0].mxu0
    %3983 = vmatprep.mubr.bf16.mxu0 0
    %3984 = vmatmul.mubr.bf16.gmra.mrb[0].mxu0 %v3808
    %v3985 = vpop.f32.mrb[0].mxu0
    %v3986 = vadd.f32 %v3837, %v3985
    %v3987 = vpop.f32.mrb[0].mxu0
    %v3988 = vpop.f32.mrb[0].mxu0
    %v3989 = vadd.f32 %v3837, %v3988
    %v3990 = vpop.f32.mrb[0].mxu0
    %3991 = vmatprep.mubr.bf16.mxu0 0
    %3992 = vmatmul.mubr.bf16.gmra.mrb[0].mxu0 %v3809
    %v3993 = vpop.f32.mrb[0].mxu0
    %v3994 = vadd.f32 %v3837, %v3993
    %v3995 = vpop.f32.mrb[0].mxu0
    %v3996 = vpop.f32.mrb[0].mxu0
    %v3997 = vadd.f32 %v3837, %v3996
    %v3998 = vpop.f32.mrb[0].mxu0
    %3999 = vmatprep.mubr.bf16.mxu0 0
    %4000 = vmatmul.mubr.bf16.gmra.mrb[0].mxu0 %v3810
    %v4001 = vpop.f32.mrb[0].mxu0
    %v4002 = vadd.f32 %v3837, %v4001
    %v4003 = vpop.f32.mrb[0].mxu0
    %v4004 = vpop.f32.mrb[0].mxu0
    %v4005 = vadd.f32 %v3837, %v4004
    %v4006 = vpop.f32.mrb[0].mxu0
    %4007 = vmatprep.mubr.bf16.mxu0 0
    %4008 = vmatmul.mubr.bf16.gmra.mrb[0].mxu0 %v3811
    %v4009 = vpop.f32.mrb[0].mxu0
    %v4010 = vadd.f32 %v3837, %v4009
    %v4011 = vpop.f32.mrb[0].mxu0
    %v4012 = vpop.f32.mrb[0].mxu0
    %v4013 = vadd.f32 %v3837, %v4012
    %v4014 = vpop.f32.mrb[0].mxu0
    %4015 = vmatprep.mubr.bf16.mxu0 0
    %4016 = vmatmul.mubr.bf16.gmra.mrb[0].mxu0 %v3812
    %v4017 = vpop.f32.mrb[0].mxu0
    %v4018 = vadd.f32 %v3837, %v4017
    %v4019 = vpop.f32.mrb[0].mxu0
    %v4020 = vpop.f32.mrb[0].mxu0
    %v4021 = vadd.f32 %v3837, %v4020
    %v4022 = vpop.f32.mrb[0].mxu0
    %4023 = vmatprep.mubr.bf16.mxu0 0
    %4024 = vmatmul.mubr.bf16.gmra.mrb[0].mxu0 %v3813
    %v4025 = vpop.f32.mrb[0].mxu0
    %v4026 = vadd.f32 %v3837, %v4025
    %v4027 = vpop.f32.mrb[0].mxu0
    %v4028 = vpop.f32.mrb[0].mxu0
    %v4029 = vadd.f32 %v3837, %v4028
    %v4030 = vpop.f32.mrb[0].mxu0
    %4031 = vmatprep.mubr.bf16.mxu0 0
    %4032 = vmatmul.mubr.bf16.gmra.mrb[0].mxu0 %v3814
    %v4033 = vpop.f32.mrb[0].mxu0
    %v4034 = vadd.f32 %v3837, %v4033
    %v4035 = vpop.f32.mrb[0].mxu0
    %v4036 = vpop.f32.mrb[0].mxu0
    %v4037 = vadd.f32 %v3837, %v4036
    %v4038 = vpop.f32.mrb[0].mxu0
    %4039 = vmatprep.mubr.bf16.mxu0 0
    %4040 = vmatmul.mubr.bf16.gmra.mrb[0].mxu0 %v3815
    %v4041 = vpop.f32.mrb[0].mxu0
    %v4042 = vadd.f32 %v3837, %v4041
    %v4043 = vpop.f32.mrb[0].mxu0
    %v4044 = vpop.f32.mrb[0].mxu0
    %v4045 = vadd.f32 %v3837, %v4044
    %v4046 = vpop.f32.mrb[0].mxu0
    %4047 = vdwg.mxu0
    %4048 = vst [vmem:[#allocation10] sm:$0xff] %v3922
    %4049 = vst [vmem:[#allocation10 + $0x8] sm:$0xff] %v3925
    %4050 = vst [vmem:[#allocation10 + $0x10] sm:$0xff] %v3930
    %4051 = vst [vmem:[#allocation10 + $0x18] sm:$0xff] %v3933
    %4052 = vst [vmem:[#allocation10 + $0x20] sm:$0xff] %v3938
    %4053 = vst [vmem:[#allocation10 + $0x28] sm:$0xff] %v3941
    %4054 = vst [vmem:[#allocation10 + $0x30] sm:$0xff] %v3946
    %4055 = vst [vmem:[#allocation10 + $0x38] sm:$0xff] %v3949
    %4056 = vst [vmem:[#allocation10 + $0x40] sm:$0xff] %v3954
    %4057 = vst [vmem:[#allocation10 + $0x48] sm:$0xff] %v3957
    %4058 = vst [vmem:[#allocation10 + $0x50] sm:$0xff] %v3962
    %4059 = vst [vmem:[#allocation10 + $0x58] sm:$0xff] %v3965
    %4060 = vst [vmem:[#allocation10 + $0x60] sm:$0xff] %v3970
    %4061 = vst [vmem:[#allocation10 + $0x68] sm:$0xff] %v3973
    %4062 = vst [vmem:[#allocation10 + $0x70] sm:$0xff] %v3978
    %4063 = vst [vmem:[#allocation10 + $0x78] sm:$0xff] %v3981
    %4064 = vst [vmem:[#allocation10 + $0x80] sm:$0xff] %v3986
    %4065 = vst [vmem:[#allocation10 + $0x88] sm:$0xff] %v3989
    %4066 = vst [vmem:[#allocation10 + $0x90] sm:$0xff] %v3994
    %4067 = vst [vmem:[#allocation10 + $0x98] sm:$0xff] %v3997
    %4068 = vst [vmem:[#allocation10 + $0xa0] sm:$0xff] %v4002
    %4069 = vst [vmem:[#allocation10 + $0xa8] sm:$0xff] %v4005
    %4070 = vst [vmem:[#allocation10 + $0xb0] sm:$0xff] %v4010
    %4071 = vst [vmem:[#allocation10 + $0xb8] sm:$0xff] %v4013
    %4072 = vst [vmem:[#allocation10 + $0xc0] sm:$0xff] %v4018
    %4073 = vst [vmem:[#allocation10 + $0xc8] sm:$0xff] %v4021
    %4074 = vst [vmem:[#allocation10 + $0xd0] sm:$0xff] %v4026
    %4075 = vst [vmem:[#allocation10 + $0xd8] sm:$0xff] %v4029
    %4076 = vst [vmem:[#allocation10 + $0xe0] sm:$0xff] %v4034
    %4077 = vst [vmem:[#allocation10 + $0xe8] sm:$0xff] %v4037
    %4078 = vst [vmem:[#allocation10 + $0xf0] sm:$0xff] %v4042
    %4079 = vst [vmem:[#allocation10 + $0xf8] sm:$0xff] %v4045
    // Predicated region
    $region46: #{tpu_custom_call.1} parent=1 // pred_check
      _
    $region47: #{tpu_custom_call.1} parent=1 // pred_check_branch
      %4081 = sbr.rel (0) target = $region49
    $region48: #{tpu_custom_call.1} parent=1 // pred_region
      %s4083 = ssub.s32 4096, 4096
      %4084 = vsyncadd [#allocation4], %s4083
      %s4085 = sshll.u32 [#allocation10], 4
      %s4086 = int_to_ptr.vmem [resolvable:$true] %s4085
      %4091 = dma.vmem_to_hbm [thread:$0]  %s4086, 4096, %s7, [#allocation4], 128, 128, 8
    $region49: #{tpu_custom_call.1} parent=1 // pred_fallthru
      _
    // Predicated region
    $region50: #{tpu_custom_call.1} parent=1 // pred_check
      _
    $region51: #{tpu_custom_call.1} parent=1 // pred_check_branch
      %4093 = sbr.rel (0) target = $region53
    $region52: #{tpu_custom_call.1} parent=1 // pred_region
      %4094 = dma.done [#allocation4], 4096
    $region53: #{tpu_custom_call.1} parent=1 // pred_fallthru
      _
    %4095 = vsyncpa [#allocation3], 1
    %4096 = vsyncpa [#allocation6], 1
    %4097 = vsyncpa [#allocation9], 1
    %4098 = vsyncpa [#allocation4], 1

</llo_original>
